<compile_context>
chip_gen: v6e
topology: v6e:2x2x1
jax: 0.10.0
libtpu: 0.0.40
codegen_flags: <defaults>
</compile_context>

<pallas_src>
import jax
import jax.numpy as jnp
from jax import lax
from jax.experimental import pallas as pl
from jax.experimental.pallas import tpu as pltpu

# ---------------- config (small synthetic sizes) ----------------
VOCAB = 32
PAD_IDX = 0
EMBED = 32
HIDDEN = 32          # LSTM hidden H; BiLSTM output width = 2H = 64
LATENT = 16
LSTM_LAYERS = 2
MLP_HIDDEN = 256     # hard-coded 256 in the PyTorch module
B = 2
S = 8
EPS_LN = 1e-5
EPS_POW = 1e-8


def _full_spec(shape):
    """Whole-array block; index_map accepts any (grid idx, *prefetch refs) args."""
    nd = len(shape)
    return pl.BlockSpec(shape, lambda *args, _nd=nd: (0,) * _nd)


# ================= in-kernel helpers (operate on jnp values) =================

def _lstm_cell(gates, c_prev, H):
    """PyTorch gate order i, f, g, o. gates: [B, 4H]."""
    i_g = jax.nn.sigmoid(gates[:, 0:H])
    f_g = jax.nn.sigmoid(gates[:, H:2 * H])
    g_g = jnp.tanh(gates[:, 2 * H:3 * H])
    o_g = jax.nn.sigmoid(gates[:, 3 * H:4 * H])
    c_new = f_g * c_prev + i_g * g_g
    h_new = o_g * jnp.tanh(c_new)
    return h_new, c_new


def _bilstm_layer(x_flat, wih_fb, whh_f, whh_b, b_fb, seq_len, batch, H):
    """Fused bidirectional LSTM layer on time-major flattened input.

    x_flat : [S*B, Din]  rows ordered (t, b)
    wih_fb : [Din, 8H]   forward gates in cols [:4H], backward in [4H:]
    whh_f, whh_b : [H, 4H]
    b_fb   : [1, 8H]     (b_ih + b_hh) per direction, fwd | bwd
    returns  [S*B, 2H]   rows ordered (t, b), last dim = [h_fwd | h_bwd]
    """
    # Hoisted input projection (+ bias) for BOTH directions: one MXU push.
    xg = jnp.dot(x_flat, wih_fb, preferred_element_type=jnp.float32) + b_fb

    h_f = jnp.zeros((batch, H), jnp.float32)
    c_f = jnp.zeros((batch, H), jnp.float32)
    h_b = jnp.zeros((batch, H), jnp.float32)
    c_b = jnp.zeros((batch, H), jnp.float32)
    outs_f = [None] * seq_len
    outs_b = [None] * seq_len

    # Fully unrolled recurrence (seq_len is static & small).  Forward step t=k
    # and backward step t=S-1-k are independent, so their recurrent matmul /
    # EUP activation work can overlap.
    for k in range(seq_len):
        t_f = k
        t_b = seq_len - 1 - k
        g_f = xg[t_f * batch:(t_f + 1) * batch, 0:4 * H] + jnp.dot(
            h_f, whh_f, preferred_element_type=jnp.float32)
        g_b = xg[t_b * batch:(t_b + 1) * batch, 4 * H:8 * H] + jnp.dot(
            h_b, whh_b, preferred_element_type=jnp.float32)
        h_f, c_f = _lstm_cell(g_f, c_f, H)
        h_b, c_b = _lstm_cell(g_b, c_b, H)
        outs_f[t_f] = h_f
        outs_b[t_b] = h_b

    rows = [jnp.concatenate([outs_f[t], outs_b[t]], axis=-1) for t in range(seq_len)]
    return jnp.concatenate(rows, axis=0)           # [S*B, 2H]


def _rows_for_batch(flat, b, seq_len, batch):
    """Gather rows (t, b) for fixed b from a time-major flat [S*B, F] array -> [S, F]."""
    return jnp.concatenate(
        [flat[t * batch + b:t * batch + b + 1, :] for t in range(seq_len)], axis=0)


# ================= Pallas kernels =================

def _encoder_kernel(src_ref,                                  # SMEM scalar-prefetch [B, S] int32
                    emb_ref,                                  # [VOCAB, 1, EMBED]
                    l0_wih, l0_whh_f, l0_whh_b, l0_b,
                    l1_wih, l1_whh_f, l1_whh_b, l1_b,
                    ce_w1, ce_b1, ce_w2, ce_b2,
                    tx_ref):                                  # out [B, S, LATENT]
    H = HIDDEN

    # ---- embedding gather + sqrt(E) scale (time-major flat) ----
    rows = []
    for t in range(S):
        for b in range(B):
            tok = src_ref[b, t]
            rows.append(emb_ref[tok])                         # [1, EMBED]
    x = jnp.concatenate(rows, axis=0) * (EMBED ** 0.5)        # [S*B, E]

    # ---- encoder BiLSTM (2 layers, fwd+bwd fused) ----
    h0 = _bilstm_layer(x, l0_wih[...], l0_whh_f[...], l0_whh_b[...], l0_b[...], S, B, H)
    h1 = _bilstm_layer(h0, l1_wih[...], l1_whh_f[...], l1_whh_b[...], l1_b[...], S, B, H)

    # ---- channel encoder: Linear -> ReLU -> Linear ----
    hid = jnp.dot(h1, ce_w1[...], preferred_element_type=jnp.float32) + ce_b1[...]
    hid = jnp.maximum(hid, 0.0)
    z = jnp.dot(hid, ce_w2[...], preferred_element_type=jnp.float32) + ce_b2[...]   # [S*B, L]

    # ---- power normalization (per sample over seq & latent) + batch-first store ----
    for b in range(B):
        zb = _rows_for_batch(z, b, S, B)                      # [S, L]
        power = jnp.mean(zb * zb, keepdims=True)              # [1, 1]
        tx_ref[b] = zb * lax.rsqrt(power + EPS_POW)


def _decoder_kernel(rx_ref,                                   # [B, S, LATENT]
                    cd_w1, cd_b1, cd_w2, cd_b2, ln_g, ln_b,
                    l0_wih, l0_whh_f, l0_whh_b, l0_b,
                    l1_wih, l1_whh_f, l1_whh_b, l1_b,
                    proj_w, proj_b,
                    logits_ref):                              # out [B, S, VOCAB]
    H = HIDDEN

    # time-major flatten: rows ordered (t, b)
    r = rx_ref[...]                                           # [B, S, L]
    x = jnp.concatenate([r[:, t, :] for t in range(S)], axis=0)   # [S*B, L]

    # ---- channel decoder: Linear -> ReLU -> Linear -> LayerNorm ----
    hid = jnp.dot(x, cd_w1[...], preferred_element_type=jnp.float32) + cd_b1[...]
    hid = jnp.maximum(hid, 0.0)
    y = jnp.dot(hid, cd_w2[...], preferred_element_type=jnp.float32) + cd_b2[...]   # [S*B, 2H]
    mu = jnp.mean(y, axis=-1, keepdims=True)
    var = jnp.mean((y - mu) ** 2, axis=-1, keepdims=True)
    y = (y - mu) * lax.rsqrt(var + EPS_LN) * ln_g[...] + ln_b[...]

    # ---- decoder BiLSTM (2 layers, fwd+bwd fused) ----
    h0 = _bilstm_layer(y, l0_wih[...], l0_whh_f[...], l0_whh_b[...], l0_b[...], S, B, H)
    h1 = _bilstm_layer(h0, l1_wih[...], l1_whh_f[...], l1_whh_b[...], l1_b[...], S, B, H)

    # ---- vocab projection ----
    logits = jnp.dot(h1, proj_w[...], preferred_element_type=jnp.float32) + proj_b[...]  # [S*B, V]

    # batch-first store
    for b in range(B):
        logits_ref[b] = _rows_for_batch(logits, b, S, B)      # [S, V]


# ================= pallas_call wrappers =================

def encode_to_tx(params, src):
    """src [B, S] int32 -> tx [B, S, LATENT] (power-normalized channel symbols)."""
    ins = [params['embedding3']]
    for layer in params['enc_lstm']:
        ins += [layer['wih'], layer['whh_f'], layer['whh_b'], layer['b']]
    ins += [params['ce_w1'], params['ce_b1'], params['ce_w2'], params['ce_b2']]
    return pl.pallas_call(
        _encoder_kernel,
        out_shape=jax.ShapeDtypeStruct((B, S, LATENT), jnp.float32),
        grid_spec=pltpu.PrefetchScalarGridSpec(
            num_scalar_prefetch=1,                 # token ids -> SMEM
            grid=(1,),
            in_specs=[_full_spec(a.shape) for a in ins],
            out_specs=_full_spec((B, S, LATENT)),
        ),
        compiler_params=pltpu.CompilerParams(dimension_semantics=("arbitrary",)),
    )(src, *ins)


def decode_to_logits(params, rx):
    """rx [B, S, LATENT] -> logits [B, S, VOCAB]."""
    ins = [rx,
           params['cd_w1'], params['cd_b1'], params['cd_w2'], params['cd_b2'],
           params['ln_g'], params['ln_b']]
    for layer in params['dec_lstm']:
        ins += [layer['wih'], layer['whh_f'], layer['whh_b'], layer['b']]
    ins += [params['proj_w'], params['proj_b']]
    return pl.pallas_call(
        _decoder_kernel,
        out_shape=jax.ShapeDtypeStruct((B, S, VOCAB), jnp.float32),
        grid_spec=pltpu.PrefetchScalarGridSpec(
            num_scalar_prefetch=0,
            grid=(1,),
            in_specs=[_full_spec(a.shape) for a in ins],
            out_specs=_full_spec((B, S, VOCAB)),
        ),
        compiler_params=pltpu.CompilerParams(dimension_semantics=("arbitrary",)),
    )(*ins)


# ================= parameter init (deterministic, synthetic) =================

def init_params(key):
    keys = iter(jax.random.split(key, 128))

    def nrm(shape, scale=0.1):
        return (scale * jax.random.normal(next(keys), shape)).astype(jnp.float32)

    p = {}
    emb = nrm((VOCAB, EMBED))
    emb = emb.at[PAD_IDX].set(0.0)                  # padding_idx row = 0
    p['embedding3'] = emb.reshape(VOCAB, 1, EMBED)  # leading-dim gather layout

    def lstm_layer(din):
        wih_f = nrm((din, 4 * HIDDEN))              # = W_ih_fwd.T
        wih_b = nrm((din, 4 * HIDDEN))              # = W_ih_bwd.T
        b_f = nrm((1, 4 * HIDDEN), 0.01)            # = b_ih_fwd + b_hh_fwd
        b_b = nrm((1, 4 * HIDDEN), 0.01)            # = b_ih_bwd + b_hh_bwd
        return {
            'wih': jnp.concatenate([wih_f, wih_b], axis=1),   # [din, 8H]
            'whh_f': nrm((HIDDEN, 4 * HIDDEN)),               # = W_hh_fwd.T
            'whh_b': nrm((HIDDEN, 4 * HIDDEN)),               # = W_hh_bwd.T
            'b': jnp.concatenate([b_f, b_b], axis=1),         # [1, 8H]
        }

    # encoder BiLSTM: layer0 in=EMBED, layer1 in=2H ; decoder: both in=2H
    p['enc_lstm'] = [lstm_layer(EMBED), lstm_layer(2 * HIDDEN)]
    p['dec_lstm'] = [lstm_layer(2 * HIDDEN), lstm_layer(2 * HIDDEN)]

    # channel encoder: Linear(2H, 256) -> ReLU -> Linear(256, latent)
    p['ce_w1'] = nrm((2 * HIDDEN, MLP_HIDDEN)); p['ce_b1'] = jnp.zeros((1, MLP_HIDDEN), jnp.float32)
    p['ce_w2'] = nrm((MLP_HIDDEN, LATENT));     p['ce_b2'] = jnp.zeros((1, LATENT), jnp.float32)

    # channel decoder: Linear(latent, 256) -> ReLU -> Linear(256, 2H) -> LayerNorm(2H)
    p['cd_w1'] = nrm((LATENT, MLP_HIDDEN));     p['cd_b1'] = jnp.zeros((1, MLP_HIDDEN), jnp.float32)
    p['cd_w2'] = nrm((MLP_HIDDEN, 2 * HIDDEN)); p['cd_b2'] = jnp.zeros((1, 2 * HIDDEN), jnp.float32)
    p['ln_g'] = jnp.ones((1, 2 * HIDDEN), jnp.float32)
    p['ln_b'] = jnp.zeros((1, 2 * HIDDEN), jnp.float32)

    # output projection: Linear(2H, vocab)
    p['proj_w'] = nrm((2 * HIDDEN, VOCAB)); p['proj_b'] = jnp.zeros((1, VOCAB), jnp.float32)
    return p


# ================= forward pass glue =================

def jscc_forward(params, src, n_var, channel_fn):
    """src: [B, S] int32 token ids -> logits [B, S-1, V] (plus tx, rx)."""
    # lengths / mask (all-full here; packing is a no-op)
    mask = src != PAD_IDX
    _lengths = mask.sum(axis=1)
    # TODO(synk): variable-length packing (lengths < S) is not replicated.

    tx = encode_to_tx(params, src)            # [B, S, LATENT], power-normalized
    rx = channel_fn(tx, n_var)                # channel stays in plain JAX
    logits = decode_to_logits(params, rx)     # [B, S, VOCAB]
    return logits[:, :-1, :], tx, rx


# ================= main =================

if __name__ == "__main__":
    key = jax.random.PRNGKey(0)
    k_src, k_noise = jax.random.split(key, 2)

    # tokens in [1, VOCAB) so no PAD tokens (lengths == S)
    src = jax.random.randint(k_src, (B, S), 1, VOCAB, dtype=jnp.int32)

    params = init_params(jax.random.PRNGKey(42))

    n_var = jnp.float32(0.1)

    def awgn_channel(tx, nv):
        noise = jax.random.normal(k_noise, tx.shape, dtype=jnp.float32)
        return tx + jnp.sqrt(nv) * noise

    logits, tx, rx = jscc_forward(params, src, n_var, awgn_channel)
    logits = jax.block_until_ready(logits)

    assert logits.shape == (B, S - 1, VOCAB), logits.shape
    assert tx.shape == (B, S, LATENT)
    assert bool(jnp.all(jnp.isfinite(logits)))
    print("KERNEL_OK")
</pallas_src>

<mosaic_0001>
module attributes {stable_mosaic.version = 11 : i64} {
  func.func @_encoder_kernel(%arg0: i32, %arg1: memref<2x8xi32, #tpu.memory_space<smem>>, %arg2: memref<32x1x32xf32, #tpu.memory_space<vmem>>, %arg3: memref<32x256xf32, #tpu.memory_space<vmem>>, %arg4: memref<32x128xf32, #tpu.memory_space<vmem>>, %arg5: memref<32x128xf32, #tpu.memory_space<vmem>>, %arg6: memref<1x256xf32, #tpu.memory_space<vmem>>, %arg7: memref<64x256xf32, #tpu.memory_space<vmem>>, %arg8: memref<32x128xf32, #tpu.memory_space<vmem>>, %arg9: memref<32x128xf32, #tpu.memory_space<vmem>>, %arg10: memref<1x256xf32, #tpu.memory_space<vmem>>, %arg11: memref<64x256xf32, #tpu.memory_space<vmem>>, %arg12: memref<1x256xf32, #tpu.memory_space<vmem>>, %arg13: memref<256x16xf32, #tpu.memory_space<vmem>>, %arg14: memref<1x16xf32, #tpu.memory_space<vmem>>, %arg15: memref<2x8x16xf32, #tpu.memory_space<vmem>>) attributes {dimension_semantics = [#tpu.dimension_semantics<arbitrary>], iteration_bounds = array<i64: 1>, scalar_prefetch = 1 : i64, scratch_operands = 0 : i64, tpu.core_type = #tpu.core_type<tc>, window_params = [{pipeline_mode = #tpu.pipeline_mode<synchronous>, transform_indices = @transform_0, window_bounds = array<i64: 32, 1, 32>}, {pipeline_mode = #tpu.pipeline_mode<synchronous>, transform_indices = @transform_1, window_bounds = array<i64: 32, 256>}, {pipeline_mode = #tpu.pipeline_mode<synchronous>, transform_indices = @transform_2, window_bounds = array<i64: 32, 128>}, {pipeline_mode = #tpu.pipeline_mode<synchronous>, transform_indices = @transform_3, window_bounds = array<i64: 32, 128>}, {pipeline_mode = #tpu.pipeline_mode<synchronous>, transform_indices = @transform_4, window_bounds = array<i64: 1, 256>}, {pipeline_mode = #tpu.pipeline_mode<synchronous>, transform_indices = @transform_5, window_bounds = array<i64: 64, 256>}, {pipeline_mode = #tpu.pipeline_mode<synchronous>, transform_indices = @transform_6, window_bounds = array<i64: 32, 128>}, {pipeline_mode = #tpu.pipeline_mode<synchronous>, transform_indices = @transform_7, window_bounds = array<i64: 32, 128>}, {pipeline_mode = #tpu.pipeline_mode<synchronous>, transform_indices = @transform_8, window_bounds = array<i64: 1, 256>}, {pipeline_mode = #tpu.pipeline_mode<synchronous>, transform_indices = @transform_9, window_bounds = array<i64: 64, 256>}, {pipeline_mode = #tpu.pipeline_mode<synchronous>, transform_indices = @transform_10, window_bounds = array<i64: 1, 256>}, {pipeline_mode = #tpu.pipeline_mode<synchronous>, transform_indices = @transform_11, window_bounds = array<i64: 256, 16>}, {pipeline_mode = #tpu.pipeline_mode<synchronous>, transform_indices = @transform_12, window_bounds = array<i64: 1, 16>}, {pipeline_mode = #tpu.pipeline_mode<synchronous>, transform_indices = @transform_13, window_bounds = array<i64: 2, 8, 16>}]} {
    %c0 = arith.constant 0 : index
    %c0_0 = arith.constant 0 : index
    %0 = memref.load %arg1[%c0, %c0_0] : memref<2x8xi32, #tpu.memory_space<smem>>
    %1 = arith.index_cast %0 : i32 to index
    %c0_1 = arith.constant 0 : index
    %c0_2 = arith.constant 0 : index
    %2 = vector.load %arg2[%1, %c0_1, %c0_2] : memref<32x1x32xf32, #tpu.memory_space<vmem>>, vector<1x1x32xf32>
    %3 = vector.shape_cast %2 : vector<1x1x32xf32> to vector<1x32xf32>
    %c1 = arith.constant 1 : index
    %c0_3 = arith.constant 0 : index
    %4 = memref.load %arg1[%c1, %c0_3] : memref<2x8xi32, #tpu.memory_space<smem>>
    %5 = arith.index_cast %4 : i32 to index
    %c0_4 = arith.constant 0 : index
    %c0_5 = arith.constant 0 : index
    %6 = vector.load %arg2[%5, %c0_4, %c0_5] : memref<32x1x32xf32, #tpu.memory_space<vmem>>, vector<1x1x32xf32>
    %7 = vector.shape_cast %6 : vector<1x1x32xf32> to vector<1x32xf32>
    %c0_6 = arith.constant 0 : index
    %c1_7 = arith.constant 1 : index
    %8 = memref.load %arg1[%c0_6, %c1_7] : memref<2x8xi32, #tpu.memory_space<smem>>
    %9 = arith.index_cast %8 : i32 to index
    %c0_8 = arith.constant 0 : index
    %c0_9 = arith.constant 0 : index
    %10 = vector.load %arg2[%9, %c0_8, %c0_9] : memref<32x1x32xf32, #tpu.memory_space<vmem>>, vector<1x1x32xf32>
    %11 = vector.shape_cast %10 : vector<1x1x32xf32> to vector<1x32xf32>
    %c1_10 = arith.constant 1 : index
    %c1_11 = arith.constant 1 : index
    %12 = memref.load %arg1[%c1_10, %c1_11] : memref<2x8xi32, #tpu.memory_space<smem>>
    %13 = arith.index_cast %12 : i32 to index
    %c0_12 = arith.constant 0 : index
    %c0_13 = arith.constant 0 : index
    %14 = vector.load %arg2[%13, %c0_12, %c0_13] : memref<32x1x32xf32, #tpu.memory_space<vmem>>, vector<1x1x32xf32>
    %15 = vector.shape_cast %14 : vector<1x1x32xf32> to vector<1x32xf32>
    %c0_14 = arith.constant 0 : index
    %c2 = arith.constant 2 : index
    %16 = memref.load %arg1[%c0_14, %c2] : memref<2x8xi32, #tpu.memory_space<smem>>
    %17 = arith.index_cast %16 : i32 to index
    %c0_15 = arith.constant 0 : index
    %c0_16 = arith.constant 0 : index
    %18 = vector.load %arg2[%17, %c0_15, %c0_16] : memref<32x1x32xf32, #tpu.memory_space<vmem>>, vector<1x1x32xf32>
    %19 = vector.shape_cast %18 : vector<1x1x32xf32> to vector<1x32xf32>
    %c1_17 = arith.constant 1 : index
    %c2_18 = arith.constant 2 : index
    %20 = memref.load %arg1[%c1_17, %c2_18] : memref<2x8xi32, #tpu.memory_space<smem>>
    %21 = arith.index_cast %20 : i32 to index
    %c0_19 = arith.constant 0 : index
    %c0_20 = arith.constant 0 : index
    %22 = vector.load %arg2[%21, %c0_19, %c0_20] : memref<32x1x32xf32, #tpu.memory_space<vmem>>, vector<1x1x32xf32>
    %23 = vector.shape_cast %22 : vector<1x1x32xf32> to vector<1x32xf32>
    %c0_21 = arith.constant 0 : index
    %c3 = arith.constant 3 : index
    %24 = memref.load %arg1[%c0_21, %c3] : memref<2x8xi32, #tpu.memory_space<smem>>
    %25 = arith.index_cast %24 : i32 to index
    %c0_22 = arith.constant 0 : index
    %c0_23 = arith.constant 0 : index
    %26 = vector.load %arg2[%25, %c0_22, %c0_23] : memref<32x1x32xf32, #tpu.memory_space<vmem>>, vector<1x1x32xf32>
    %27 = vector.shape_cast %26 : vector<1x1x32xf32> to vector<1x32xf32>
    %c1_24 = arith.constant 1 : index
    %c3_25 = arith.constant 3 : index
    %28 = memref.load %arg1[%c1_24, %c3_25] : memref<2x8xi32, #tpu.memory_space<smem>>
    %29 = arith.index_cast %28 : i32 to index
    %c0_26 = arith.constant 0 : index
    %c0_27 = arith.constant 0 : index
    %30 = vector.load %arg2[%29, %c0_26, %c0_27] : memref<32x1x32xf32, #tpu.memory_space<vmem>>, vector<1x1x32xf32>
    %31 = vector.shape_cast %30 : vector<1x1x32xf32> to vector<1x32xf32>
    %c0_28 = arith.constant 0 : index
    %c4 = arith.constant 4 : index
    %32 = memref.load %arg1[%c0_28, %c4] : memref<2x8xi32, #tpu.memory_space<smem>>
    %33 = arith.index_cast %32 : i32 to index
    %c0_29 = arith.constant 0 : index
    %c0_30 = arith.constant 0 : index
    %34 = vector.load %arg2[%33, %c0_29, %c0_30] : memref<32x1x32xf32, #tpu.memory_space<vmem>>, vector<1x1x32xf32>
    %35 = vector.shape_cast %34 : vector<1x1x32xf32> to vector<1x32xf32>
    %c1_31 = arith.constant 1 : index
    %c4_32 = arith.constant 4 : index
    %36 = memref.load %arg1[%c1_31, %c4_32] : memref<2x8xi32, #tpu.memory_space<smem>>
    %37 = arith.index_cast %36 : i32 to index
    %c0_33 = arith.constant 0 : index
    %c0_34 = arith.constant 0 : index
    %38 = vector.load %arg2[%37, %c0_33, %c0_34] : memref<32x1x32xf32, #tpu.memory_space<vmem>>, vector<1x1x32xf32>
    %39 = vector.shape_cast %38 : vector<1x1x32xf32> to vector<1x32xf32>
    %c0_35 = arith.constant 0 : index
    %c5 = arith.constant 5 : index
    %40 = memref.load %arg1[%c0_35, %c5] : memref<2x8xi32, #tpu.memory_space<smem>>
    %41 = arith.index_cast %40 : i32 to index
    %c0_36 = arith.constant 0 : index
    %c0_37 = arith.constant 0 : index
    %42 = vector.load %arg2[%41, %c0_36, %c0_37] : memref<32x1x32xf32, #tpu.memory_space<vmem>>, vector<1x1x32xf32>
    %43 = vector.shape_cast %42 : vector<1x1x32xf32> to vector<1x32xf32>
    %c1_38 = arith.constant 1 : index
    %c5_39 = arith.constant 5 : index
    %44 = memref.load %arg1[%c1_38, %c5_39] : memref<2x8xi32, #tpu.memory_space<smem>>
    %45 = arith.index_cast %44 : i32 to index
    %c0_40 = arith.constant 0 : index
    %c0_41 = arith.constant 0 : index
    %46 = vector.load %arg2[%45, %c0_40, %c0_41] : memref<32x1x32xf32, #tpu.memory_space<vmem>>, vector<1x1x32xf32>
    %47 = vector.shape_cast %46 : vector<1x1x32xf32> to vector<1x32xf32>
    %c0_42 = arith.constant 0 : index
    %c6 = arith.constant 6 : index
    %48 = memref.load %arg1[%c0_42, %c6] : memref<2x8xi32, #tpu.memory_space<smem>>
    %49 = arith.index_cast %48 : i32 to index
    %c0_43 = arith.constant 0 : index
    %c0_44 = arith.constant 0 : index
    %50 = vector.load %arg2[%49, %c0_43, %c0_44] : memref<32x1x32xf32, #tpu.memory_space<vmem>>, vector<1x1x32xf32>
    %51 = vector.shape_cast %50 : vector<1x1x32xf32> to vector<1x32xf32>
    %c1_45 = arith.constant 1 : index
    %c6_46 = arith.constant 6 : index
    %52 = memref.load %arg1[%c1_45, %c6_46] : memref<2x8xi32, #tpu.memory_space<smem>>
    %53 = arith.index_cast %52 : i32 to index
    %c0_47 = arith.constant 0 : index
    %c0_48 = arith.constant 0 : index
    %54 = vector.load %arg2[%53, %c0_47, %c0_48] : memref<32x1x32xf32, #tpu.memory_space<vmem>>, vector<1x1x32xf32>
    %55 = vector.shape_cast %54 : vector<1x1x32xf32> to vector<1x32xf32>
    %c0_49 = arith.constant 0 : index
    %c7 = arith.constant 7 : index
    %56 = memref.load %arg1[%c0_49, %c7] : memref<2x8xi32, #tpu.memory_space<smem>>
    %57 = arith.index_cast %56 : i32 to index
    %c0_50 = arith.constant 0 : index
    %c0_51 = arith.constant 0 : index
    %58 = vector.load %arg2[%57, %c0_50, %c0_51] : memref<32x1x32xf32, #tpu.memory_space<vmem>>, vector<1x1x32xf32>
    %59 = vector.shape_cast %58 : vector<1x1x32xf32> to vector<1x32xf32>
    %c1_52 = arith.constant 1 : index
    %c7_53 = arith.constant 7 : index
    %60 = memref.load %arg1[%c1_52, %c7_53] : memref<2x8xi32, #tpu.memory_space<smem>>
    %61 = arith.index_cast %60 : i32 to index
    %c0_54 = arith.constant 0 : index
    %c0_55 = arith.constant 0 : index
    %62 = vector.load %arg2[%61, %c0_54, %c0_55] : memref<32x1x32xf32, #tpu.memory_space<vmem>>, vector<1x1x32xf32>
    %63 = vector.shape_cast %62 : vector<1x1x32xf32> to vector<1x32xf32>
    %64 = tpu.concatenate %3, %7, %11, %15, %19, %23, %27, %31, %35, %39, %43, %47, %51, %55, %59, %63 in 0 : vector<1x32xf32>, vector<1x32xf32>, vector<1x32xf32>, vector<1x32xf32>, vector<1x32xf32>, vector<1x32xf32>, vector<1x32xf32>, vector<1x32xf32>, vector<1x32xf32>, vector<1x32xf32>, vector<1x32xf32>, vector<1x32xf32>, vector<1x32xf32>, vector<1x32xf32>, vector<1x32xf32>, vector<1x32xf32> -> vector<16x32xf32>
    %cst = arith.constant 5.65685415 : f32
    %65 = vector.broadcast %cst : f32 to vector<16x32xf32>
    %66 = arith.mulf %64, %65 : vector<16x32xf32>
    %c0_56 = arith.constant 0 : index
    %c0_57 = arith.constant 0 : index
    %67 = vector.load %arg3[%c0_56, %c0_57] : memref<32x256xf32, #tpu.memory_space<vmem>>, vector<32x256xf32>
    %c0_58 = arith.constant 0 : index
    %c0_59 = arith.constant 0 : index
    %68 = vector.load %arg4[%c0_58, %c0_59] : memref<32x128xf32, #tpu.memory_space<vmem>>, vector<32x128xf32>
    %c0_60 = arith.constant 0 : index
    %c0_61 = arith.constant 0 : index
    %69 = vector.load %arg5[%c0_60, %c0_61] : memref<32x128xf32, #tpu.memory_space<vmem>>, vector<32x128xf32>
    %c0_62 = arith.constant 0 : index
    %c0_63 = arith.constant 0 : index
    %70 = vector.load %arg6[%c0_62, %c0_63] : memref<1x256xf32, #tpu.memory_space<vmem>>, vector<1x256xf32>
    %cst_64 = arith.constant dense<0.000000e+00> : vector<16x256xf32>
    %71 = tpu.matmul %66, %67, %cst_64 {dimension_numbers = #tpu.dot_dimension_numbers<[1], [0], [0], [1], [0, 0, 1, 1], [], []>} : vector<16x32xf32>, vector<32x256xf32>, vector<16x256xf32> -> vector<16x256xf32>
    %72 = vector.broadcast %70 : vector<1x256xf32> to vector<16x256xf32>
    %73 = arith.addf %71, %72 : vector<16x256xf32>
    %cst_65 = arith.constant 0.000000e+00 : f32
    %74 = vector.broadcast %cst_65 : f32 to vector<2x32xf32>
    %cst_66 = arith.constant 0.000000e+00 : f32
    %75 = vector.broadcast %cst_66 : f32 to vector<2x32xf32>
    %cst_67 = arith.constant 0.000000e+00 : f32
    %76 = vector.broadcast %cst_67 : f32 to vector<2x32xf32>
    %cst_68 = arith.constant 0.000000e+00 : f32
    %77 = vector.broadcast %cst_68 : f32 to vector<2x32xf32>
    %78 = vector.extract_strided_slice %73 {offsets = [0, 0], sizes = [2, 128], strides = [1, 1]} : vector<16x256xf32> to vector<2x128xf32>
    %cst_69 = arith.constant dense<0.000000e+00> : vector<2x128xf32>
    %79 = tpu.matmul %74, %68, %cst_69 {dimension_numbers = #tpu.dot_dimension_numbers<[1], [0], [0], [1], [0, 0, 1, 1], [], []>} : vector<2x32xf32>, vector<32x128xf32>, vector<2x128xf32> -> vector<2x128xf32>
    %80 = arith.addf %78, %79 : vector<2x128xf32>
    %81 = vector.extract_strided_slice %73 {offsets = [14, 128], sizes = [2, 128], strides = [1, 1]} : vector<16x256xf32> to vector<2x128xf32>
    %cst_70 = arith.constant dense<0.000000e+00> : vector<2x128xf32>
    %82 = tpu.matmul %76, %69, %cst_70 {dimension_numbers = #tpu.dot_dimension_numbers<[1], [0], [0], [1], [0, 0, 1, 1], [], []>} : vector<2x32xf32>, vector<32x128xf32>, vector<2x128xf32> -> vector<2x128xf32>
    %83 = arith.addf %81, %82 : vector<2x128xf32>
    %84 = vector.extract_strided_slice %80 {offsets = [0, 0], sizes = [2, 32], strides = [1, 1]} : vector<2x128xf32> to vector<2x32xf32>
    %85 = arith.negf %84 : vector<2x32xf32>
    %86 = math.exp %85 : vector<2x32xf32>
    %cst_71 = arith.constant 1.000000e+00 : f32
    %87 = vector.broadcast %cst_71 : f32 to vector<2x32xf32>
    %88 = arith.addf %87, %86 : vector<2x32xf32>
    %89 = arith.divf %87, %88 : vector<2x32xf32>
    %90 = vector.extract_strided_slice %80 {offsets = [0, 32], sizes = [2, 32], strides = [1, 1]} : vector<2x128xf32> to vector<2x32xf32>
    %91 = arith.negf %90 : vector<2x32xf32>
    %92 = math.exp %91 : vector<2x32xf32>
    %cst_72 = arith.constant 1.000000e+00 : f32
    %93 = vector.broadcast %cst_72 : f32 to vector<2x32xf32>
    %94 = arith.addf %93, %92 : vector<2x32xf32>
    %95 = arith.divf %93, %94 : vector<2x32xf32>
    %96 = vector.extract_strided_slice %80 {offsets = [0, 64], sizes = [2, 32], strides = [1, 1]} : vector<2x128xf32> to vector<2x32xf32>
    %97 = math.tanh %96 : vector<2x32xf32>
    %98 = vector.extract_strided_slice %80 {offsets = [0, 96], sizes = [2, 32], strides = [1, 1]} : vector<2x128xf32> to vector<2x32xf32>
    %99 = arith.negf %98 : vector<2x32xf32>
    %100 = math.exp %99 : vector<2x32xf32>
    %cst_73 = arith.constant 1.000000e+00 : f32
    %101 = vector.broadcast %cst_73 : f32 to vector<2x32xf32>
    %102 = arith.addf %101, %100 : vector<2x32xf32>
    %103 = arith.divf %101, %102 : vector<2x32xf32>
    %104 = arith.mulf %95, %75 : vector<2x32xf32>
    %105 = arith.mulf %89, %97 : vector<2x32xf32>
    %106 = arith.addf %104, %105 : vector<2x32xf32>
    %107 = math.tanh %106 : vector<2x32xf32>
    %108 = arith.mulf %103, %107 : vector<2x32xf32>
    %109 = vector.extract_strided_slice %83 {offsets = [0, 0], sizes = [2, 32], strides = [1, 1]} : vector<2x128xf32> to vector<2x32xf32>
    %110 = arith.negf %109 : vector<2x32xf32>
    %111 = math.exp %110 : vector<2x32xf32>
    %cst_74 = arith.constant 1.000000e+00 : f32
    %112 = vector.broadcast %cst_74 : f32 to vector<2x32xf32>
    %113 = arith.addf %112, %111 : vector<2x32xf32>
    %114 = arith.divf %112, %113 : vector<2x32xf32>
    %115 = vector.extract_strided_slice %83 {offsets = [0, 32], sizes = [2, 32], strides = [1, 1]} : vector<2x128xf32> to vector<2x32xf32>
    %116 = arith.negf %115 : vector<2x32xf32>
    %117 = math.exp %116 : vector<2x32xf32>
    %cst_75 = arith.constant 1.000000e+00 : f32
    %118 = vector.broadcast %cst_75 : f32 to vector<2x32xf32>
    %119 = arith.addf %118, %117 : vector<2x32xf32>
    %120 = arith.divf %118, %119 : vector<2x32xf32>
    %121 = vector.extract_strided_slice %83 {offsets = [0, 64], sizes = [2, 32], strides = [1, 1]} : vector<2x128xf32> to vector<2x32xf32>
    %122 = math.tanh %121 : vector<2x32xf32>
    %123 = vector.extract_strided_slice %83 {offsets = [0, 96], sizes = [2, 32], strides = [1, 1]} : vector<2x128xf32> to vector<2x32xf32>
    %124 = arith.negf %123 : vector<2x32xf32>
    %125 = math.exp %124 : vector<2x32xf32>
    %cst_76 = arith.constant 1.000000e+00 : f32
    %126 = vector.broadcast %cst_76 : f32 to vector<2x32xf32>
    %127 = arith.addf %126, %125 : vector<2x32xf32>
    %128 = arith.divf %126, %127 : vector<2x32xf32>
    %129 = arith.mulf %120, %77 : vector<2x32xf32>
    %130 = arith.mulf %114, %122 : vector<2x32xf32>
    %131 = arith.addf %129, %130 : vector<2x32xf32>
    %132 = math.tanh %131 : vector<2x32xf32>
    %133 = arith.mulf %128, %132 : vector<2x32xf32>
    %134 = vector.extract_strided_slice %73 {offsets = [2, 0], sizes = [2, 128], strides = [1, 1]} : vector<16x256xf32> to vector<2x128xf32>
    %cst_77 = arith.constant dense<0.000000e+00> : vector<2x128xf32>
    %135 = tpu.matmul %108, %68, %cst_77 {dimension_numbers = #tpu.dot_dimension_numbers<[1], [0], [0], [1], [0, 0, 1, 1], [], []>} : vector<2x32xf32>, vector<32x128xf32>, vector<2x128xf32> -> vector<2x128xf32>
    %136 = arith.addf %134, %135 : vector<2x128xf32>
    %137 = vector.extract_strided_slice %73 {offsets = [12, 128], sizes = [2, 128], strides = [1, 1]} : vector<16x256xf32> to vector<2x128xf32>
    %cst_78 = arith.constant dense<0.000000e+00> : vector<2x128xf32>
    %138 = tpu.matmul %133, %69, %cst_78 {dimension_numbers = #tpu.dot_dimension_numbers<[1], [0], [0], [1], [0, 0, 1, 1], [], []>} : vector<2x32xf32>, vector<32x128xf32>, vector<2x128xf32> -> vector<2x128xf32>
    %139 = arith.addf %137, %138 : vector<2x128xf32>
    %140 = vector.extract_strided_slice %136 {offsets = [0, 0], sizes = [2, 32], strides = [1, 1]} : vector<2x128xf32> to vector<2x32xf32>
    %141 = arith.negf %140 : vector<2x32xf32>
    %142 = math.exp %141 : vector<2x32xf32>
    %cst_79 = arith.constant 1.000000e+00 : f32
    %143 = vector.broadcast %cst_79 : f32 to vector<2x32xf32>
    %144 = arith.addf %143, %142 : vector<2x32xf32>
    %145 = arith.divf %143, %144 : vector<2x32xf32>
    %146 = vector.extract_strided_slice %136 {offsets = [0, 32], sizes = [2, 32], strides = [1, 1]} : vector<2x128xf32> to vector<2x32xf32>
    %147 = arith.negf %146 : vector<2x32xf32>
    %148 = math.exp %147 : vector<2x32xf32>
    %cst_80 = arith.constant 1.000000e+00 : f32
    %149 = vector.broadcast %cst_80 : f32 to vector<2x32xf32>
    %150 = arith.addf %149, %148 : vector<2x32xf32>
    %151 = arith.divf %149, %150 : vector<2x32xf32>
    %152 = vector.extract_strided_slice %136 {offsets = [0, 64], sizes = [2, 32], strides = [1, 1]} : vector<2x128xf32> to vector<2x32xf32>
    %153 = math.tanh %152 : vector<2x32xf32>
    %154 = vector.extract_strided_slice %136 {offsets = [0, 96], sizes = [2, 32], strides = [1, 1]} : vector<2x128xf32> to vector<2x32xf32>
    %155 = arith.negf %154 : vector<2x32xf32>
    %156 = math.exp %155 : vector<2x32xf32>
    %cst_81 = arith.constant 1.000000e+00 : f32
    %157 = vector.broadcast %cst_81 : f32 to vector<2x32xf32>
    %158 = arith.addf %157, %156 : vector<2x32xf32>
    %159 = arith.divf %157, %158 : vector<2x32xf32>
    %160 = arith.mulf %151, %106 : vector<2x32xf32>
    %161 = arith.mulf %145, %153 : vector<2x32xf32>
    %162 = arith.addf %160, %161 : vector<2x32xf32>
    %163 = math.tanh %162 : vector<2x32xf32>
    %164 = arith.mulf %159, %163 : vector<2x32xf32>
    %165 = vector.extract_strided_slice %139 {offsets = [0, 0], sizes = [2, 32], strides = [1, 1]} : vector<2x128xf32> to vector<2x32xf32>
    %166 = arith.negf %165 : vector<2x32xf32>
    %167 = math.exp %166 : vector<2x32xf32>
    %cst_82 = arith.constant 1.000000e+00 : f32
    %168 = vector.broadcast %cst_82 : f32 to vector<2x32xf32>
    %169 = arith.addf %168, %167 : vector<2x32xf32>
    %170 = arith.divf %168, %169 : vector<2x32xf32>
    %171 = vector.extract_strided_slice %139 {offsets = [0, 32], sizes = [2, 32], strides = [1, 1]} : vector<2x128xf32> to vector<2x32xf32>
    %172 = arith.negf %171 : vector<2x32xf32>
    %173 = math.exp %172 : vector<2x32xf32>
    %cst_83 = arith.constant 1.000000e+00 : f32
    %174 = vector.broadcast %cst_83 : f32 to vector<2x32xf32>
    %175 = arith.addf %174, %173 : vector<2x32xf32>
    %176 = arith.divf %174, %175 : vector<2x32xf32>
    %177 = vector.extract_strided_slice %139 {offsets = [0, 64], sizes = [2, 32], strides = [1, 1]} : vector<2x128xf32> to vector<2x32xf32>
    %178 = math.tanh %177 : vector<2x32xf32>
    %179 = vector.extract_strided_slice %139 {offsets = [0, 96], sizes = [2, 32], strides = [1, 1]} : vector<2x128xf32> to vector<2x32xf32>
    %180 = arith.negf %179 : vector<2x32xf32>
    %181 = math.exp %180 : vector<2x32xf32>
    %cst_84 = arith.constant 1.000000e+00 : f32
    %182 = vector.broadcast %cst_84 : f32 to vector<2x32xf32>
    %183 = arith.addf %182, %181 : vector<2x32xf32>
    %184 = arith.divf %182, %183 : vector<2x32xf32>
    %185 = arith.mulf %176, %131 : vector<2x32xf32>
    %186 = arith.mulf %170, %178 : vector<2x32xf32>
    %187 = arith.addf %185, %186 : vector<2x32xf32>
    %188 = math.tanh %187 : vector<2x32xf32>
    %189 = arith.mulf %184, %188 : vector<2x32xf32>
    %190 = vector.extract_strided_slice %73 {offsets = [4, 0], sizes = [2, 128], strides = [1, 1]} : vector<16x256xf32> to vector<2x128xf32>
    %cst_85 = arith.constant dense<0.000000e+00> : vector<2x128xf32>
    %191 = tpu.matmul %164, %68, %cst_85 {dimension_numbers = #tpu.dot_dimension_numbers<[1], [0], [0], [1], [0, 0, 1, 1], [], []>} : vector<2x32xf32>, vector<32x128xf32>, vector<2x128xf32> -> vector<2x128xf32>
    %192 = arith.addf %190, %191 : vector<2x128xf32>
    %193 = vector.extract_strided_slice %73 {offsets = [10, 128], sizes = [2, 128], strides = [1, 1]} : vector<16x256xf32> to vector<2x128xf32>
    %cst_86 = arith.constant dense<0.000000e+00> : vector<2x128xf32>
    %194 = tpu.matmul %189, %69, %cst_86 {dimension_numbers = #tpu.dot_dimension_numbers<[1], [0], [0], [1], [0, 0, 1, 1], [], []>} : vector<2x32xf32>, vector<32x128xf32>, vector<2x128xf32> -> vector<2x128xf32>
    %195 = arith.addf %193, %194 : vector<2x128xf32>
    %196 = vector.extract_strided_slice %192 {offsets = [0, 0], sizes = [2, 32], strides = [1, 1]} : vector<2x128xf32> to vector<2x32xf32>
    %197 = arith.negf %196 : vector<2x32xf32>
    %198 = math.exp %197 : vector<2x32xf32>
    %cst_87 = arith.constant 1.000000e+00 : f32
    %199 = vector.broadcast %cst_87 : f32 to vector<2x32xf32>
    %200 = arith.addf %199, %198 : vector<2x32xf32>
    %201 = arith.divf %199, %200 : vector<2x32xf32>
    %202 = vector.extract_strided_slice %192 {offsets = [0, 32], sizes = [2, 32], strides = [1, 1]} : vector<2x128xf32> to vector<2x32xf32>
    %203 = arith.negf %202 : vector<2x32xf32>
    %204 = math.exp %203 : vector<2x32xf32>
    %cst_88 = arith.constant 1.000000e+00 : f32
    %205 = vector.broadcast %cst_88 : f32 to vector<2x32xf32>
    %206 = arith.addf %205, %204 : vector<2x32xf32>
    %207 = arith.divf %205, %206 : vector<2x32xf32>
    %208 = vector.extract_strided_slice %192 {offsets = [0, 64], sizes = [2, 32], strides = [1, 1]} : vector<2x128xf32> to vector<2x32xf32>
    %209 = math.tanh %208 : vector<2x32xf32>
    %210 = vector.extract_strided_slice %192 {offsets = [0, 96], sizes = [2, 32], strides = [1, 1]} : vector<2x128xf32> to vector<2x32xf32>
    %211 = arith.negf %210 : vector<2x32xf32>
    %212 = math.exp %211 : vector<2x32xf32>
    %cst_89 = arith.constant 1.000000e+00 : f32
    %213 = vector.broadcast %cst_89 : f32 to vector<2x32xf32>
    %214 = arith.addf %213, %212 : vector<2x32xf32>
    %215 = arith.divf %213, %214 : vector<2x32xf32>
    %216 = arith.mulf %207, %162 : vector<2x32xf32>
    %217 = arith.mulf %201, %209 : vector<2x32xf32>
    %218 = arith.addf %216, %217 : vector<2x32xf32>
    %219 = math.tanh %218 : vector<2x32xf32>
    %220 = arith.mulf %215, %219 : vector<2x32xf32>
    %221 = vector.extract_strided_slice %195 {offsets = [0, 0], sizes = [2, 32], strides = [1, 1]} : vector<2x128xf32> to vector<2x32xf32>
    %222 = arith.negf %221 : vector<2x32xf32>
    %223 = math.exp %222 : vector<2x32xf32>
    %cst_90 = arith.constant 1.000000e+00 : f32
    %224 = vector.broadcast %cst_90 : f32 to vector<2x32xf32>
    %225 = arith.addf %224, %223 : vector<2x32xf32>
    %226 = arith.divf %224, %225 : vector<2x32xf32>
    %227 = vector.extract_strided_slice %195 {offsets = [0, 32], sizes = [2, 32], strides = [1, 1]} : vector<2x128xf32> to vector<2x32xf32>
    %228 = arith.negf %227 : vector<2x32xf32>
    %229 = math.exp %228 : vector<2x32xf32>
    %cst_91 = arith.constant 1.000000e+00 : f32
    %230 = vector.broadcast %cst_91 : f32 to vector<2x32xf32>
    %231 = arith.addf %230, %229 : vector<2x32xf32>
    %232 = arith.divf %230, %231 : vector<2x32xf32>
    %233 = vector.extract_strided_slice %195 {offsets = [0, 64], sizes = [2, 32], strides = [1, 1]} : vector<2x128xf32> to vector<2x32xf32>
    %234 = math.tanh %233 : vector<2x32xf32>
    %235 = vector.extract_strided_slice %195 {offsets = [0, 96], sizes = [2, 32], strides = [1, 1]} : vector<2x128xf32> to vector<2x32xf32>
    %236 = arith.negf %235 : vector<2x32xf32>
    %237 = math.exp %236 : vector<2x32xf32>
    %cst_92 = arith.constant 1.000000e+00 : f32
    %238 = vector.broadcast %cst_92 : f32 to vector<2x32xf32>
    %239 = arith.addf %238, %237 : vector<2x32xf32>
    %240 = arith.divf %238, %239 : vector<2x32xf32>
    %241 = arith.mulf %232, %187 : vector<2x32xf32>
    %242 = arith.mulf %226, %234 : vector<2x32xf32>
    %243 = arith.addf %241, %242 : vector<2x32xf32>
    %244 = math.tanh %243 : vector<2x32xf32>
    %245 = arith.mulf %240, %244 : vector<2x32xf32>
    %246 = vector.extract_strided_slice %73 {offsets = [6, 0], sizes = [2, 128], strides = [1, 1]} : vector<16x256xf32> to vector<2x128xf32>
    %cst_93 = arith.constant dense<0.000000e+00> : vector<2x128xf32>
    %247 = tpu.matmul %220, %68, %cst_93 {dimension_numbers = #tpu.dot_dimension_numbers<[1], [0], [0], [1], [0, 0, 1, 1], [], []>} : vector<2x32xf32>, vector<32x128xf32>, vector<2x128xf32> -> vector<2x128xf32>
    %248 = arith.addf %246, %247 : vector<2x128xf32>
    %249 = vector.extract_strided_slice %73 {offsets = [8, 128], sizes = [2, 128], strides = [1, 1]} : vector<16x256xf32> to vector<2x128xf32>
    %cst_94 = arith.constant dense<0.000000e+00> : vector<2x128xf32>
    %250 = tpu.matmul %245, %69, %cst_94 {dimension_numbers = #tpu.dot_dimension_numbers<[1], [0], [0], [1], [0, 0, 1, 1], [], []>} : vector<2x32xf32>, vector<32x128xf32>, vector<2x128xf32> -> vector<2x128xf32>
    %251 = arith.addf %249, %250 : vector<2x128xf32>
    %252 = vector.extract_strided_slice %248 {offsets = [0, 0], sizes = [2, 32], strides = [1, 1]} : vector<2x128xf32> to vector<2x32xf32>
    %253 = arith.negf %252 : vector<2x32xf32>
    %254 = math.exp %253 : vector<2x32xf32>
    %cst_95 = arith.constant 1.000000e+00 : f32
    %255 = vector.broadcast %cst_95 : f32 to vector<2x32xf32>
    %256 = arith.addf %255, %254 : vector<2x32xf32>
    %257 = arith.divf %255, %256 : vector<2x32xf32>
    %258 = vector.extract_strided_slice %248 {offsets = [0, 32], sizes = [2, 32], strides = [1, 1]} : vector<2x128xf32> to vector<2x32xf32>
    %259 = arith.negf %258 : vector<2x32xf32>
    %260 = math.exp %259 : vector<2x32xf32>
    %cst_96 = arith.constant 1.000000e+00 : f32
    %261 = vector.broadcast %cst_96 : f32 to vector<2x32xf32>
    %262 = arith.addf %261, %260 : vector<2x32xf32>
    %263 = arith.divf %261, %262 : vector<2x32xf32>
    %264 = vector.extract_strided_slice %248 {offsets = [0, 64], sizes = [2, 32], strides = [1, 1]} : vector<2x128xf32> to vector<2x32xf32>
    %265 = math.tanh %264 : vector<2x32xf32>
    %266 = vector.extract_strided_slice %248 {offsets = [0, 96], sizes = [2, 32], strides = [1, 1]} : vector<2x128xf32> to vector<2x32xf32>
    %267 = arith.negf %266 : vector<2x32xf32>
    %268 = math.exp %267 : vector<2x32xf32>
    %cst_97 = arith.constant 1.000000e+00 : f32
    %269 = vector.broadcast %cst_97 : f32 to vector<2x32xf32>
    %270 = arith.addf %269, %268 : vector<2x32xf32>
    %271 = arith.divf %269, %270 : vector<2x32xf32>
    %272 = arith.mulf %263, %218 : vector<2x32xf32>
    %273 = arith.mulf %257, %265 : vector<2x32xf32>
    %274 = arith.addf %272, %273 : vector<2x32xf32>
    %275 = math.tanh %274 : vector<2x32xf32>
    %276 = arith.mulf %271, %275 : vector<2x32xf32>
    %277 = vector.extract_strided_slice %251 {offsets = [0, 0], sizes = [2, 32], strides = [1, 1]} : vector<2x128xf32> to vector<2x32xf32>
    %278 = arith.negf %277 : vector<2x32xf32>
    %279 = math.exp %278 : vector<2x32xf32>
    %cst_98 = arith.constant 1.000000e+00 : f32
    %280 = vector.broadcast %cst_98 : f32 to vector<2x32xf32>
    %281 = arith.addf %280, %279 : vector<2x32xf32>
    %282 = arith.divf %280, %281 : vector<2x32xf32>
    %283 = vector.extract_strided_slice %251 {offsets = [0, 32], sizes = [2, 32], strides = [1, 1]} : vector<2x128xf32> to vector<2x32xf32>
    %284 = arith.negf %283 : vector<2x32xf32>
    %285 = math.exp %284 : vector<2x32xf32>
    %cst_99 = arith.constant 1.000000e+00 : f32
    %286 = vector.broadcast %cst_99 : f32 to vector<2x32xf32>
    %287 = arith.addf %286, %285 : vector<2x32xf32>
    %288 = arith.divf %286, %287 : vector<2x32xf32>
    %289 = vector.extract_strided_slice %251 {offsets = [0, 64], sizes = [2, 32], strides = [1, 1]} : vector<2x128xf32> to vector<2x32xf32>
    %290 = math.tanh %289 : vector<2x32xf32>
    %291 = vector.extract_strided_slice %251 {offsets = [0, 96], sizes = [2, 32], strides = [1, 1]} : vector<2x128xf32> to vector<2x32xf32>
    %292 = arith.negf %291 : vector<2x32xf32>
    %293 = math.exp %292 : vector<2x32xf32>
    %cst_100 = arith.constant 1.000000e+00 : f32
    %294 = vector.broadcast %cst_100 : f32 to vector<2x32xf32>
    %295 = arith.addf %294, %293 : vector<2x32xf32>
    %296 = arith.divf %294, %295 : vector<2x32xf32>
    %297 = arith.mulf %288, %243 : vector<2x32xf32>
    %298 = arith.mulf %282, %290 : vector<2x32xf32>
    %299 = arith.addf %297, %298 : vector<2x32xf32>
    %300 = math.tanh %299 : vector<2x32xf32>
    %301 = arith.mulf %296, %300 : vector<2x32xf32>
    %302 = vector.extract_strided_slice %73 {offsets = [8, 0], sizes = [2, 128], strides = [1, 1]} : vector<16x256xf32> to vector<2x128xf32>
    %cst_101 = arith.constant dense<0.000000e+00> : vector<2x128xf32>
    %303 = tpu.matmul %276, %68, %cst_101 {dimension_numbers = #tpu.dot_dimension_numbers<[1], [0], [0], [1], [0, 0, 1, 1], [], []>} : vector<2x32xf32>, vector<32x128xf32>, vector<2x128xf32> -> vector<2x128xf32>
    %304 = arith.addf %302, %303 : vector<2x128xf32>
    %305 = vector.extract_strided_slice %73 {offsets = [6, 128], sizes = [2, 128], strides = [1, 1]} : vector<16x256xf32> to vector<2x128xf32>
    %cst_102 = arith.constant dense<0.000000e+00> : vector<2x128xf32>
    %306 = tpu.matmul %301, %69, %cst_102 {dimension_numbers = #tpu.dot_dimension_numbers<[1], [0], [0], [1], [0, 0, 1, 1], [], []>} : vector<2x32xf32>, vector<32x128xf32>, vector<2x128xf32> -> vector<2x128xf32>
    %307 = arith.addf %305, %306 : vector<2x128xf32>
    %308 = vector.extract_strided_slice %304 {offsets = [0, 0], sizes = [2, 32], strides = [1, 1]} : vector<2x128xf32> to vector<2x32xf32>
    %309 = arith.negf %308 : vector<2x32xf32>
    %310 = math.exp %309 : vector<2x32xf32>
    %cst_103 = arith.constant 1.000000e+00 : f32
    %311 = vector.broadcast %cst_103 : f32 to vector<2x32xf32>
    %312 = arith.addf %311, %310 : vector<2x32xf32>
    %313 = arith.divf %311, %312 : vector<2x32xf32>
    %314 = vector.extract_strided_slice %304 {offsets = [0, 32], sizes = [2, 32], strides = [1, 1]} : vector<2x128xf32> to vector<2x32xf32>
    %315 = arith.negf %314 : vector<2x32xf32>
    %316 = math.exp %315 : vector<2x32xf32>
    %cst_104 = arith.constant 1.000000e+00 : f32
    %317 = vector.broadcast %cst_104 : f32 to vector<2x32xf32>
    %318 = arith.addf %317, %316 : vector<2x32xf32>
    %319 = arith.divf %317, %318 : vector<2x32xf32>
    %320 = vector.extract_strided_slice %304 {offsets = [0, 64], sizes = [2, 32], strides = [1, 1]} : vector<2x128xf32> to vector<2x32xf32>
    %321 = math.tanh %320 : vector<2x32xf32>
    %322 = vector.extract_strided_slice %304 {offsets = [0, 96], sizes = [2, 32], strides = [1, 1]} : vector<2x128xf32> to vector<2x32xf32>
    %323 = arith.negf %322 : vector<2x32xf32>
    %324 = math.exp %323 : vector<2x32xf32>
    %cst_105 = arith.constant 1.000000e+00 : f32
    %325 = vector.broadcast %cst_105 : f32 to vector<2x32xf32>
    %326 = arith.addf %325, %324 : vector<2x32xf32>
    %327 = arith.divf %325, %326 : vector<2x32xf32>
    %328 = arith.mulf %319, %274 : vector<2x32xf32>
    %329 = arith.mulf %313, %321 : vector<2x32xf32>
    %330 = arith.addf %328, %329 : vector<2x32xf32>
    %331 = math.tanh %330 : vector<2x32xf32>
    %332 = arith.mulf %327, %331 : vector<2x32xf32>
    %333 = vector.extract_strided_slice %307 {offsets = [0, 0], sizes = [2, 32], strides = [1, 1]} : vector<2x128xf32> to vector<2x32xf32>
    %334 = arith.negf %333 : vector<2x32xf32>
    %335 = math.exp %334 : vector<2x32xf32>
    %cst_106 = arith.constant 1.000000e+00 : f32
    %336 = vector.broadcast %cst_106 : f32 to vector<2x32xf32>
    %337 = arith.addf %336, %335 : vector<2x32xf32>
    %338 = arith.divf %336, %337 : vector<2x32xf32>
    %339 = vector.extract_strided_slice %307 {offsets = [0, 32], sizes = [2, 32], strides = [1, 1]} : vector<2x128xf32> to vector<2x32xf32>
    %340 = arith.negf %339 : vector<2x32xf32>
    %341 = math.exp %340 : vector<2x32xf32>
    %cst_107 = arith.constant 1.000000e+00 : f32
    %342 = vector.broadcast %cst_107 : f32 to vector<2x32xf32>
    %343 = arith.addf %342, %341 : vector<2x32xf32>
    %344 = arith.divf %342, %343 : vector<2x32xf32>
    %345 = vector.extract_strided_slice %307 {offsets = [0, 64], sizes = [2, 32], strides = [1, 1]} : vector<2x128xf32> to vector<2x32xf32>
    %346 = math.tanh %345 : vector<2x32xf32>
    %347 = vector.extract_strided_slice %307 {offsets = [0, 96], sizes = [2, 32], strides = [1, 1]} : vector<2x128xf32> to vector<2x32xf32>
    %348 = arith.negf %347 : vector<2x32xf32>
    %349 = math.exp %348 : vector<2x32xf32>
    %cst_108 = arith.constant 1.000000e+00 : f32
    %350 = vector.broadcast %cst_108 : f32 to vector<2x32xf32>
    %351 = arith.addf %350, %349 : vector<2x32xf32>
    %352 = arith.divf %350, %351 : vector<2x32xf32>
    %353 = arith.mulf %344, %299 : vector<2x32xf32>
    %354 = arith.mulf %338, %346 : vector<2x32xf32>
    %355 = arith.addf %353, %354 : vector<2x32xf32>
    %356 = math.tanh %355 : vector<2x32xf32>
    %357 = arith.mulf %352, %356 : vector<2x32xf32>
    %358 = vector.extract_strided_slice %73 {offsets = [10, 0], sizes = [2, 128], strides = [1, 1]} : vector<16x256xf32> to vector<2x128xf32>
    %cst_109 = arith.constant dense<0.000000e+00> : vector<2x128xf32>
    %359 = tpu.matmul %332, %68, %cst_109 {dimension_numbers = #tpu.dot_dimension_numbers<[1], [0], [0], [1], [0, 0, 1, 1], [], []>} : vector<2x32xf32>, vector<32x128xf32>, vector<2x128xf32> -> vector<2x128xf32>
    %360 = arith.addf %358, %359 : vector<2x128xf32>
    %361 = vector.extract_strided_slice %73 {offsets = [4, 128], sizes = [2, 128], strides = [1, 1]} : vector<16x256xf32> to vector<2x128xf32>
    %cst_110 = arith.constant dense<0.000000e+00> : vector<2x128xf32>
    %362 = tpu.matmul %357, %69, %cst_110 {dimension_numbers = #tpu.dot_dimension_numbers<[1], [0], [0], [1], [0, 0, 1, 1], [], []>} : vector<2x32xf32>, vector<32x128xf32>, vector<2x128xf32> -> vector<2x128xf32>
    %363 = arith.addf %361, %362 : vector<2x128xf32>
    %364 = vector.extract_strided_slice %360 {offsets = [0, 0], sizes = [2, 32], strides = [1, 1]} : vector<2x128xf32> to vector<2x32xf32>
    %365 = arith.negf %364 : vector<2x32xf32>
    %366 = math.exp %365 : vector<2x32xf32>
    %cst_111 = arith.constant 1.000000e+00 : f32
    %367 = vector.broadcast %cst_111 : f32 to vector<2x32xf32>
    %368 = arith.addf %367, %366 : vector<2x32xf32>
    %369 = arith.divf %367, %368 : vector<2x32xf32>
    %370 = vector.extract_strided_slice %360 {offsets = [0, 32], sizes = [2, 32], strides = [1, 1]} : vector<2x128xf32> to vector<2x32xf32>
    %371 = arith.negf %370 : vector<2x32xf32>
    %372 = math.exp %371 : vector<2x32xf32>
    %cst_112 = arith.constant 1.000000e+00 : f32
    %373 = vector.broadcast %cst_112 : f32 to vector<2x32xf32>
    %374 = arith.addf %373, %372 : vector<2x32xf32>
    %375 = arith.divf %373, %374 : vector<2x32xf32>
    %376 = vector.extract_strided_slice %360 {offsets = [0, 64], sizes = [2, 32], strides = [1, 1]} : vector<2x128xf32> to vector<2x32xf32>
    %377 = math.tanh %376 : vector<2x32xf32>
    %378 = vector.extract_strided_slice %360 {offsets = [0, 96], sizes = [2, 32], strides = [1, 1]} : vector<2x128xf32> to vector<2x32xf32>
    %379 = arith.negf %378 : vector<2x32xf32>
    %380 = math.exp %379 : vector<2x32xf32>
    %cst_113 = arith.constant 1.000000e+00 : f32
    %381 = vector.broadcast %cst_113 : f32 to vector<2x32xf32>
    %382 = arith.addf %381, %380 : vector<2x32xf32>
    %383 = arith.divf %381, %382 : vector<2x32xf32>
    %384 = arith.mulf %375, %330 : vector<2x32xf32>
    %385 = arith.mulf %369, %377 : vector<2x32xf32>
    %386 = arith.addf %384, %385 : vector<2x32xf32>
    %387 = math.tanh %386 : vector<2x32xf32>
    %388 = arith.mulf %383, %387 : vector<2x32xf32>
    %389 = vector.extract_strided_slice %363 {offsets = [0, 0], sizes = [2, 32], strides = [1, 1]} : vector<2x128xf32> to vector<2x32xf32>
    %390 = arith.negf %389 : vector<2x32xf32>
    %391 = math.exp %390 : vector<2x32xf32>
    %cst_114 = arith.constant 1.000000e+00 : f32
    %392 = vector.broadcast %cst_114 : f32 to vector<2x32xf32>
    %393 = arith.addf %392, %391 : vector<2x32xf32>
    %394 = arith.divf %392, %393 : vector<2x32xf32>
    %395 = vector.extract_strided_slice %363 {offsets = [0, 32], sizes = [2, 32], strides = [1, 1]} : vector<2x128xf32> to vector<2x32xf32>
    %396 = arith.negf %395 : vector<2x32xf32>
    %397 = math.exp %396 : vector<2x32xf32>
    %cst_115 = arith.constant 1.000000e+00 : f32
    %398 = vector.broadcast %cst_115 : f32 to vector<2x32xf32>
    %399 = arith.addf %398, %397 : vector<2x32xf32>
    %400 = arith.divf %398, %399 : vector<2x32xf32>
    %401 = vector.extract_strided_slice %363 {offsets = [0, 64], sizes = [2, 32], strides = [1, 1]} : vector<2x128xf32> to vector<2x32xf32>
    %402 = math.tanh %401 : vector<2x32xf32>
    %403 = vector.extract_strided_slice %363 {offsets = [0, 96], sizes = [2, 32], strides = [1, 1]} : vector<2x128xf32> to vector<2x32xf32>
    %404 = arith.negf %403 : vector<2x32xf32>
    %405 = math.exp %404 : vector<2x32xf32>
    %cst_116 = arith.constant 1.000000e+00 : f32
    %406 = vector.broadcast %cst_116 : f32 to vector<2x32xf32>
    %407 = arith.addf %406, %405 : vector<2x32xf32>
    %408 = arith.divf %406, %407 : vector<2x32xf32>
    %409 = arith.mulf %400, %355 : vector<2x32xf32>
    %410 = arith.mulf %394, %402 : vector<2x32xf32>
    %411 = arith.addf %409, %410 : vector<2x32xf32>
    %412 = math.tanh %411 : vector<2x32xf32>
    %413 = arith.mulf %408, %412 : vector<2x32xf32>
    %414 = vector.extract_strided_slice %73 {offsets = [12, 0], sizes = [2, 128], strides = [1, 1]} : vector<16x256xf32> to vector<2x128xf32>
    %cst_117 = arith.constant dense<0.000000e+00> : vector<2x128xf32>
    %415 = tpu.matmul %388, %68, %cst_117 {dimension_numbers = #tpu.dot_dimension_numbers<[1], [0], [0], [1], [0, 0, 1, 1], [], []>} : vector<2x32xf32>, vector<32x128xf32>, vector<2x128xf32> -> vector<2x128xf32>
    %416 = arith.addf %414, %415 : vector<2x128xf32>
    %417 = vector.extract_strided_slice %73 {offsets = [2, 128], sizes = [2, 128], strides = [1, 1]} : vector<16x256xf32> to vector<2x128xf32>
    %cst_118 = arith.constant dense<0.000000e+00> : vector<2x128xf32>
    %418 = tpu.matmul %413, %69, %cst_118 {dimension_numbers = #tpu.dot_dimension_numbers<[1], [0], [0], [1], [0, 0, 1, 1], [], []>} : vector<2x32xf32>, vector<32x128xf32>, vector<2x128xf32> -> vector<2x128xf32>
    %419 = arith.addf %417, %418 : vector<2x128xf32>
    %420 = vector.extract_strided_slice %416 {offsets = [0, 0], sizes = [2, 32], strides = [1, 1]} : vector<2x128xf32> to vector<2x32xf32>
    %421 = arith.negf %420 : vector<2x32xf32>
    %422 = math.exp %421 : vector<2x32xf32>
    %cst_119 = arith.constant 1.000000e+00 : f32
    %423 = vector.broadcast %cst_119 : f32 to vector<2x32xf32>
    %424 = arith.addf %423, %422 : vector<2x32xf32>
    %425 = arith.divf %423, %424 : vector<2x32xf32>
    %426 = vector.extract_strided_slice %416 {offsets = [0, 32], sizes = [2, 32], strides = [1, 1]} : vector<2x128xf32> to vector<2x32xf32>
    %427 = arith.negf %426 : vector<2x32xf32>
    %428 = math.exp %427 : vector<2x32xf32>
    %cst_120 = arith.constant 1.000000e+00 : f32
    %429 = vector.broadcast %cst_120 : f32 to vector<2x32xf32>
    %430 = arith.addf %429, %428 : vector<2x32xf32>
    %431 = arith.divf %429, %430 : vector<2x32xf32>
    %432 = vector.extract_strided_slice %416 {offsets = [0, 64], sizes = [2, 32], strides = [1, 1]} : vector<2x128xf32> to vector<2x32xf32>
    %433 = math.tanh %432 : vector<2x32xf32>
    %434 = vector.extract_strided_slice %416 {offsets = [0, 96], sizes = [2, 32], strides = [1, 1]} : vector<2x128xf32> to vector<2x32xf32>
    %435 = arith.negf %434 : vector<2x32xf32>
    %436 = math.exp %435 : vector<2x32xf32>
    %cst_121 = arith.constant 1.000000e+00 : f32
    %437 = vector.broadcast %cst_121 : f32 to vector<2x32xf32>
    %438 = arith.addf %437, %436 : vector<2x32xf32>
    %439 = arith.divf %437, %438 : vector<2x32xf32>
    %440 = arith.mulf %431, %386 : vector<2x32xf32>
    %441 = arith.mulf %425, %433 : vector<2x32xf32>
    %442 = arith.addf %440, %441 : vector<2x32xf32>
    %443 = math.tanh %442 : vector<2x32xf32>
    %444 = arith.mulf %439, %443 : vector<2x32xf32>
    %445 = vector.extract_strided_slice %419 {offsets = [0, 0], sizes = [2, 32], strides = [1, 1]} : vector<2x128xf32> to vector<2x32xf32>
    %446 = arith.negf %445 : vector<2x32xf32>
    %447 = math.exp %446 : vector<2x32xf32>
    %cst_122 = arith.constant 1.000000e+00 : f32
    %448 = vector.broadcast %cst_122 : f32 to vector<2x32xf32>
    %449 = arith.addf %448, %447 : vector<2x32xf32>
    %450 = arith.divf %448, %449 : vector<2x32xf32>
    %451 = vector.extract_strided_slice %419 {offsets = [0, 32], sizes = [2, 32], strides = [1, 1]} : vector<2x128xf32> to vector<2x32xf32>
    %452 = arith.negf %451 : vector<2x32xf32>
    %453 = math.exp %452 : vector<2x32xf32>
    %cst_123 = arith.constant 1.000000e+00 : f32
    %454 = vector.broadcast %cst_123 : f32 to vector<2x32xf32>
    %455 = arith.addf %454, %453 : vector<2x32xf32>
    %456 = arith.divf %454, %455 : vector<2x32xf32>
    %457 = vector.extract_strided_slice %419 {offsets = [0, 64], sizes = [2, 32], strides = [1, 1]} : vector<2x128xf32> to vector<2x32xf32>
    %458 = math.tanh %457 : vector<2x32xf32>
    %459 = vector.extract_strided_slice %419 {offsets = [0, 96], sizes = [2, 32], strides = [1, 1]} : vector<2x128xf32> to vector<2x32xf32>
    %460 = arith.negf %459 : vector<2x32xf32>
    %461 = math.exp %460 : vector<2x32xf32>
    %cst_124 = arith.constant 1.000000e+00 : f32
    %462 = vector.broadcast %cst_124 : f32 to vector<2x32xf32>
    %463 = arith.addf %462, %461 : vector<2x32xf32>
    %464 = arith.divf %462, %463 : vector<2x32xf32>
    %465 = arith.mulf %456, %411 : vector<2x32xf32>
    %466 = arith.mulf %450, %458 : vector<2x32xf32>
    %467 = arith.addf %465, %466 : vector<2x32xf32>
    %468 = math.tanh %467 : vector<2x32xf32>
    %469 = arith.mulf %464, %468 : vector<2x32xf32>
    %470 = vector.extract_strided_slice %73 {offsets = [14, 0], sizes = [2, 128], strides = [1, 1]} : vector<16x256xf32> to vector<2x128xf32>
    %cst_125 = arith.constant dense<0.000000e+00> : vector<2x128xf32>
    %471 = tpu.matmul %444, %68, %cst_125 {dimension_numbers = #tpu.dot_dimension_numbers<[1], [0], [0], [1], [0, 0, 1, 1], [], []>} : vector<2x32xf32>, vector<32x128xf32>, vector<2x128xf32> -> vector<2x128xf32>
    %472 = arith.addf %470, %471 : vector<2x128xf32>
    %473 = vector.extract_strided_slice %73 {offsets = [0, 128], sizes = [2, 128], strides = [1, 1]} : vector<16x256xf32> to vector<2x128xf32>
    %cst_126 = arith.constant dense<0.000000e+00> : vector<2x128xf32>
    %474 = tpu.matmul %469, %69, %cst_126 {dimension_numbers = #tpu.dot_dimension_numbers<[1], [0], [0], [1], [0, 0, 1, 1], [], []>} : vector<2x32xf32>, vector<32x128xf32>, vector<2x128xf32> -> vector<2x128xf32>
    %475 = arith.addf %473, %474 : vector<2x128xf32>
    %476 = vector.extract_strided_slice %472 {offsets = [0, 0], sizes = [2, 32], strides = [1, 1]} : vector<2x128xf32> to vector<2x32xf32>
    %477 = arith.negf %476 : vector<2x32xf32>
    %478 = math.exp %477 : vector<2x32xf32>
    %cst_127 = arith.constant 1.000000e+00 : f32
    %479 = vector.broadcast %cst_127 : f32 to vector<2x32xf32>
    %480 = arith.addf %479, %478 : vector<2x32xf32>
    %481 = arith.divf %479, %480 : vector<2x32xf32>
    %482 = vector.extract_strided_slice %472 {offsets = [0, 32], sizes = [2, 32], strides = [1, 1]} : vector<2x128xf32> to vector<2x32xf32>
    %483 = arith.negf %482 : vector<2x32xf32>
    %484 = math.exp %483 : vector<2x32xf32>
    %cst_128 = arith.constant 1.000000e+00 : f32
    %485 = vector.broadcast %cst_128 : f32 to vector<2x32xf32>
    %486 = arith.addf %485, %484 : vector<2x32xf32>
    %487 = arith.divf %485, %486 : vector<2x32xf32>
    %488 = vector.extract_strided_slice %472 {offsets = [0, 64], sizes = [2, 32], strides = [1, 1]} : vector<2x128xf32> to vector<2x32xf32>
    %489 = math.tanh %488 : vector<2x32xf32>
    %490 = vector.extract_strided_slice %472 {offsets = [0, 96], sizes = [2, 32], strides = [1, 1]} : vector<2x128xf32> to vector<2x32xf32>
    %491 = arith.negf %490 : vector<2x32xf32>
    %492 = math.exp %491 : vector<2x32xf32>
    %cst_129 = arith.constant 1.000000e+00 : f32
    %493 = vector.broadcast %cst_129 : f32 to vector<2x32xf32>
    %494 = arith.addf %493, %492 : vector<2x32xf32>
    %495 = arith.divf %493, %494 : vector<2x32xf32>
    %496 = arith.mulf %487, %442 : vector<2x32xf32>
    %497 = arith.mulf %481, %489 : vector<2x32xf32>
    %498 = arith.addf %496, %497 : vector<2x32xf32>
    %499 = math.tanh %498 : vector<2x32xf32>
    %500 = arith.mulf %495, %499 : vector<2x32xf32>
    %501 = vector.extract_strided_slice %475 {offsets = [0, 0], sizes = [2, 32], strides = [1, 1]} : vector<2x128xf32> to vector<2x32xf32>
    %502 = arith.negf %501 : vector<2x32xf32>
    %503 = math.exp %502 : vector<2x32xf32>
    %cst_130 = arith.constant 1.000000e+00 : f32
    %504 = vector.broadcast %cst_130 : f32 to vector<2x32xf32>
    %505 = arith.addf %504, %503 : vector<2x32xf32>
    %506 = arith.divf %504, %505 : vector<2x32xf32>
    %507 = vector.extract_strided_slice %475 {offsets = [0, 32], sizes = [2, 32], strides = [1, 1]} : vector<2x128xf32> to vector<2x32xf32>
    %508 = arith.negf %507 : vector<2x32xf32>
    %509 = math.exp %508 : vector<2x32xf32>
    %cst_131 = arith.constant 1.000000e+00 : f32
    %510 = vector.broadcast %cst_131 : f32 to vector<2x32xf32>
    %511 = arith.addf %510, %509 : vector<2x32xf32>
    %512 = arith.divf %510, %511 : vector<2x32xf32>
    %513 = vector.extract_strided_slice %475 {offsets = [0, 64], sizes = [2, 32], strides = [1, 1]} : vector<2x128xf32> to vector<2x32xf32>
    %514 = math.tanh %513 : vector<2x32xf32>
    %515 = vector.extract_strided_slice %475 {offsets = [0, 96], sizes = [2, 32], strides = [1, 1]} : vector<2x128xf32> to vector<2x32xf32>
    %516 = arith.negf %515 : vector<2x32xf32>
    %517 = math.exp %516 : vector<2x32xf32>
    %cst_132 = arith.constant 1.000000e+00 : f32
    %518 = vector.broadcast %cst_132 : f32 to vector<2x32xf32>
    %519 = arith.addf %518, %517 : vector<2x32xf32>
    %520 = arith.divf %518, %519 : vector<2x32xf32>
    %521 = arith.mulf %512, %467 : vector<2x32xf32>
    %522 = arith.mulf %506, %514 : vector<2x32xf32>
    %523 = arith.addf %521, %522 : vector<2x32xf32>
    %524 = math.tanh %523 : vector<2x32xf32>
    %525 = arith.mulf %520, %524 : vector<2x32xf32>
    %526 = tpu.concatenate %108, %525 in 1 : vector<2x32xf32>, vector<2x32xf32> -> vector<2x64xf32>
    %527 = tpu.concatenate %164, %469 in 1 : vector<2x32xf32>, vector<2x32xf32> -> vector<2x64xf32>
    %528 = tpu.concatenate %220, %413 in 1 : vector<2x32xf32>, vector<2x32xf32> -> vector<2x64xf32>
    %529 = tpu.concatenate %276, %357 in 1 : vector<2x32xf32>, vector<2x32xf32> -> vector<2x64xf32>
    %530 = tpu.concatenate %332, %301 in 1 : vector<2x32xf32>, vector<2x32xf32> -> vector<2x64xf32>
    %531 = tpu.concatenate %388, %245 in 1 : vector<2x32xf32>, vector<2x32xf32> -> vector<2x64xf32>
    %532 = tpu.concatenate %444, %189 in 1 : vector<2x32xf32>, vector<2x32xf32> -> vector<2x64xf32>
    %533 = tpu.concatenate %500, %133 in 1 : vector<2x32xf32>, vector<2x32xf32> -> vector<2x64xf32>
    %534 = tpu.concatenate %526, %527, %528, %529, %530, %531, %532, %533 in 0 : vector<2x64xf32>, vector<2x64xf32>, vector<2x64xf32>, vector<2x64xf32>, vector<2x64xf32>, vector<2x64xf32>, vector<2x64xf32>, vector<2x64xf32> -> vector<16x64xf32>
    %c0_133 = arith.constant 0 : index
    %c0_134 = arith.constant 0 : index
    %535 = vector.load %arg7[%c0_133, %c0_134] : memref<64x256xf32, #tpu.memory_space<vmem>>, vector<64x256xf32>
    %c0_135 = arith.constant 0 : index
    %c0_136 = arith.constant 0 : index
    %536 = vector.load %arg8[%c0_135, %c0_136] : memref<32x128xf32, #tpu.memory_space<vmem>>, vector<32x128xf32>
    %c0_137 = arith.constant 0 : index
    %c0_138 = arith.constant 0 : index
    %537 = vector.load %arg9[%c0_137, %c0_138] : memref<32x128xf32, #tpu.memory_space<vmem>>, vector<32x128xf32>
    %c0_139 = arith.constant 0 : index
    %c0_140 = arith.constant 0 : index
    %538 = vector.load %arg10[%c0_139, %c0_140] : memref<1x256xf32, #tpu.memory_space<vmem>>, vector<1x256xf32>
    %cst_141 = arith.constant dense<0.000000e+00> : vector<16x256xf32>
    %539 = tpu.matmul %534, %535, %cst_141 {dimension_numbers = #tpu.dot_dimension_numbers<[1], [0], [0], [1], [0, 0, 1, 1], [], []>} : vector<16x64xf32>, vector<64x256xf32>, vector<16x256xf32> -> vector<16x256xf32>
    %540 = vector.broadcast %538 : vector<1x256xf32> to vector<16x256xf32>
    %541 = arith.addf %539, %540 : vector<16x256xf32>
    %cst_142 = arith.constant 0.000000e+00 : f32
    %542 = vector.broadcast %cst_142 : f32 to vector<2x32xf32>
    %cst_143 = arith.constant 0.000000e+00 : f32
    %543 = vector.broadcast %cst_143 : f32 to vector<2x32xf32>
    %cst_144 = arith.constant 0.000000e+00 : f32
    %544 = vector.broadcast %cst_144 : f32 to vector<2x32xf32>
    %cst_145 = arith.constant 0.000000e+00 : f32
    %545 = vector.broadcast %cst_145 : f32 to vector<2x32xf32>
    %546 = vector.extract_strided_slice %541 {offsets = [0, 0], sizes = [2, 128], strides = [1, 1]} : vector<16x256xf32> to vector<2x128xf32>
    %cst_146 = arith.constant dense<0.000000e+00> : vector<2x128xf32>
    %547 = tpu.matmul %542, %536, %cst_146 {dimension_numbers = #tpu.dot_dimension_numbers<[1], [0], [0], [1], [0, 0, 1, 1], [], []>} : vector<2x32xf32>, vector<32x128xf32>, vector<2x128xf32> -> vector<2x128xf32>
    %548 = arith.addf %546, %547 : vector<2x128xf32>
    %549 = vector.extract_strided_slice %541 {offsets = [14, 128], sizes = [2, 128], strides = [1, 1]} : vector<16x256xf32> to vector<2x128xf32>
    %cst_147 = arith.constant dense<0.000000e+00> : vector<2x128xf32>
    %550 = tpu.matmul %544, %537, %cst_147 {dimension_numbers = #tpu.dot_dimension_numbers<[1], [0], [0], [1], [0, 0, 1, 1], [], []>} : vector<2x32xf32>, vector<32x128xf32>, vector<2x128xf32> -> vector<2x128xf32>
    %551 = arith.addf %549, %550 : vector<2x128xf32>
    %552 = vector.extract_strided_slice %548 {offsets = [0, 0], sizes = [2, 32], strides = [1, 1]} : vector<2x128xf32> to vector<2x32xf32>
    %553 = arith.negf %552 : vector<2x32xf32>
    %554 = math.exp %553 : vector<2x32xf32>
    %cst_148 = arith.constant 1.000000e+00 : f32
    %555 = vector.broadcast %cst_148 : f32 to vector<2x32xf32>
    %556 = arith.addf %555, %554 : vector<2x32xf32>
    %557 = arith.divf %555, %556 : vector<2x32xf32>
    %558 = vector.extract_strided_slice %548 {offsets = [0, 32], sizes = [2, 32], strides = [1, 1]} : vector<2x128xf32> to vector<2x32xf32>
    %559 = arith.negf %558 : vector<2x32xf32>
    %560 = math.exp %559 : vector<2x32xf32>
    %cst_149 = arith.constant 1.000000e+00 : f32
    %561 = vector.broadcast %cst_149 : f32 to vector<2x32xf32>
    %562 = arith.addf %561, %560 : vector<2x32xf32>
    %563 = arith.divf %561, %562 : vector<2x32xf32>
    %564 = vector.extract_strided_slice %548 {offsets = [0, 64], sizes = [2, 32], strides = [1, 1]} : vector<2x128xf32> to vector<2x32xf32>
    %565 = math.tanh %564 : vector<2x32xf32>
    %566 = vector.extract_strided_slice %548 {offsets = [0, 96], sizes = [2, 32], strides = [1, 1]} : vector<2x128xf32> to vector<2x32xf32>
    %567 = arith.negf %566 : vector<2x32xf32>
    %568 = math.exp %567 : vector<2x32xf32>
    %cst_150 = arith.constant 1.000000e+00 : f32
    %569 = vector.broadcast %cst_150 : f32 to vector<2x32xf32>
    %570 = arith.addf %569, %568 : vector<2x32xf32>
    %571 = arith.divf %569, %570 : vector<2x32xf32>
    %572 = arith.mulf %563, %543 : vector<2x32xf32>
    %573 = arith.mulf %557, %565 : vector<2x32xf32>
    %574 = arith.addf %572, %573 : vector<2x32xf32>
    %575 = math.tanh %574 : vector<2x32xf32>
    %576 = arith.mulf %571, %575 : vector<2x32xf32>
    %577 = vector.extract_strided_slice %551 {offsets = [0, 0], sizes = [2, 32], strides = [1, 1]} : vector<2x128xf32> to vector<2x32xf32>
    %578 = arith.negf %577 : vector<2x32xf32>
    %579 = math.exp %578 : vector<2x32xf32>
    %cst_151 = arith.constant 1.000000e+00 : f32
    %580 = vector.broadcast %cst_151 : f32 to vector<2x32xf32>
    %581 = arith.addf %580, %579 : vector<2x32xf32>
    %582 = arith.divf %580, %581 : vector<2x32xf32>
    %583 = vector.extract_strided_slice %551 {offsets = [0, 32], sizes = [2, 32], strides = [1, 1]} : vector<2x128xf32> to vector<2x32xf32>
    %584 = arith.negf %583 : vector<2x32xf32>
    %585 = math.exp %584 : vector<2x32xf32>
    %cst_152 = arith.constant 1.000000e+00 : f32
    %586 = vector.broadcast %cst_152 : f32 to vector<2x32xf32>
    %587 = arith.addf %586, %585 : vector<2x32xf32>
    %588 = arith.divf %586, %587 : vector<2x32xf32>
    %589 = vector.extract_strided_slice %551 {offsets = [0, 64], sizes = [2, 32], strides = [1, 1]} : vector<2x128xf32> to vector<2x32xf32>
    %590 = math.tanh %589 : vector<2x32xf32>
    %591 = vector.extract_strided_slice %551 {offsets = [0, 96], sizes = [2, 32], strides = [1, 1]} : vector<2x128xf32> to vector<2x32xf32>
    %592 = arith.negf %591 : vector<2x32xf32>
    %593 = math.exp %592 : vector<2x32xf32>
    %cst_153 = arith.constant 1.000000e+00 : f32
    %594 = vector.broadcast %cst_153 : f32 to vector<2x32xf32>
    %595 = arith.addf %594, %593 : vector<2x32xf32>
    %596 = arith.divf %594, %595 : vector<2x32xf32>
    %597 = arith.mulf %588, %545 : vector<2x32xf32>
    %598 = arith.mulf %582, %590 : vector<2x32xf32>
    %599 = arith.addf %597, %598 : vector<2x32xf32>
    %600 = math.tanh %599 : vector<2x32xf32>
    %601 = arith.mulf %596, %600 : vector<2x32xf32>
    %602 = vector.extract_strided_slice %541 {offsets = [2, 0], sizes = [2, 128], strides = [1, 1]} : vector<16x256xf32> to vector<2x128xf32>
    %cst_154 = arith.constant dense<0.000000e+00> : vector<2x128xf32>
    %603 = tpu.matmul %576, %536, %cst_154 {dimension_numbers = #tpu.dot_dimension_numbers<[1], [0], [0], [1], [0, 0, 1, 1], [], []>} : vector<2x32xf32>, vector<32x128xf32>, vector<2x128xf32> -> vector<2x128xf32>
    %604 = arith.addf %602, %603 : vector<2x128xf32>
    %605 = vector.extract_strided_slice %541 {offsets = [12, 128], sizes = [2, 128], strides = [1, 1]} : vector<16x256xf32> to vector<2x128xf32>
    %cst_155 = arith.constant dense<0.000000e+00> : vector<2x128xf32>
    %606 = tpu.matmul %601, %537, %cst_155 {dimension_numbers = #tpu.dot_dimension_numbers<[1], [0], [0], [1], [0, 0, 1, 1], [], []>} : vector<2x32xf32>, vector<32x128xf32>, vector<2x128xf32> -> vector<2x128xf32>
    %607 = arith.addf %605, %606 : vector<2x128xf32>
    %608 = vector.extract_strided_slice %604 {offsets = [0, 0], sizes = [2, 32], strides = [1, 1]} : vector<2x128xf32> to vector<2x32xf32>
    %609 = arith.negf %608 : vector<2x32xf32>
    %610 = math.exp %609 : vector<2x32xf32>
    %cst_156 = arith.constant 1.000000e+00 : f32
    %611 = vector.broadcast %cst_156 : f32 to vector<2x32xf32>
    %612 = arith.addf %611, %610 : vector<2x32xf32>
    %613 = arith.divf %611, %612 : vector<2x32xf32>
    %614 = vector.extract_strided_slice %604 {offsets = [0, 32], sizes = [2, 32], strides = [1, 1]} : vector<2x128xf32> to vector<2x32xf32>
    %615 = arith.negf %614 : vector<2x32xf32>
    %616 = math.exp %615 : vector<2x32xf32>
    %cst_157 = arith.constant 1.000000e+00 : f32
    %617 = vector.broadcast %cst_157 : f32 to vector<2x32xf32>
    %618 = arith.addf %617, %616 : vector<2x32xf32>
    %619 = arith.divf %617, %618 : vector<2x32xf32>
    %620 = vector.extract_strided_slice %604 {offsets = [0, 64], sizes = [2, 32], strides = [1, 1]} : vector<2x128xf32> to vector<2x32xf32>
    %621 = math.tanh %620 : vector<2x32xf32>
    %622 = vector.extract_strided_slice %604 {offsets = [0, 96], sizes = [2, 32], strides = [1, 1]} : vector<2x128xf32> to vector<2x32xf32>
    %623 = arith.negf %622 : vector<2x32xf32>
    %624 = math.exp %623 : vector<2x32xf32>
    %cst_158 = arith.constant 1.000000e+00 : f32
    %625 = vector.broadcast %cst_158 : f32 to vector<2x32xf32>
    %626 = arith.addf %625, %624 : vector<2x32xf32>
    %627 = arith.divf %625, %626 : vector<2x32xf32>
    %628 = arith.mulf %619, %574 : vector<2x32xf32>
    %629 = arith.mulf %613, %621 : vector<2x32xf32>
    %630 = arith.addf %628, %629 : vector<2x32xf32>
    %631 = math.tanh %630 : vector<2x32xf32>
    %632 = arith.mulf %627, %631 : vector<2x32xf32>
    %633 = vector.extract_strided_slice %607 {offsets = [0, 0], sizes = [2, 32], strides = [1, 1]} : vector<2x128xf32> to vector<2x32xf32>
    %634 = arith.negf %633 : vector<2x32xf32>
    %635 = math.exp %634 : vector<2x32xf32>
    %cst_159 = arith.constant 1.000000e+00 : f32
    %636 = vector.broadcast %cst_159 : f32 to vector<2x32xf32>
    %637 = arith.addf %636, %635 : vector<2x32xf32>
    %638 = arith.divf %636, %637 : vector<2x32xf32>
    %639 = vector.extract_strided_slice %607 {offsets = [0, 32], sizes = [2, 32], strides = [1, 1]} : vector<2x128xf32> to vector<2x32xf32>
    %640 = arith.negf %639 : vector<2x32xf32>
    %641 = math.exp %640 : vector<2x32xf32>
    %cst_160 = arith.constant 1.000000e+00 : f32
    %642 = vector.broadcast %cst_160 : f32 to vector<2x32xf32>
    %643 = arith.addf %642, %641 : vector<2x32xf32>
    %644 = arith.divf %642, %643 : vector<2x32xf32>
    %645 = vector.extract_strided_slice %607 {offsets = [0, 64], sizes = [2, 32], strides = [1, 1]} : vector<2x128xf32> to vector<2x32xf32>
    %646 = math.tanh %645 : vector<2x32xf32>
    %647 = vector.extract_strided_slice %607 {offsets = [0, 96], sizes = [2, 32], strides = [1, 1]} : vector<2x128xf32> to vector<2x32xf32>
    %648 = arith.negf %647 : vector<2x32xf32>
    %649 = math.exp %648 : vector<2x32xf32>
    %cst_161 = arith.constant 1.000000e+00 : f32
    %650 = vector.broadcast %cst_161 : f32 to vector<2x32xf32>
    %651 = arith.addf %650, %649 : vector<2x32xf32>
    %652 = arith.divf %650, %651 : vector<2x32xf32>
    %653 = arith.mulf %644, %599 : vector<2x32xf32>
    %654 = arith.mulf %638, %646 : vector<2x32xf32>
    %655 = arith.addf %653, %654 : vector<2x32xf32>
    %656 = math.tanh %655 : vector<2x32xf32>
    %657 = arith.mulf %652, %656 : vector<2x32xf32>
    %658 = vector.extract_strided_slice %541 {offsets = [4, 0], sizes = [2, 128], strides = [1, 1]} : vector<16x256xf32> to vector<2x128xf32>
    %cst_162 = arith.constant dense<0.000000e+00> : vector<2x128xf32>
    %659 = tpu.matmul %632, %536, %cst_162 {dimension_numbers = #tpu.dot_dimension_numbers<[1], [0], [0], [1], [0, 0, 1, 1], [], []>} : vector<2x32xf32>, vector<32x128xf32>, vector<2x128xf32> -> vector<2x128xf32>
    %660 = arith.addf %658, %659 : vector<2x128xf32>
    %661 = vector.extract_strided_slice %541 {offsets = [10, 128], sizes = [2, 128], strides = [1, 1]} : vector<16x256xf32> to vector<2x128xf32>
    %cst_163 = arith.constant dense<0.000000e+00> : vector<2x128xf32>
    %662 = tpu.matmul %657, %537, %cst_163 {dimension_numbers = #tpu.dot_dimension_numbers<[1], [0], [0], [1], [0, 0, 1, 1], [], []>} : vector<2x32xf32>, vector<32x128xf32>, vector<2x128xf32> -> vector<2x128xf32>
    %663 = arith.addf %661, %662 : vector<2x128xf32>
    %664 = vector.extract_strided_slice %660 {offsets = [0, 0], sizes = [2, 32], strides = [1, 1]} : vector<2x128xf32> to vector<2x32xf32>
    %665 = arith.negf %664 : vector<2x32xf32>
    %666 = math.exp %665 : vector<2x32xf32>
    %cst_164 = arith.constant 1.000000e+00 : f32
    %667 = vector.broadcast %cst_164 : f32 to vector<2x32xf32>
    %668 = arith.addf %667, %666 : vector<2x32xf32>
    %669 = arith.divf %667, %668 : vector<2x32xf32>
    %670 = vector.extract_strided_slice %660 {offsets = [0, 32], sizes = [2, 32], strides = [1, 1]} : vector<2x128xf32> to vector<2x32xf32>
    %671 = arith.negf %670 : vector<2x32xf32>
    %672 = math.exp %671 : vector<2x32xf32>
    %cst_165 = arith.constant 1.000000e+00 : f32
    %673 = vector.broadcast %cst_165 : f32 to vector<2x32xf32>
    %674 = arith.addf %673, %672 : vector<2x32xf32>
    %675 = arith.divf %673, %674 : vector<2x32xf32>
    %676 = vector.extract_strided_slice %660 {offsets = [0, 64], sizes = [2, 32], strides = [1, 1]} : vector<2x128xf32> to vector<2x32xf32>
    %677 = math.tanh %676 : vector<2x32xf32>
    %678 = vector.extract_strided_slice %660 {offsets = [0, 96], sizes = [2, 32], strides = [1, 1]} : vector<2x128xf32> to vector<2x32xf32>
    %679 = arith.negf %678 : vector<2x32xf32>
    %680 = math.exp %679 : vector<2x32xf32>
    %cst_166 = arith.constant 1.000000e+00 : f32
    %681 = vector.broadcast %cst_166 : f32 to vector<2x32xf32>
    %682 = arith.addf %681, %680 : vector<2x32xf32>
    %683 = arith.divf %681, %682 : vector<2x32xf32>
    %684 = arith.mulf %675, %630 : vector<2x32xf32>
    %685 = arith.mulf %669, %677 : vector<2x32xf32>
    %686 = arith.addf %684, %685 : vector<2x32xf32>
    %687 = math.tanh %686 : vector<2x32xf32>
    %688 = arith.mulf %683, %687 : vector<2x32xf32>
    %689 = vector.extract_strided_slice %663 {offsets = [0, 0], sizes = [2, 32], strides = [1, 1]} : vector<2x128xf32> to vector<2x32xf32>
    %690 = arith.negf %689 : vector<2x32xf32>
    %691 = math.exp %690 : vector<2x32xf32>
    %cst_167 = arith.constant 1.000000e+00 : f32
    %692 = vector.broadcast %cst_167 : f32 to vector<2x32xf32>
    %693 = arith.addf %692, %691 : vector<2x32xf32>
    %694 = arith.divf %692, %693 : vector<2x32xf32>
    %695 = vector.extract_strided_slice %663 {offsets = [0, 32], sizes = [2, 32], strides = [1, 1]} : vector<2x128xf32> to vector<2x32xf32>
    %696 = arith.negf %695 : vector<2x32xf32>
    %697 = math.exp %696 : vector<2x32xf32>
    %cst_168 = arith.constant 1.000000e+00 : f32
    %698 = vector.broadcast %cst_168 : f32 to vector<2x32xf32>
    %699 = arith.addf %698, %697 : vector<2x32xf32>
    %700 = arith.divf %698, %699 : vector<2x32xf32>
    %701 = vector.extract_strided_slice %663 {offsets = [0, 64], sizes = [2, 32], strides = [1, 1]} : vector<2x128xf32> to vector<2x32xf32>
    %702 = math.tanh %701 : vector<2x32xf32>
    %703 = vector.extract_strided_slice %663 {offsets = [0, 96], sizes = [2, 32], strides = [1, 1]} : vector<2x128xf32> to vector<2x32xf32>
    %704 = arith.negf %703 : vector<2x32xf32>
    %705 = math.exp %704 : vector<2x32xf32>
    %cst_169 = arith.constant 1.000000e+00 : f32
    %706 = vector.broadcast %cst_169 : f32 to vector<2x32xf32>
    %707 = arith.addf %706, %705 : vector<2x32xf32>
    %708 = arith.divf %706, %707 : vector<2x32xf32>
    %709 = arith.mulf %700, %655 : vector<2x32xf32>
    %710 = arith.mulf %694, %702 : vector<2x32xf32>
    %711 = arith.addf %709, %710 : vector<2x32xf32>
    %712 = math.tanh %711 : vector<2x32xf32>
    %713 = arith.mulf %708, %712 : vector<2x32xf32>
    %714 = vector.extract_strided_slice %541 {offsets = [6, 0], sizes = [2, 128], strides = [1, 1]} : vector<16x256xf32> to vector<2x128xf32>
    %cst_170 = arith.constant dense<0.000000e+00> : vector<2x128xf32>
    %715 = tpu.matmul %688, %536, %cst_170 {dimension_numbers = #tpu.dot_dimension_numbers<[1], [0], [0], [1], [0, 0, 1, 1], [], []>} : vector<2x32xf32>, vector<32x128xf32>, vector<2x128xf32> -> vector<2x128xf32>
    %716 = arith.addf %714, %715 : vector<2x128xf32>
    %717 = vector.extract_strided_slice %541 {offsets = [8, 128], sizes = [2, 128], strides = [1, 1]} : vector<16x256xf32> to vector<2x128xf32>
    %cst_171 = arith.constant dense<0.000000e+00> : vector<2x128xf32>
    %718 = tpu.matmul %713, %537, %cst_171 {dimension_numbers = #tpu.dot_dimension_numbers<[1], [0], [0], [1], [0, 0, 1, 1], [], []>} : vector<2x32xf32>, vector<32x128xf32>, vector<2x128xf32> -> vector<2x128xf32>
    %719 = arith.addf %717, %718 : vector<2x128xf32>
    %720 = vector.extract_strided_slice %716 {offsets = [0, 0], sizes = [2, 32], strides = [1, 1]} : vector<2x128xf32> to vector<2x32xf32>
    %721 = arith.negf %720 : vector<2x32xf32>
    %722 = math.exp %721 : vector<2x32xf32>
    %cst_172 = arith.constant 1.000000e+00 : f32
    %723 = vector.broadcast %cst_172 : f32 to vector<2x32xf32>
    %724 = arith.addf %723, %722 : vector<2x32xf32>
    %725 = arith.divf %723, %724 : vector<2x32xf32>
    %726 = vector.extract_strided_slice %716 {offsets = [0, 32], sizes = [2, 32], strides = [1, 1]} : vector<2x128xf32> to vector<2x32xf32>
    %727 = arith.negf %726 : vector<2x32xf32>
    %728 = math.exp %727 : vector<2x32xf32>
    %cst_173 = arith.constant 1.000000e+00 : f32
    %729 = vector.broadcast %cst_173 : f32 to vector<2x32xf32>
    %730 = arith.addf %729, %728 : vector<2x32xf32>
    %731 = arith.divf %729, %730 : vector<2x32xf32>
    %732 = vector.extract_strided_slice %716 {offsets = [0, 64], sizes = [2, 32], strides = [1, 1]} : vector<2x128xf32> to vector<2x32xf32>
    %733 = math.tanh %732 : vector<2x32xf32>
    %734 = vector.extract_strided_slice %716 {offsets = [0, 96], sizes = [2, 32], strides = [1, 1]} : vector<2x128xf32> to vector<2x32xf32>
    %735 = arith.negf %734 : vector<2x32xf32>
    %736 = math.exp %735 : vector<2x32xf32>
    %cst_174 = arith.constant 1.000000e+00 : f32
    %737 = vector.broadcast %cst_174 : f32 to vector<2x32xf32>
    %738 = arith.addf %737, %736 : vector<2x32xf32>
    %739 = arith.divf %737, %738 : vector<2x32xf32>
    %740 = arith.mulf %731, %686 : vector<2x32xf32>
    %741 = arith.mulf %725, %733 : vector<2x32xf32>
    %742 = arith.addf %740, %741 : vector<2x32xf32>
    %743 = math.tanh %742 : vector<2x32xf32>
    %744 = arith.mulf %739, %743 : vector<2x32xf32>
    %745 = vector.extract_strided_slice %719 {offsets = [0, 0], sizes = [2, 32], strides = [1, 1]} : vector<2x128xf32> to vector<2x32xf32>
    %746 = arith.negf %745 : vector<2x32xf32>
    %747 = math.exp %746 : vector<2x32xf32>
    %cst_175 = arith.constant 1.000000e+00 : f32
    %748 = vector.broadcast %cst_175 : f32 to vector<2x32xf32>
    %749 = arith.addf %748, %747 : vector<2x32xf32>
    %750 = arith.divf %748, %749 : vector<2x32xf32>
    %751 = vector.extract_strided_slice %719 {offsets = [0, 32], sizes = [2, 32], strides = [1, 1]} : vector<2x128xf32> to vector<2x32xf32>
    %752 = arith.negf %751 : vector<2x32xf32>
    %753 = math.exp %752 : vector<2x32xf32>
    %cst_176 = arith.constant 1.000000e+00 : f32
    %754 = vector.broadcast %cst_176 : f32 to vector<2x32xf32>
    %755 = arith.addf %754, %753 : vector<2x32xf32>
    %756 = arith.divf %754, %755 : vector<2x32xf32>
    %757 = vector.extract_strided_slice %719 {offsets = [0, 64], sizes = [2, 32], strides = [1, 1]} : vector<2x128xf32> to vector<2x32xf32>
    %758 = math.tanh %757 : vector<2x32xf32>
    %759 = vector.extract_strided_slice %719 {offsets = [0, 96], sizes = [2, 32], strides = [1, 1]} : vector<2x128xf32> to vector<2x32xf32>
    %760 = arith.negf %759 : vector<2x32xf32>
    %761 = math.exp %760 : vector<2x32xf32>
    %cst_177 = arith.constant 1.000000e+00 : f32
    %762 = vector.broadcast %cst_177 : f32 to vector<2x32xf32>
    %763 = arith.addf %762, %761 : vector<2x32xf32>
    %764 = arith.divf %762, %763 : vector<2x32xf32>
    %765 = arith.mulf %756, %711 : vector<2x32xf32>
    %766 = arith.mulf %750, %758 : vector<2x32xf32>
    %767 = arith.addf %765, %766 : vector<2x32xf32>
    %768 = math.tanh %767 : vector<2x32xf32>
    %769 = arith.mulf %764, %768 : vector<2x32xf32>
    %770 = vector.extract_strided_slice %541 {offsets = [8, 0], sizes = [2, 128], strides = [1, 1]} : vector<16x256xf32> to vector<2x128xf32>
    %cst_178 = arith.constant dense<0.000000e+00> : vector<2x128xf32>
    %771 = tpu.matmul %744, %536, %cst_178 {dimension_numbers = #tpu.dot_dimension_numbers<[1], [0], [0], [1], [0, 0, 1, 1], [], []>} : vector<2x32xf32>, vector<32x128xf32>, vector<2x128xf32> -> vector<2x128xf32>
    %772 = arith.addf %770, %771 : vector<2x128xf32>
    %773 = vector.extract_strided_slice %541 {offsets = [6, 128], sizes = [2, 128], strides = [1, 1]} : vector<16x256xf32> to vector<2x128xf32>
    %cst_179 = arith.constant dense<0.000000e+00> : vector<2x128xf32>
    %774 = tpu.matmul %769, %537, %cst_179 {dimension_numbers = #tpu.dot_dimension_numbers<[1], [0], [0], [1], [0, 0, 1, 1], [], []>} : vector<2x32xf32>, vector<32x128xf32>, vector<2x128xf32> -> vector<2x128xf32>
    %775 = arith.addf %773, %774 : vector<2x128xf32>
    %776 = vector.extract_strided_slice %772 {offsets = [0, 0], sizes = [2, 32], strides = [1, 1]} : vector<2x128xf32> to vector<2x32xf32>
    %777 = arith.negf %776 : vector<2x32xf32>
    %778 = math.exp %777 : vector<2x32xf32>
    %cst_180 = arith.constant 1.000000e+00 : f32
    %779 = vector.broadcast %cst_180 : f32 to vector<2x32xf32>
    %780 = arith.addf %779, %778 : vector<2x32xf32>
    %781 = arith.divf %779, %780 : vector<2x32xf32>
    %782 = vector.extract_strided_slice %772 {offsets = [0, 32], sizes = [2, 32], strides = [1, 1]} : vector<2x128xf32> to vector<2x32xf32>
    %783 = arith.negf %782 : vector<2x32xf32>
    %784 = math.exp %783 : vector<2x32xf32>
    %cst_181 = arith.constant 1.000000e+00 : f32
    %785 = vector.broadcast %cst_181 : f32 to vector<2x32xf32>
    %786 = arith.addf %785, %784 : vector<2x32xf32>
    %787 = arith.divf %785, %786 : vector<2x32xf32>
    %788 = vector.extract_strided_slice %772 {offsets = [0, 64], sizes = [2, 32], strides = [1, 1]} : vector<2x128xf32> to vector<2x32xf32>
    %789 = math.tanh %788 : vector<2x32xf32>
    %790 = vector.extract_strided_slice %772 {offsets = [0, 96], sizes = [2, 32], strides = [1, 1]} : vector<2x128xf32> to vector<2x32xf32>
    %791 = arith.negf %790 : vector<2x32xf32>
    %792 = math.exp %791 : vector<2x32xf32>
    %cst_182 = arith.constant 1.000000e+00 : f32
    %793 = vector.broadcast %cst_182 : f32 to vector<2x32xf32>
    %794 = arith.addf %793, %792 : vector<2x32xf32>
    %795 = arith.divf %793, %794 : vector<2x32xf32>
    %796 = arith.mulf %787, %742 : vector<2x32xf32>
    %797 = arith.mulf %781, %789 : vector<2x32xf32>
    %798 = arith.addf %796, %797 : vector<2x32xf32>
    %799 = math.tanh %798 : vector<2x32xf32>
    %800 = arith.mulf %795, %799 : vector<2x32xf32>
    %801 = vector.extract_strided_slice %775 {offsets = [0, 0], sizes = [2, 32], strides = [1, 1]} : vector<2x128xf32> to vector<2x32xf32>
    %802 = arith.negf %801 : vector<2x32xf32>
    %803 = math.exp %802 : vector<2x32xf32>
    %cst_183 = arith.constant 1.000000e+00 : f32
    %804 = vector.broadcast %cst_183 : f32 to vector<2x32xf32>
    %805 = arith.addf %804, %803 : vector<2x32xf32>
    %806 = arith.divf %804, %805 : vector<2x32xf32>
    %807 = vector.extract_strided_slice %775 {offsets = [0, 32], sizes = [2, 32], strides = [1, 1]} : vector<2x128xf32> to vector<2x32xf32>
    %808 = arith.negf %807 : vector<2x32xf32>
    %809 = math.exp %808 : vector<2x32xf32>
    %cst_184 = arith.constant 1.000000e+00 : f32
    %810 = vector.broadcast %cst_184 : f32 to vector<2x32xf32>
    %811 = arith.addf %810, %809 : vector<2x32xf32>
    %812 = arith.divf %810, %811 : vector<2x32xf32>
    %813 = vector.extract_strided_slice %775 {offsets = [0, 64], sizes = [2, 32], strides = [1, 1]} : vector<2x128xf32> to vector<2x32xf32>
    %814 = math.tanh %813 : vector<2x32xf32>
    %815 = vector.extract_strided_slice %775 {offsets = [0, 96], sizes = [2, 32], strides = [1, 1]} : vector<2x128xf32> to vector<2x32xf32>
    %816 = arith.negf %815 : vector<2x32xf32>
    %817 = math.exp %816 : vector<2x32xf32>
    %cst_185 = arith.constant 1.000000e+00 : f32
    %818 = vector.broadcast %cst_185 : f32 to vector<2x32xf32>
    %819 = arith.addf %818, %817 : vector<2x32xf32>
    %820 = arith.divf %818, %819 : vector<2x32xf32>
    %821 = arith.mulf %812, %767 : vector<2x32xf32>
    %822 = arith.mulf %806, %814 : vector<2x32xf32>
    %823 = arith.addf %821, %822 : vector<2x32xf32>
    %824 = math.tanh %823 : vector<2x32xf32>
    %825 = arith.mulf %820, %824 : vector<2x32xf32>
    %826 = vector.extract_strided_slice %541 {offsets = [10, 0], sizes = [2, 128], strides = [1, 1]} : vector<16x256xf32> to vector<2x128xf32>
    %cst_186 = arith.constant dense<0.000000e+00> : vector<2x128xf32>
    %827 = tpu.matmul %800, %536, %cst_186 {dimension_numbers = #tpu.dot_dimension_numbers<[1], [0], [0], [1], [0, 0, 1, 1], [], []>} : vector<2x32xf32>, vector<32x128xf32>, vector<2x128xf32> -> vector<2x128xf32>
    %828 = arith.addf %826, %827 : vector<2x128xf32>
    %829 = vector.extract_strided_slice %541 {offsets = [4, 128], sizes = [2, 128], strides = [1, 1]} : vector<16x256xf32> to vector<2x128xf32>
    %cst_187 = arith.constant dense<0.000000e+00> : vector<2x128xf32>
    %830 = tpu.matmul %825, %537, %cst_187 {dimension_numbers = #tpu.dot_dimension_numbers<[1], [0], [0], [1], [0, 0, 1, 1], [], []>} : vector<2x32xf32>, vector<32x128xf32>, vector<2x128xf32> -> vector<2x128xf32>
    %831 = arith.addf %829, %830 : vector<2x128xf32>
    %832 = vector.extract_strided_slice %828 {offsets = [0, 0], sizes = [2, 32], strides = [1, 1]} : vector<2x128xf32> to vector<2x32xf32>
    %833 = arith.negf %832 : vector<2x32xf32>
    %834 = math.exp %833 : vector<2x32xf32>
    %cst_188 = arith.constant 1.000000e+00 : f32
    %835 = vector.broadcast %cst_188 : f32 to vector<2x32xf32>
    %836 = arith.addf %835, %834 : vector<2x32xf32>
    %837 = arith.divf %835, %836 : vector<2x32xf32>
    %838 = vector.extract_strided_slice %828 {offsets = [0, 32], sizes = [2, 32], strides = [1, 1]} : vector<2x128xf32> to vector<2x32xf32>
    %839 = arith.negf %838 : vector<2x32xf32>
    %840 = math.exp %839 : vector<2x32xf32>
    %cst_189 = arith.constant 1.000000e+00 : f32
    %841 = vector.broadcast %cst_189 : f32 to vector<2x32xf32>
    %842 = arith.addf %841, %840 : vector<2x32xf32>
    %843 = arith.divf %841, %842 : vector<2x32xf32>
    %844 = vector.extract_strided_slice %828 {offsets = [0, 64], sizes = [2, 32], strides = [1, 1]} : vector<2x128xf32> to vector<2x32xf32>
    %845 = math.tanh %844 : vector<2x32xf32>
    %846 = vector.extract_strided_slice %828 {offsets = [0, 96], sizes = [2, 32], strides = [1, 1]} : vector<2x128xf32> to vector<2x32xf32>
    %847 = arith.negf %846 : vector<2x32xf32>
    %848 = math.exp %847 : vector<2x32xf32>
    %cst_190 = arith.constant 1.000000e+00 : f32
    %849 = vector.broadcast %cst_190 : f32 to vector<2x32xf32>
    %850 = arith.addf %849, %848 : vector<2x32xf32>
    %851 = arith.divf %849, %850 : vector<2x32xf32>
    %852 = arith.mulf %843, %798 : vector<2x32xf32>
    %853 = arith.mulf %837, %845 : vector<2x32xf32>
    %854 = arith.addf %852, %853 : vector<2x32xf32>
    %855 = math.tanh %854 : vector<2x32xf32>
    %856 = arith.mulf %851, %855 : vector<2x32xf32>
    %857 = vector.extract_strided_slice %831 {offsets = [0, 0], sizes = [2, 32], strides = [1, 1]} : vector<2x128xf32> to vector<2x32xf32>
    %858 = arith.negf %857 : vector<2x32xf32>
    %859 = math.exp %858 : vector<2x32xf32>
    %cst_191 = arith.constant 1.000000e+00 : f32
    %860 = vector.broadcast %cst_191 : f32 to vector<2x32xf32>
    %861 = arith.addf %860, %859 : vector<2x32xf32>
    %862 = arith.divf %860, %861 : vector<2x32xf32>
    %863 = vector.extract_strided_slice %831 {offsets = [0, 32], sizes = [2, 32], strides = [1, 1]} : vector<2x128xf32> to vector<2x32xf32>
    %864 = arith.negf %863 : vector<2x32xf32>
    %865 = math.exp %864 : vector<2x32xf32>
    %cst_192 = arith.constant 1.000000e+00 : f32
    %866 = vector.broadcast %cst_192 : f32 to vector<2x32xf32>
    %867 = arith.addf %866, %865 : vector<2x32xf32>
    %868 = arith.divf %866, %867 : vector<2x32xf32>
    %869 = vector.extract_strided_slice %831 {offsets = [0, 64], sizes = [2, 32], strides = [1, 1]} : vector<2x128xf32> to vector<2x32xf32>
    %870 = math.tanh %869 : vector<2x32xf32>
    %871 = vector.extract_strided_slice %831 {offsets = [0, 96], sizes = [2, 32], strides = [1, 1]} : vector<2x128xf32> to vector<2x32xf32>
    %872 = arith.negf %871 : vector<2x32xf32>
    %873 = math.exp %872 : vector<2x32xf32>
    %cst_193 = arith.constant 1.000000e+00 : f32
    %874 = vector.broadcast %cst_193 : f32 to vector<2x32xf32>
    %875 = arith.addf %874, %873 : vector<2x32xf32>
    %876 = arith.divf %874, %875 : vector<2x32xf32>
    %877 = arith.mulf %868, %823 : vector<2x32xf32>
    %878 = arith.mulf %862, %870 : vector<2x32xf32>
    %879 = arith.addf %877, %878 : vector<2x32xf32>
    %880 = math.tanh %879 : vector<2x32xf32>
    %881 = arith.mulf %876, %880 : vector<2x32xf32>
    %882 = vector.extract_strided_slice %541 {offsets = [12, 0], sizes = [2, 128], strides = [1, 1]} : vector<16x256xf32> to vector<2x128xf32>
    %cst_194 = arith.constant dense<0.000000e+00> : vector<2x128xf32>
    %883 = tpu.matmul %856, %536, %cst_194 {dimension_numbers = #tpu.dot_dimension_numbers<[1], [0], [0], [1], [0, 0, 1, 1], [], []>} : vector<2x32xf32>, vector<32x128xf32>, vector<2x128xf32> -> vector<2x128xf32>
    %884 = arith.addf %882, %883 : vector<2x128xf32>
    %885 = vector.extract_strided_slice %541 {offsets = [2, 128], sizes = [2, 128], strides = [1, 1]} : vector<16x256xf32> to vector<2x128xf32>
    %cst_195 = arith.constant dense<0.000000e+00> : vector<2x128xf32>
    %886 = tpu.matmul %881, %537, %cst_195 {dimension_numbers = #tpu.dot_dimension_numbers<[1], [0], [0], [1], [0, 0, 1, 1], [], []>} : vector<2x32xf32>, vector<32x128xf32>, vector<2x128xf32> -> vector<2x128xf32>
    %887 = arith.addf %885, %886 : vector<2x128xf32>
    %888 = vector.extract_strided_slice %884 {offsets = [0, 0], sizes = [2, 32], strides = [1, 1]} : vector<2x128xf32> to vector<2x32xf32>
    %889 = arith.negf %888 : vector<2x32xf32>
    %890 = math.exp %889 : vector<2x32xf32>
    %cst_196 = arith.constant 1.000000e+00 : f32
    %891 = vector.broadcast %cst_196 : f32 to vector<2x32xf32>
    %892 = arith.addf %891, %890 : vector<2x32xf32>
    %893 = arith.divf %891, %892 : vector<2x32xf32>
    %894 = vector.extract_strided_slice %884 {offsets = [0, 32], sizes = [2, 32], strides = [1, 1]} : vector<2x128xf32> to vector<2x32xf32>
    %895 = arith.negf %894 : vector<2x32xf32>
    %896 = math.exp %895 : vector<2x32xf32>
    %cst_197 = arith.constant 1.000000e+00 : f32
    %897 = vector.broadcast %cst_197 : f32 to vector<2x32xf32>
    %898 = arith.addf %897, %896 : vector<2x32xf32>
    %899 = arith.divf %897, %898 : vector<2x32xf32>
    %900 = vector.extract_strided_slice %884 {offsets = [0, 64], sizes = [2, 32], strides = [1, 1]} : vector<2x128xf32> to vector<2x32xf32>
    %901 = math.tanh %900 : vector<2x32xf32>
    %902 = vector.extract_strided_slice %884 {offsets = [0, 96], sizes = [2, 32], strides = [1, 1]} : vector<2x128xf32> to vector<2x32xf32>
    %903 = arith.negf %902 : vector<2x32xf32>
    %904 = math.exp %903 : vector<2x32xf32>
    %cst_198 = arith.constant 1.000000e+00 : f32
    %905 = vector.broadcast %cst_198 : f32 to vector<2x32xf32>
    %906 = arith.addf %905, %904 : vector<2x32xf32>
    %907 = arith.divf %905, %906 : vector<2x32xf32>
    %908 = arith.mulf %899, %854 : vector<2x32xf32>
    %909 = arith.mulf %893, %901 : vector<2x32xf32>
    %910 = arith.addf %908, %909 : vector<2x32xf32>
    %911 = math.tanh %910 : vector<2x32xf32>
    %912 = arith.mulf %907, %911 : vector<2x32xf32>
    %913 = vector.extract_strided_slice %887 {offsets = [0, 0], sizes = [2, 32], strides = [1, 1]} : vector<2x128xf32> to vector<2x32xf32>
    %914 = arith.negf %913 : vector<2x32xf32>
    %915 = math.exp %914 : vector<2x32xf32>
    %cst_199 = arith.constant 1.000000e+00 : f32
    %916 = vector.broadcast %cst_199 : f32 to vector<2x32xf32>
    %917 = arith.addf %916, %915 : vector<2x32xf32>
    %918 = arith.divf %916, %917 : vector<2x32xf32>
    %919 = vector.extract_strided_slice %887 {offsets = [0, 32], sizes = [2, 32], strides = [1, 1]} : vector<2x128xf32> to vector<2x32xf32>
    %920 = arith.negf %919 : vector<2x32xf32>
    %921 = math.exp %920 : vector<2x32xf32>
    %cst_200 = arith.constant 1.000000e+00 : f32
    %922 = vector.broadcast %cst_200 : f32 to vector<2x32xf32>
    %923 = arith.addf %922, %921 : vector<2x32xf32>
    %924 = arith.divf %922, %923 : vector<2x32xf32>
    %925 = vector.extract_strided_slice %887 {offsets = [0, 64], sizes = [2, 32], strides = [1, 1]} : vector<2x128xf32> to vector<2x32xf32>
    %926 = math.tanh %925 : vector<2x32xf32>
    %927 = vector.extract_strided_slice %887 {offsets = [0, 96], sizes = [2, 32], strides = [1, 1]} : vector<2x128xf32> to vector<2x32xf32>
    %928 = arith.negf %927 : vector<2x32xf32>
    %929 = math.exp %928 : vector<2x32xf32>
    %cst_201 = arith.constant 1.000000e+00 : f32
    %930 = vector.broadcast %cst_201 : f32 to vector<2x32xf32>
    %931 = arith.addf %930, %929 : vector<2x32xf32>
    %932 = arith.divf %930, %931 : vector<2x32xf32>
    %933 = arith.mulf %924, %879 : vector<2x32xf32>
    %934 = arith.mulf %918, %926 : vector<2x32xf32>
    %935 = arith.addf %933, %934 : vector<2x32xf32>
    %936 = math.tanh %935 : vector<2x32xf32>
    %937 = arith.mulf %932, %936 : vector<2x32xf32>
    %938 = vector.extract_strided_slice %541 {offsets = [14, 0], sizes = [2, 128], strides = [1, 1]} : vector<16x256xf32> to vector<2x128xf32>
    %cst_202 = arith.constant dense<0.000000e+00> : vector<2x128xf32>
    %939 = tpu.matmul %912, %536, %cst_202 {dimension_numbers = #tpu.dot_dimension_numbers<[1], [0], [0], [1], [0, 0, 1, 1], [], []>} : vector<2x32xf32>, vector<32x128xf32>, vector<2x128xf32> -> vector<2x128xf32>
    %940 = arith.addf %938, %939 : vector<2x128xf32>
    %941 = vector.extract_strided_slice %541 {offsets = [0, 128], sizes = [2, 128], strides = [1, 1]} : vector<16x256xf32> to vector<2x128xf32>
    %cst_203 = arith.constant dense<0.000000e+00> : vector<2x128xf32>
    %942 = tpu.matmul %937, %537, %cst_203 {dimension_numbers = #tpu.dot_dimension_numbers<[1], [0], [0], [1], [0, 0, 1, 1], [], []>} : vector<2x32xf32>, vector<32x128xf32>, vector<2x128xf32> -> vector<2x128xf32>
    %943 = arith.addf %941, %942 : vector<2x128xf32>
    %944 = vector.extract_strided_slice %940 {offsets = [0, 0], sizes = [2, 32], strides = [1, 1]} : vector<2x128xf32> to vector<2x32xf32>
    %945 = arith.negf %944 : vector<2x32xf32>
    %946 = math.exp %945 : vector<2x32xf32>
    %cst_204 = arith.constant 1.000000e+00 : f32
    %947 = vector.broadcast %cst_204 : f32 to vector<2x32xf32>
    %948 = arith.addf %947, %946 : vector<2x32xf32>
    %949 = arith.divf %947, %948 : vector<2x32xf32>
    %950 = vector.extract_strided_slice %940 {offsets = [0, 32], sizes = [2, 32], strides = [1, 1]} : vector<2x128xf32> to vector<2x32xf32>
    %951 = arith.negf %950 : vector<2x32xf32>
    %952 = math.exp %951 : vector<2x32xf32>
    %cst_205 = arith.constant 1.000000e+00 : f32
    %953 = vector.broadcast %cst_205 : f32 to vector<2x32xf32>
    %954 = arith.addf %953, %952 : vector<2x32xf32>
    %955 = arith.divf %953, %954 : vector<2x32xf32>
    %956 = vector.extract_strided_slice %940 {offsets = [0, 64], sizes = [2, 32], strides = [1, 1]} : vector<2x128xf32> to vector<2x32xf32>
    %957 = math.tanh %956 : vector<2x32xf32>
    %958 = vector.extract_strided_slice %940 {offsets = [0, 96], sizes = [2, 32], strides = [1, 1]} : vector<2x128xf32> to vector<2x32xf32>
    %959 = arith.negf %958 : vector<2x32xf32>
    %960 = math.exp %959 : vector<2x32xf32>
    %cst_206 = arith.constant 1.000000e+00 : f32
    %961 = vector.broadcast %cst_206 : f32 to vector<2x32xf32>
    %962 = arith.addf %961, %960 : vector<2x32xf32>
    %963 = arith.divf %961, %962 : vector<2x32xf32>
    %964 = arith.mulf %955, %910 : vector<2x32xf32>
    %965 = arith.mulf %949, %957 : vector<2x32xf32>
    %966 = arith.addf %964, %965 : vector<2x32xf32>
    %967 = math.tanh %966 : vector<2x32xf32>
    %968 = arith.mulf %963, %967 : vector<2x32xf32>
    %969 = vector.extract_strided_slice %943 {offsets = [0, 0], sizes = [2, 32], strides = [1, 1]} : vector<2x128xf32> to vector<2x32xf32>
    %970 = arith.negf %969 : vector<2x32xf32>
    %971 = math.exp %970 : vector<2x32xf32>
    %cst_207 = arith.constant 1.000000e+00 : f32
    %972 = vector.broadcast %cst_207 : f32 to vector<2x32xf32>
    %973 = arith.addf %972, %971 : vector<2x32xf32>
    %974 = arith.divf %972, %973 : vector<2x32xf32>
    %975 = vector.extract_strided_slice %943 {offsets = [0, 32], sizes = [2, 32], strides = [1, 1]} : vector<2x128xf32> to vector<2x32xf32>
    %976 = arith.negf %975 : vector<2x32xf32>
    %977 = math.exp %976 : vector<2x32xf32>
    %cst_208 = arith.constant 1.000000e+00 : f32
    %978 = vector.broadcast %cst_208 : f32 to vector<2x32xf32>
    %979 = arith.addf %978, %977 : vector<2x32xf32>
    %980 = arith.divf %978, %979 : vector<2x32xf32>
    %981 = vector.extract_strided_slice %943 {offsets = [0, 64], sizes = [2, 32], strides = [1, 1]} : vector<2x128xf32> to vector<2x32xf32>
    %982 = math.tanh %981 : vector<2x32xf32>
    %983 = vector.extract_strided_slice %943 {offsets = [0, 96], sizes = [2, 32], strides = [1, 1]} : vector<2x128xf32> to vector<2x32xf32>
    %984 = arith.negf %983 : vector<2x32xf32>
    %985 = math.exp %984 : vector<2x32xf32>
    %cst_209 = arith.constant 1.000000e+00 : f32
    %986 = vector.broadcast %cst_209 : f32 to vector<2x32xf32>
    %987 = arith.addf %986, %985 : vector<2x32xf32>
    %988 = arith.divf %986, %987 : vector<2x32xf32>
    %989 = arith.mulf %980, %935 : vector<2x32xf32>
    %990 = arith.mulf %974, %982 : vector<2x32xf32>
    %991 = arith.addf %989, %990 : vector<2x32xf32>
    %992 = math.tanh %991 : vector<2x32xf32>
    %993 = arith.mulf %988, %992 : vector<2x32xf32>
    %994 = tpu.concatenate %576, %993 in 1 : vector<2x32xf32>, vector<2x32xf32> -> vector<2x64xf32>
    %995 = tpu.concatenate %632, %937 in 1 : vector<2x32xf32>, vector<2x32xf32> -> vector<2x64xf32>
    %996 = tpu.concatenate %688, %881 in 1 : vector<2x32xf32>, vector<2x32xf32> -> vector<2x64xf32>
    %997 = tpu.concatenate %744, %825 in 1 : vector<2x32xf32>, vector<2x32xf32> -> vector<2x64xf32>
    %998 = tpu.concatenate %800, %769 in 1 : vector<2x32xf32>, vector<2x32xf32> -> vector<2x64xf32>
    %999 = tpu.concatenate %856, %713 in 1 : vector<2x32xf32>, vector<2x32xf32> -> vector<2x64xf32>
    %1000 = tpu.concatenate %912, %657 in 1 : vector<2x32xf32>, vector<2x32xf32> -> vector<2x64xf32>
    %1001 = tpu.concatenate %968, %601 in 1 : vector<2x32xf32>, vector<2x32xf32> -> vector<2x64xf32>
    %1002 = tpu.concatenate %994, %995, %996, %997, %998, %999, %1000, %1001 in 0 : vector<2x64xf32>, vector<2x64xf32>, vector<2x64xf32>, vector<2x64xf32>, vector<2x64xf32>, vector<2x64xf32>, vector<2x64xf32>, vector<2x64xf32> -> vector<16x64xf32>
    %c0_210 = arith.constant 0 : index
    %c0_211 = arith.constant 0 : index
    %1003 = vector.load %arg11[%c0_210, %c0_211] : memref<64x256xf32, #tpu.memory_space<vmem>>, vector<64x256xf32>
    %cst_212 = arith.constant dense<0.000000e+00> : vector<16x256xf32>
    %1004 = tpu.matmul %1002, %1003, %cst_212 {dimension_numbers = #tpu.dot_dimension_numbers<[1], [0], [0], [1], [0, 0, 1, 1], [], []>} : vector<16x64xf32>, vector<64x256xf32>, vector<16x256xf32> -> vector<16x256xf32>
    %c0_213 = arith.constant 0 : index
    %c0_214 = arith.constant 0 : index
    %1005 = vector.load %arg12[%c0_213, %c0_214] : memref<1x256xf32, #tpu.memory_space<vmem>>, vector<1x256xf32>
    %1006 = vector.broadcast %1005 : vector<1x256xf32> to vector<16x256xf32>
    %1007 = arith.addf %1004, %1006 : vector<16x256xf32>
    %cst_215 = arith.constant 0.000000e+00 : f32
    %1008 = vector.broadcast %cst_215 : f32 to vector<16x256xf32>
    %1009 = arith.maximumf %1007, %1008 : vector<16x256xf32>
    %c0_216 = arith.constant 0 : index
    %c0_217 = arith.constant 0 : index
    %1010 = vector.load %arg13[%c0_216, %c0_217] : memref<256x16xf32, #tpu.memory_space<vmem>>, vector<256x16xf32>
    %cst_218 = arith.constant dense<0.000000e+00> : vector<16x16xf32>
    %1011 = tpu.matmul %1009, %1010, %cst_218 {dimension_numbers = #tpu.dot_dimension_numbers<[1], [0], [0], [1], [0, 0, 1, 1], [], []>} : vector<16x256xf32>, vector<256x16xf32>, vector<16x16xf32> -> vector<16x16xf32>
    %c0_219 = arith.constant 0 : index
    %c0_220 = arith.constant 0 : index
    %1012 = vector.load %arg14[%c0_219, %c0_220] : memref<1x16xf32, #tpu.memory_space<vmem>>, vector<1x16xf32>
    %1013 = vector.broadcast %1012 : vector<1x16xf32> to vector<16x16xf32>
    %1014 = arith.addf %1011, %1013 : vector<16x16xf32>
    %1015 = vector.extract_strided_slice %1014 {offsets = [0, 0], sizes = [1, 16], strides = [1, 1]} : vector<16x16xf32> to vector<1x16xf32>
    %1016 = vector.extract_strided_slice %1014 {offsets = [2, 0], sizes = [1, 16], strides = [1, 1]} : vector<16x16xf32> to vector<1x16xf32>
    %1017 = vector.extract_strided_slice %1014 {offsets = [4, 0], sizes = [1, 16], strides = [1, 1]} : vector<16x16xf32> to vector<1x16xf32>
    %1018 = vector.extract_strided_slice %1014 {offsets = [6, 0], sizes = [1, 16], strides = [1, 1]} : vector<16x16xf32> to vector<1x16xf32>
    %1019 = vector.extract_strided_slice %1014 {offsets = [8, 0], sizes = [1, 16], strides = [1, 1]} : vector<16x16xf32> to vector<1x16xf32>
    %1020 = vector.extract_strided_slice %1014 {offsets = [10, 0], sizes = [1, 16], strides = [1, 1]} : vector<16x16xf32> to vector<1x16xf32>
    %1021 = vector.extract_strided_slice %1014 {offsets = [12, 0], sizes = [1, 16], strides = [1, 1]} : vector<16x16xf32> to vector<1x16xf32>
    %1022 = vector.extract_strided_slice %1014 {offsets = [14, 0], sizes = [1, 16], strides = [1, 1]} : vector<16x16xf32> to vector<1x16xf32>
    %1023 = tpu.concatenate %1015, %1016, %1017, %1018, %1019, %1020, %1021, %1022 in 0 : vector<1x16xf32>, vector<1x16xf32>, vector<1x16xf32>, vector<1x16xf32>, vector<1x16xf32>, vector<1x16xf32>, vector<1x16xf32>, vector<1x16xf32> -> vector<8x16xf32>
    %1024 = arith.mulf %1023, %1023 : vector<8x16xf32>
    %1025 = vector.shape_cast %1024 : vector<8x16xf32> to vector<1x8x16xf32>
    %cst_221 = arith.constant dense<0.000000e+00> : vector<1xf32>
    %1026 = vector.multi_reduction <add>, %1025, %cst_221 [1, 2] : vector<1x8x16xf32> to vector<1xf32>
    %1027 = vector.shape_cast %1026 : vector<1xf32> to vector<1x1x1xf32>
    %1028 = vector.extract %1027[0, 0, 0] : f32 from vector<1x1x1xf32>
    %1029 = vector.broadcast %1028 : f32 to vector<1x1xf32>
    %cst_222 = arith.constant 1.280000e+02 : f32
    %1030 = vector.broadcast %cst_222 : f32 to vector<1x1xf32>
    %1031 = arith.divf %1029, %1030 : vector<1x1xf32>
    %cst_223 = arith.constant 9.99999993E-9 : f32
    %1032 = vector.broadcast %cst_223 : f32 to vector<1x1xf32>
    %1033 = arith.addf %1031, %1032 : vector<1x1xf32>
    %1034 = math.rsqrt %1033 : vector<1x1xf32>
    %1035 = vector.broadcast %1034 : vector<1x1xf32> to vector<8x16xf32>
    %1036 = arith.mulf %1023, %1035 : vector<8x16xf32>
    %c0_224 = arith.constant 0 : index
    %c0_225 = arith.constant 0 : index
    %c0_226 = arith.constant 0 : index
    %1037 = vector.load %arg15[%c0_224, %c0_225, %c0_226] : memref<2x8x16xf32, #tpu.memory_space<vmem>>, vector<1x8x16xf32>
    %1038 = vector.shape_cast %1037 : vector<1x8x16xf32> to vector<8x16xf32>
    %1039 = vector.shape_cast %1036 : vector<8x16xf32> to vector<1x8x16xf32>
    tpu.vector_store %arg15[%c0_224, %c0_225, %c0_226], %1039 {strides = array<i32>} : memref<2x8x16xf32, #tpu.memory_space<vmem>>, vector<1x8x16xf32>,
    %1040 = vector.extract_strided_slice %1014 {offsets = [1, 0], sizes = [1, 16], strides = [1, 1]} : vector<16x16xf32> to vector<1x16xf32>
    %1041 = vector.extract_strided_slice %1014 {offsets = [3, 0], sizes = [1, 16], strides = [1, 1]} : vector<16x16xf32> to vector<1x16xf32>
    %1042 = vector.extract_strided_slice %1014 {offsets = [5, 0], sizes = [1, 16], strides = [1, 1]} : vector<16x16xf32> to vector<1x16xf32>
    %1043 = vector.extract_strided_slice %1014 {offsets = [7, 0], sizes = [1, 16], strides = [1, 1]} : vector<16x16xf32> to vector<1x16xf32>
    %1044 = vector.extract_strided_slice %1014 {offsets = [9, 0], sizes = [1, 16], strides = [1, 1]} : vector<16x16xf32> to vector<1x16xf32>
    %1045 = vector.extract_strided_slice %1014 {offsets = [11, 0], sizes = [1, 16], strides = [1, 1]} : vector<16x16xf32> to vector<1x16xf32>
    %1046 = vector.extract_strided_slice %1014 {offsets = [13, 0], sizes = [1, 16], strides = [1, 1]} : vector<16x16xf32> to vector<1x16xf32>
    %1047 = vector.extract_strided_slice %1014 {offsets = [15, 0], sizes = [1, 16], strides = [1, 1]} : vector<16x16xf32> to vector<1x16xf32>
    %1048 = tpu.concatenate %1040, %1041, %1042, %1043, %1044, %1045, %1046, %1047 in 0 : vector<1x16xf32>, vector<1x16xf32>, vector<1x16xf32>, vector<1x16xf32>, vector<1x16xf32>, vector<1x16xf32>, vector<1x16xf32>, vector<1x16xf32> -> vector<8x16xf32>
    %1049 = arith.mulf %1048, %1048 : vector<8x16xf32>
    %1050 = vector.shape_cast %1049 : vector<8x16xf32> to vector<1x8x16xf32>
    %cst_227 = arith.constant dense<0.000000e+00> : vector<1xf32>
    %1051 = vector.multi_reduction <add>, %1050, %cst_227 [1, 2] : vector<1x8x16xf32> to vector<1xf32>
    %1052 = vector.shape_cast %1051 : vector<1xf32> to vector<1x1x1xf32>
    %1053 = vector.extract %1052[0, 0, 0] : f32 from vector<1x1x1xf32>
    %1054 = vector.broadcast %1053 : f32 to vector<1x1xf32>
    %cst_228 = arith.constant 1.280000e+02 : f32
    %1055 = vector.broadcast %cst_228 : f32 to vector<1x1xf32>
    %1056 = arith.divf %1054, %1055 : vector<1x1xf32>
    %cst_229 = arith.constant 9.99999993E-9 : f32
    %1057 = vector.broadcast %cst_229 : f32 to vector<1x1xf32>
    %1058 = arith.addf %1056, %1057 : vector<1x1xf32>
    %1059 = math.rsqrt %1058 : vector<1x1xf32>
    %1060 = vector.broadcast %1059 : vector<1x1xf32> to vector<8x16xf32>
    %1061 = arith.mulf %1048, %1060 : vector<8x16xf32>
    %c1_230 = arith.constant 1 : index
    %c0_231 = arith.constant 0 : index
    %c0_232 = arith.constant 0 : index
    %1062 = vector.load %arg15[%c1_230, %c0_231, %c0_232] : memref<2x8x16xf32, #tpu.memory_space<vmem>>, vector<1x8x16xf32>
    %1063 = vector.shape_cast %1062 : vector<1x8x16xf32> to vector<8x16xf32>
    %1064 = vector.shape_cast %1061 : vector<8x16xf32> to vector<1x8x16xf32>
    tpu.vector_store %arg15[%c1_230, %c0_231, %c0_232], %1064 {strides = array<i32>} : memref<2x8x16xf32, #tpu.memory_space<vmem>>, vector<1x8x16xf32>,
    return
  }
  func.func @transform_0(%arg0: i32, %arg1: memref<2x8xi32, #tpu.memory_space<smem>>) -> (i32, i32, i32) {
    %c0_i32 = arith.constant 0 : i32
    %c0_i32_0 = arith.constant 0 : i32
    %c0_i32_1 = arith.constant 0 : i32
    %c0_i32_2 = arith.constant 0 : i32
    return %c0_i32, %c0_i32_0, %c0_i32_1 : i32, i32, i32
  }
  func.func @transform_1(%arg0: i32, %arg1: memref<2x8xi32, #tpu.memory_space<smem>>) -> (i32, i32) {
    %c0_i32 = arith.constant 0 : i32
    %c0_i32_0 = arith.constant 0 : i32
    %c0_i32_1 = arith.constant 0 : i32
    return %c0_i32, %c0_i32_0 : i32, i32
  }
  func.func @transform_2(%arg0: i32, %arg1: memref<2x8xi32, #tpu.memory_space<smem>>) -> (i32, i32) {
    %c0_i32 = arith.constant 0 : i32
    %c0_i32_0 = arith.constant 0 : i32
    %c0_i32_1 = arith.constant 0 : i32
    return %c0_i32, %c0_i32_0 : i32, i32
  }
  func.func @transform_3(%arg0: i32, %arg1: memref<2x8xi32, #tpu.memory_space<smem>>) -> (i32, i32) {
    %c0_i32 = arith.constant 0 : i32
    %c0_i32_0 = arith.constant 0 : i32
    %c0_i32_1 = arith.constant 0 : i32
    return %c0_i32, %c0_i32_0 : i32, i32
  }
  func.func @transform_4(%arg0: i32, %arg1: memref<2x8xi32, #tpu.memory_space<smem>>) -> (i32, i32) {
    %c0_i32 = arith.constant 0 : i32
    %c0_i32_0 = arith.constant 0 : i32
    %c0_i32_1 = arith.constant 0 : i32
    return %c0_i32, %c0_i32_0 : i32, i32
  }
  func.func @transform_5(%arg0: i32, %arg1: memref<2x8xi32, #tpu.memory_space<smem>>) -> (i32, i32) {
    %c0_i32 = arith.constant 0 : i32
    %c0_i32_0 = arith.constant 0 : i32
    %c0_i32_1 = arith.constant 0 : i32
    return %c0_i32, %c0_i32_0 : i32, i32
  }
  func.func @transform_6(%arg0: i32, %arg1: memref<2x8xi32, #tpu.memory_space<smem>>) -> (i32, i32) {
    %c0_i32 = arith.constant 0 : i32
    %c0_i32_0 = arith.constant 0 : i32
    %c0_i32_1 = arith.constant 0 : i32
    return %c0_i32, %c0_i32_0 : i32, i32
  }
  func.func @transform_7(%arg0: i32, %arg1: memref<2x8xi32, #tpu.memory_space<smem>>) -> (i32, i32) {
    %c0_i32 = arith.constant 0 : i32
    %c0_i32_0 = arith.constant 0 : i32
    %c0_i32_1 = arith.constant 0 : i32
    return %c0_i32, %c0_i32_0 : i32, i32
  }
  func.func @transform_8(%arg0: i32, %arg1: memref<2x8xi32, #tpu.memory_space<smem>>) -> (i32, i32) {
    %c0_i32 = arith.constant 0 : i32
    %c0_i32_0 = arith.constant 0 : i32
    %c0_i32_1 = arith.constant 0 : i32
    return %c0_i32, %c0_i32_0 : i32, i32
  }
  func.func @transform_9(%arg0: i32, %arg1: memref<2x8xi32, #tpu.memory_space<smem>>) -> (i32, i32) {
    %c0_i32 = arith.constant 0 : i32
    %c0_i32_0 = arith.constant 0 : i32
    %c0_i32_1 = arith.constant 0 : i32
    return %c0_i32, %c0_i32_0 : i32, i32
  }
  func.func @transform_10(%arg0: i32, %arg1: memref<2x8xi32, #tpu.memory_space<smem>>) -> (i32, i32) {
    %c0_i32 = arith.constant 0 : i32
    %c0_i32_0 = arith.constant 0 : i32
    %c0_i32_1 = arith.constant 0 : i32
    return %c0_i32, %c0_i32_0 : i32, i32
  }
  func.func @transform_11(%arg0: i32, %arg1: memref<2x8xi32, #tpu.memory_space<smem>>) -> (i32, i32) {
    %c0_i32 = arith.constant 0 : i32
    %c0_i32_0 = arith.constant 0 : i32
    %c0_i32_1 = arith.constant 0 : i32
    return %c0_i32, %c0_i32_0 : i32, i32
  }
  func.func @transform_12(%arg0: i32, %arg1: memref<2x8xi32, #tpu.memory_space<smem>>) -> (i32, i32) {
    %c0_i32 = arith.constant 0 : i32
    %c0_i32_0 = arith.constant 0 : i32
    %c0_i32_1 = arith.constant 0 : i32
    return %c0_i32, %c0_i32_0 : i32, i32
  }
  func.func @transform_13(%arg0: i32, %arg1: memref<2x8xi32, #tpu.memory_space<smem>>) -> (i32, i32, i32) {
    %c0_i32 = arith.constant 0 : i32
    %c0_i32_0 = arith.constant 0 : i32
    %c0_i32_1 = arith.constant 0 : i32
    %c0_i32_2 = arith.constant 0 : i32
    return %c0_i32, %c0_i32_0, %c0_i32_1 : i32, i32, i32
  }
}

</mosaic_0001>

<llo_original>
// kernel: tpu_custom_call.1
$region0: #{tpu_custom_call.1}
  #allocation0 [shape = 'u32[]', space=smem, size = 0x4, offset = 0x4, fixed_abs, tag = 'smem constant byte address 0x4 - core index']
  #allocation1 [shape = 'u32[144,128]{1,0:T(1,128)}', space=vmem, size = 0x12000, scoped, tag = 'internal scratch']
  #allocation2 [shape = 's32[1]{0}', space=sflag, size = 0x4, scoped, tag = 'scoped memory for tpu_custom_call.1']
  #allocation3 [shape = 'u8[1024]{0}', space=smem, size = 0x400, scoped, tag = 'prefetched SMEM operand 0']
  %s0 = inlined_call_operand.hbm [shape: s32[2,8], index: 0, kind: input, shape index: {}]
  %s1 = inlined_call_operand.vmem [shape: f32[32,1,32], index: 1, kind: input, shape index: {}]
  %s2 = inlined_call_operand.hbm [shape: f32[32,256], index: 2, kind: input, shape index: {}]
  %s3 = inlined_call_operand.hbm [shape: f32[32,128], index: 3, kind: input, shape index: {}]
  %s4 = inlined_call_operand.hbm [shape: f32[32,128], index: 4, kind: input, shape index: {}]
  %s5 = inlined_call_operand.vmem [shape: f32[1,256], index: 5, kind: input, shape index: {}]
  %s6 = inlined_call_operand.vmem [shape: f32[64,256], index: 6, kind: input, shape index: {}]
  %s7 = inlined_call_operand.hbm [shape: f32[32,128], index: 7, kind: input, shape index: {}]
  %s8 = inlined_call_operand.hbm [shape: f32[32,128], index: 8, kind: input, shape index: {}]
  %s9 = inlined_call_operand.vmem [shape: f32[1,256], index: 9, kind: input, shape index: {}]
  %s10 = inlined_call_operand.vmem [shape: f32[64,256], index: 10, kind: input, shape index: {}]
  %s11 = inlined_call_operand.vmem [shape: f32[1,256], index: 11, kind: input, shape index: {}]
  %s12 = inlined_call_operand.vmem [shape: f32[256,16], index: 12, kind: input, shape index: {}]
  %s13 = inlined_call_operand.vmem [shape: f32[1,16], index: 13, kind: input, shape index: {}]
  %s14 = inlined_call_operand.hbm [shape: f32[2,8,16], index: 14, kind: output, shape index: {}]
  %s15 = sld [smem:[#allocation0]]
  $region82: #{tpu_custom_call.1} parent=0
    _
  %s17 = ssub.s32 1, %s15
  %s18 = scalar_select 0, %s17, %s15
  %20 = dma.hbm_to_smem %s0, 32, [#allocation3], [#allocation2]
  %21 = dma.done [#allocation2], 32
  %22 = sfence
  $region1: #{tpu_custom_call.1} parent=0
    #allocation4 [shape = 'u8[32768]{0}', space=vmem, size = 0x8000, scoped, tag = 'input window, operand 2, single buffered']
    #allocation5 [shape = 's32[1]{0}', space=sflag, size = 0x4, scoped, tag = 'scoped memory for tpu_custom_call.1']
    #allocation6 [shape = 's32[1]{0}', space=sflag, size = 0x4, scoped, tag = 'scoped memory for tpu_custom_call.1']
    #allocation7 [shape = 'u8[16384]{0}', space=vmem, size = 0x4000, scoped, tag = 'input window, operand 3, single buffered']
    #allocation8 [shape = 's32[1]{0}', space=sflag, size = 0x4, scoped, tag = 'scoped memory for tpu_custom_call.1']
    #allocation9 [shape = 'u8[16384]{0}', space=vmem, size = 0x4000, scoped, tag = 'input window, operand 4, single buffered']
    #allocation10 [shape = 'u8[16384]{0}', space=vmem, size = 0x4000, scoped, tag = 'input window, operand 7, single buffered']
    #allocation11 [shape = 's32[1]{0}', space=sflag, size = 0x4, scoped, tag = 'scoped memory for tpu_custom_call.1']
    #allocation12 [shape = 'u8[16384]{0}', space=vmem, size = 0x4000, scoped, tag = 'input window, operand 8, single buffered']
    #allocation13 [shape = 'u8[8192]{0}', space=vmem, size = 0x2000, scoped, tag = 'output window, operand 0, single buffered']
    %23 = vsyncpa [#allocation5], 0
    %24 = vsyncpa [#allocation8], 0
    %25 = vsyncpa [#allocation11], 0
    %26 = vsyncpa [#allocation6], 0
    // Predicated region
    $region2: #{tpu_custom_call.1} parent=1 // pred_check
      _
    $region3: #{tpu_custom_call.1} parent=1 // pred_check_branch
      %28 = sbr.rel (0) target = $region5
    $region4: #{tpu_custom_call.1} parent=1 // pred_region
      _
    $region5: #{tpu_custom_call.1} parent=1 // pred_fallthru
      _
    // Predicated region
    $region6: #{tpu_custom_call.1} parent=1 // pred_check
      _
    $region7: #{tpu_custom_call.1} parent=1 // pred_check_branch
      %30 = sbr.rel (0) target = $region9
    $region8: #{tpu_custom_call.1} parent=1 // pred_region
      %s32 = ssub.s32 1024, 1024
      %33 = vsyncadd [#allocation5], %s32
      %s34 = sshll.u32 [#allocation4], 4
      %s35 = int_to_ptr.vmem [resolvable:$true] %s34
      %40 = dma.hbm_to_vmem [thread:$0]  %s2, 1024, %s35, [#allocation5], 256, 256, 16
    $region9: #{tpu_custom_call.1} parent=1 // pred_fallthru
      _
    // Predicated region
    $region10: #{tpu_custom_call.1} parent=1 // pred_check
      _
    $region11: #{tpu_custom_call.1} parent=1 // pred_check_branch
      %42 = sbr.rel (0) target = $region13
    $region12: #{tpu_custom_call.1} parent=1 // pred_region
      %s44 = ssub.s32 512, 512
      %45 = vsyncadd [#allocation8], %s44
      %s46 = sshll.u32 [#allocation7], 4
      %s47 = int_to_ptr.vmem [resolvable:$true] %s46
      %52 = dma.hbm_to_vmem [thread:$0]  %s3, 512, %s47, [#allocation8], 128, 128, 8
    $region13: #{tpu_custom_call.1} parent=1 // pred_fallthru
      _
    // Predicated region
    $region14: #{tpu_custom_call.1} parent=1 // pred_check
      _
    $region15: #{tpu_custom_call.1} parent=1 // pred_check_branch
      %54 = sbr.rel (0) target = $region17
    $region16: #{tpu_custom_call.1} parent=1 // pred_region
      %s56 = ssub.s32 512, 512
      %57 = vsyncadd [#allocation8], %s56
      %s58 = sshll.u32 [#allocation9], 4
      %s59 = int_to_ptr.vmem [resolvable:$true] %s58
      %64 = dma.hbm_to_vmem [thread:$0]  %s4, 512, %s59, [#allocation8], 128, 128, 8
    $region17: #{tpu_custom_call.1} parent=1 // pred_fallthru
      _
    // Predicated region
    $region18: #{tpu_custom_call.1} parent=1 // pred_check
      _
    $region19: #{tpu_custom_call.1} parent=1 // pred_check_branch
      %66 = sbr.rel (0) target = $region21
    $region20: #{tpu_custom_call.1} parent=1 // pred_region
      _
    $region21: #{tpu_custom_call.1} parent=1 // pred_fallthru
      _
    // Predicated region
    $region22: #{tpu_custom_call.1} parent=1 // pred_check
      _
    $region23: #{tpu_custom_call.1} parent=1 // pred_check_branch
      %68 = sbr.rel (0) target = $region25
    $region24: #{tpu_custom_call.1} parent=1 // pred_region
      _
    $region25: #{tpu_custom_call.1} parent=1 // pred_fallthru
      _
    // Predicated region
    $region26: #{tpu_custom_call.1} parent=1 // pred_check
      _
    $region27: #{tpu_custom_call.1} parent=1 // pred_check_branch
      %70 = sbr.rel (0) target = $region29
    $region28: #{tpu_custom_call.1} parent=1 // pred_region
      %s72 = ssub.s32 512, 512
      %73 = vsyncadd [#allocation11], %s72
      %s74 = sshll.u32 [#allocation10], 4
      %s75 = int_to_ptr.vmem [resolvable:$true] %s74
      %80 = dma.hbm_to_vmem [thread:$0]  %s7, 512, %s75, [#allocation11], 128, 128, 8
    $region29: #{tpu_custom_call.1} parent=1 // pred_fallthru
      _
    // Predicated region
    $region30: #{tpu_custom_call.1} parent=1 // pred_check
      _
    $region31: #{tpu_custom_call.1} parent=1 // pred_check_branch
      %82 = sbr.rel (0) target = $region33
    $region32: #{tpu_custom_call.1} parent=1 // pred_region
      %s84 = ssub.s32 512, 512
      %85 = vsyncadd [#allocation11], %s84
      %s86 = sshll.u32 [#allocation12], 4
      %s87 = int_to_ptr.vmem [resolvable:$true] %s86
      %92 = dma.hbm_to_vmem [thread:$0]  %s8, 512, %s87, [#allocation11], 128, 128, 8
    $region33: #{tpu_custom_call.1} parent=1 // pred_fallthru
      _
    // Predicated region
    $region34: #{tpu_custom_call.1} parent=1 // pred_check
      _
    $region35: #{tpu_custom_call.1} parent=1 // pred_check_branch
      %94 = sbr.rel (0) target = $region37
    $region36: #{tpu_custom_call.1} parent=1 // pred_region
      _
    $region37: #{tpu_custom_call.1} parent=1 // pred_fallthru
      _
    // Predicated region
    $region38: #{tpu_custom_call.1} parent=1 // pred_check
      _
    $region39: #{tpu_custom_call.1} parent=1 // pred_check_branch
      %96 = sbr.rel (0) target = $region41
    $region40: #{tpu_custom_call.1} parent=1 // pred_region
      _
    $region41: #{tpu_custom_call.1} parent=1 // pred_fallthru
      _
    // Predicated region
    $region42: #{tpu_custom_call.1} parent=1 // pred_check
      _
    $region43: #{tpu_custom_call.1} parent=1 // pred_check_branch
      %98 = sbr.rel (0) target = $region45
    $region44: #{tpu_custom_call.1} parent=1 // pred_region
      _
    $region45: #{tpu_custom_call.1} parent=1 // pred_fallthru
      _
    // Predicated region
    $region46: #{tpu_custom_call.1} parent=1 // pred_check
      _
    $region47: #{tpu_custom_call.1} parent=1 // pred_check_branch
      %100 = sbr.rel (0) target = $region49
    $region48: #{tpu_custom_call.1} parent=1 // pred_region
      _
    $region49: #{tpu_custom_call.1} parent=1 // pred_fallthru
      _
    // Predicated region
    $region50: #{tpu_custom_call.1} parent=1 // pred_check
      _
    $region51: #{tpu_custom_call.1} parent=1 // pred_check_branch
      %102 = sbr.rel (0) target = $region53
    $region52: #{tpu_custom_call.1} parent=1 // pred_region
      _
    $region53: #{tpu_custom_call.1} parent=1 // pred_fallthru
      _
    // Predicated region
    $region54: #{tpu_custom_call.1} parent=1 // pred_check
      _
    $region55: #{tpu_custom_call.1} parent=1 // pred_check_branch
      %104 = sbr.rel (0) target = $region57
    $region56: #{tpu_custom_call.1} parent=1 // pred_region
      %105 = dma.done [#allocation5], 1024
    $region57: #{tpu_custom_call.1} parent=1 // pred_fallthru
      _
    // Predicated region
    $region58: #{tpu_custom_call.1} parent=1 // pred_check
      _
    $region59: #{tpu_custom_call.1} parent=1 // pred_check_branch
      %107 = sbr.rel (0) target = $region61
    $region60: #{tpu_custom_call.1} parent=1 // pred_region
      %108 = dma.done [#allocation8], 512
    $region61: #{tpu_custom_call.1} parent=1 // pred_fallthru
      _
    // Predicated region
    $region62: #{tpu_custom_call.1} parent=1 // pred_check
      _
    $region63: #{tpu_custom_call.1} parent=1 // pred_check_branch
      %110 = sbr.rel (0) target = $region65
    $region64: #{tpu_custom_call.1} parent=1 // pred_region
      %111 = dma.done [#allocation8], 512
    $region65: #{tpu_custom_call.1} parent=1 // pred_fallthru
      _
    // Predicated region
    $region66: #{tpu_custom_call.1} parent=1 // pred_check
      _
    $region67: #{tpu_custom_call.1} parent=1 // pred_check_branch
      %113 = sbr.rel (0) target = $region69
    $region68: #{tpu_custom_call.1} parent=1 // pred_region
      %114 = dma.done [#allocation11], 512
    $region69: #{tpu_custom_call.1} parent=1 // pred_fallthru
      _
    // Predicated region
    $region70: #{tpu_custom_call.1} parent=1 // pred_check
      _
    $region71: #{tpu_custom_call.1} parent=1 // pred_check_branch
      %116 = sbr.rel (0) target = $region73
    $region72: #{tpu_custom_call.1} parent=1 // pred_region
      %117 = dma.done [#allocation11], 512
    $region73: #{tpu_custom_call.1} parent=1 // pred_fallthru
      _
    %s118 = sld [smem:[#allocation3]]
    %s119 = scalar_lea.vmem %s1, %s118
    %v120 = vld [vmem:[%s119] sm:$0x1]
    %s121 = sld [smem:[#allocation3 + $0x80]]
    %s122 = scalar_lea.vmem %s1, %s121
    %v123 = vld [vmem:[%s122] sm:$0x1]
    %s124 = sld [smem:[#allocation3 + $0x1]]
    %s125 = scalar_lea.vmem %s1, %s124
    %v126 = vld [vmem:[%s125] sm:$0x1]
    %s127 = sld [smem:[#allocation3 + $0x81]]
    %s128 = scalar_lea.vmem %s1, %s127
    %v129 = vld [vmem:[%s128] sm:$0x1]
    %s130 = sld [smem:[#allocation3 + $0x2]]
    %s131 = scalar_lea.vmem %s1, %s130
    %v132 = vld [vmem:[%s131] sm:$0x1]
    %s133 = sld [smem:[#allocation3 + $0x82]]
    %s134 = scalar_lea.vmem %s1, %s133
    %v135 = vld [vmem:[%s134] sm:$0x1]
    %s136 = sld [smem:[#allocation3 + $0x3]]
    %s137 = scalar_lea.vmem %s1, %s136
    %v138 = vld [vmem:[%s137] sm:$0x1]
    %s139 = sld [smem:[#allocation3 + $0x83]]
    %s140 = scalar_lea.vmem %s1, %s139
    %v141 = vld [vmem:[%s140] sm:$0x1]
    %s142 = sld [smem:[#allocation3 + $0x4]]
    %s143 = scalar_lea.vmem %s1, %s142
    %v144 = vld [vmem:[%s143] sm:$0x1]
    %s145 = sld [smem:[#allocation3 + $0x84]]
    %s146 = scalar_lea.vmem %s1, %s145
    %v147 = vld [vmem:[%s146] sm:$0x1]
    %s148 = sld [smem:[#allocation3 + $0x5]]
    %s149 = scalar_lea.vmem %s1, %s148
    %v150 = vld [vmem:[%s149] sm:$0x1]
    %s151 = sld [smem:[#allocation3 + $0x85]]
    %s152 = scalar_lea.vmem %s1, %s151
    %v153 = vld [vmem:[%s152] sm:$0x1]
    %s154 = sld [smem:[#allocation3 + $0x6]]
    %s155 = scalar_lea.vmem %s1, %s154
    %v156 = vld [vmem:[%s155] sm:$0x1]
    %s157 = sld [smem:[#allocation3 + $0x86]]
    %s158 = scalar_lea.vmem %s1, %s157
    %v159 = vld [vmem:[%s158] sm:$0x1]
    %s160 = sld [smem:[#allocation3 + $0x7]]
    %s161 = scalar_lea.vmem %s1, %s160
    %v162 = vld [vmem:[%s161] sm:$0x1]
    %s163 = sld [smem:[#allocation3 + $0x87]]
    %s164 = scalar_lea.vmem %s1, %s163
    %v165 = vld [vmem:[%s164] sm:$0x1]
    %v167 = vlaneseq
    %v168 = vshrl.u32 %v167, 7
    %v169 = vsub.s32 0, %v168
    %v170 = vrot.slane %v123, %v169
    %v173 = vlaneseq
    %v174 = vshrl.u32 %v173, 7
    %v175 = vsub.s32 0, %v174
    %v176 = vrot.slane %v126, %v175
    %v179 = vlaneseq
    %v180 = vshrl.u32 %v179, 7
    %v181 = vsub.s32 0, %v180
    %v182 = vrot.slane %v129, %v181
    %v185 = vlaneseq
    %v186 = vshrl.u32 %v185, 7
    %v187 = vsub.s32 0, %v186
    %v188 = vrot.slane %v132, %v187
    %v191 = vlaneseq
    %v192 = vshrl.u32 %v191, 7
    %v193 = vsub.s32 0, %v192
    %v194 = vrot.slane %v135, %v193
    %v197 = vlaneseq
    %v198 = vshrl.u32 %v197, 7
    %v199 = vsub.s32 0, %v198
    %v200 = vrot.slane %v138, %v199
    %v203 = vlaneseq
    %v204 = vshrl.u32 %v203, 7
    %v205 = vsub.s32 0, %v204
    %v206 = vrot.slane %v141, %v205
    %v209 = vlaneseq
    %v210 = vshrl.u32 %v209, 7
    %v211 = vsub.s32 0, %v210
    %v212 = vrot.slane %v147, %v211
    %v215 = vlaneseq
    %v216 = vshrl.u32 %v215, 7
    %v217 = vsub.s32 0, %v216
    %v218 = vrot.slane %v150, %v217
    %v221 = vlaneseq
    %v222 = vshrl.u32 %v221, 7
    %v223 = vsub.s32 0, %v222
    %v224 = vrot.slane %v153, %v223
    %v227 = vlaneseq
    %v228 = vshrl.u32 %v227, 7
    %v229 = vsub.s32 0, %v228
    %v230 = vrot.slane %v156, %v229
    %v233 = vlaneseq
    %v234 = vshrl.u32 %v233, 7
    %v235 = vsub.s32 0, %v234
    %v236 = vrot.slane %v159, %v235
    %v239 = vlaneseq
    %v240 = vshrl.u32 %v239, 7
    %v241 = vsub.s32 0, %v240
    %v242 = vrot.slane %v162, %v241
    %v245 = vlaneseq
    %v246 = vshrl.u32 %v245, 7
    %v247 = vsub.s32 0, %v246
    %v248 = vrot.slane %v165, %v247
    %vm250 = vcmask 1040384
    %v251 = vsel %vm250, %v120, %v170
    %vm252 = vcmask 1041408
    %v253 = vsel %vm252, %v251, %v176
    %vm254 = vcmask 1042432
    %v255 = vsel %vm254, %v253, %v182
    %vm256 = vcmask 1043456
    %v257 = vsel %vm256, %v255, %v188
    %vm258 = vcmask 1044480
    %v259 = vsel %vm258, %v257, %v194
    %vm260 = vcmask 1045504
    %v261 = vsel %vm260, %v259, %v200
    %vm262 = vcmask 1046528
    %v263 = vsel %vm262, %v261, %v206
    %v264 = vsel %vm250, %v144, %v212
    %v265 = vsel %vm252, %v264, %v218
    %v266 = vsel %vm254, %v265, %v224
    %v267 = vsel %vm256, %v266, %v230
    %v268 = vsel %vm258, %v267, %v236
    %v269 = vsel %vm260, %v268, %v242
    %v270 = vsel %vm262, %v269, %v248
    %v271 = vmul.f32 %v263, 5.656854
    %v272 = vmul.f32 %v270, 5.656854
    %v273 = vld [vmem:[#allocation4] sm:$0xff]
    %v274 = vld [vmem:[#allocation4 + $0x8] sm:$0xff]
    %v275 = vld [vmem:[#allocation4 + $0x10] sm:$0xff]
    %v276 = vld [vmem:[#allocation4 + $0x18] sm:$0xff]
    %v277 = vld [vmem:[#allocation4 + $0x20] sm:$0xff]
    %v278 = vld [vmem:[#allocation4 + $0x28] sm:$0xff]
    %v279 = vld [vmem:[#allocation4 + $0x30] sm:$0xff]
    %v280 = vld [vmem:[#allocation4 + $0x38] sm:$0xff]
    %v281 = vld [vmem:[#allocation7] sm:$0xff]
    %v282 = vld [vmem:[#allocation7 + $0x8] sm:$0xff]
    %v283 = vld [vmem:[#allocation7 + $0x10] sm:$0xff]
    %v284 = vld [vmem:[#allocation7 + $0x18] sm:$0xff]
    %v285 = vld [vmem:[#allocation9] sm:$0xff]
    %v286 = vld [vmem:[#allocation9 + $0x8] sm:$0xff]
    %v287 = vld [vmem:[#allocation9 + $0x10] sm:$0xff]
    %v288 = vld [vmem:[#allocation9 + $0x18] sm:$0xff]
    %v289 = vld [vmem:[%s5] sm:$0x3]
    %v291 = vlaneseq
    %v292 = vshrl.u32 %v291, 7
    %v293 = vsub.s32 0, %v292
    %v294 = vrot.slane %v289, %v293
    %v295 = vlaneseq
    %v296 = vshrl.u32 %v295, 7
    %v297 = vsub.s32 1, %v296
    %v298 = vrot.slane %v289, %v297
    %vm301 = vcmask 261120
    %v303 = vsel %vm301, %v271, 0
    %v306 = vsel %vm301, %v272, 0
    %308 = vmatprep.subr.mxu0 0.0
    %309 = vmatpush1.msra.mxu0 0.0
    %310 = vmatprep.subr.mxu0 0.0
    %311 = vmatpush1.msra.mxu0 0.0
    %312 = vmatprep.subr.mxu0 0.0
    %313 = vmatpush1.msra.mxu0 0.0
    %314 = vmatprep.subr.mxu0 0.0
    %315 = vmatpush1.msra.mxu0 0.0
    %316 = vmatprep.subr.mxu0 0.0
    %317 = vmatpush1.msra.mxu0 0.0
    %318 = vmatprep.subr.mxu0 0.0
    %319 = vmatpush1.msra.mxu0 0.0
    %320 = vmatprep.subr.mxu0 0.0
    %321 = vmatpush1.msra.mxu0 0.0
    %322 = vmatprep.subr.mxu0 0.0
    %323 = vmatpush1.msra.mxu0 0.0
    %324 = vmatprep.subr.mxu0 0.0
    %325 = vmatpush1.msra.mxu0 0.0
    %326 = vmatprep.subr.mxu0 0.0
    %327 = vmatpush1.msra.mxu0 0.0
    %328 = vmatprep.subr.mxu0 0.0
    %329 = vmatpush1.msra.mxu0 0.0
    %330 = vmatprep.subr.mxu0 0.0
    %331 = vmatpush1.msra.mxu0 0.0
    %332 = vmatprep.subr.mxu0 %v280
    %333 = vmatpush1.msra.mxu0 %v279
    %334 = vmatprep.subr.mxu0 %v278
    %335 = vmatpush1.msra.mxu0 %v277
    %336 = vmatprep.subr.mxu0 %v276
    %337 = vmatpush1.msra.mxu0 %v275
    %338 = vmatprep.subr.mxu0 %v274
    %339 = vmatpush1.msra.mxu0 %v273
    %340 = vmatprep.subr.mxu0 0.0
    %341 = vmatpush2.msra.mxu0 0.0
    %342 = vmatprep.subr.mxu0 0.0
    %343 = vmatpush2.msra.mxu0 0.0
    %344 = vmatprep.subr.mxu0 0.0
    %345 = vmatpush2.msra.mxu0 0.0
    %346 = vmatprep.subr.mxu0 0.0
    %347 = vmatpush2.msra.mxu0 0.0
    %348 = vmatprep.subr.mxu0 0.0
    %349 = vmatpush2.msra.mxu0 0.0
    %350 = vmatprep.subr.mxu0 0.0
    %351 = vmatpush2.msra.mxu0 0.0
    %352 = vmatprep.subr.mxu0 0.0
    %353 = vmatpush2.msra.mxu0 0.0
    %354 = vmatprep.subr.mxu0 0.0
    %355 = vmatpush2.msra.mxu0 0.0
    %356 = vmatprep.subr.mxu0 0.0
    %357 = vmatpush2.msra.mxu0 0.0
    %358 = vmatprep.subr.mxu0 0.0
    %359 = vmatpush2.msra.mxu0 0.0
    %360 = vmatprep.subr.mxu0 0.0
    %361 = vmatpush2.msra.mxu0 0.0
    %362 = vmatprep.subr.mxu0 0.0
    %363 = vmatpush2.msra.mxu0 0.0
    %364 = vmatprep.subr.mxu0 0.0
    %365 = vmatpush2.msra.mxu0 0.0
    %366 = vmatprep.subr.mxu0 0.0
    %367 = vmatpush2.msra.mxu0 0.0
    %368 = vmatprep.subr.mxu0 0.0
    %369 = vmatpush2.msra.mxu0 0.0
    %370 = vmatprep.subr.mxu0 0.0
    %371 = vmatpush2.msra.mxu0 0.0
    %372 = vmatprep.mubr.f32.mxu0 0.0
    %373 = vmatmul.mubr.f32.gmra.mxu0 %v303
    %v374 = vpop.f32.mrf.mxu0
    %v375 = vadd.f32 %v294, %v374
    %v376 = vpop.f32.mrf.mxu0
    %v377 = vadd.f32 %v298, %v376
    %378 = vmatprep.mubr.f32.mxu0 0.0
    %379 = vmatmul.mubr.f32.gmra.mxu0 %v306
    %v380 = vpop.f32.mrf.mxu0
    %v381 = vadd.f32 %v294, %v380
    %v382 = vpop.f32.mrf.mxu0
    %v383 = vadd.f32 %v298, %v382
    %384 = vdwg.mxu0
    %v386 = vsel %vm301, 0.0, 0
    %388 = vmatprep.subr.mxu0 0.0
    %389 = vmatpush1.msra.mxu0 0.0
    %390 = vmatprep.subr.mxu0 0.0
    %391 = vmatpush1.msra.mxu0 0.0
    %392 = vmatprep.subr.mxu0 0.0
    %393 = vmatpush1.msra.mxu0 0.0
    %394 = vmatprep.subr.mxu0 0.0
    %395 = vmatpush1.msra.mxu0 0.0
    %396 = vmatprep.subr.mxu0 0.0
    %397 = vmatpush1.msra.mxu0 0.0
    %398 = vmatprep.subr.mxu0 0.0
    %399 = vmatpush1.msra.mxu0 0.0
    %400 = vmatprep.subr.mxu0 0.0
    %401 = vmatpush1.msra.mxu0 0.0
    %402 = vmatprep.subr.mxu0 0.0
    %403 = vmatpush1.msra.mxu0 0.0
    %404 = vmatprep.subr.mxu0 0.0
    %405 = vmatpush1.msra.mxu0 0.0
    %406 = vmatprep.subr.mxu0 0.0
    %407 = vmatpush1.msra.mxu0 0.0
    %408 = vmatprep.subr.mxu0 0.0
    %409 = vmatpush1.msra.mxu0 0.0
    %410 = vmatprep.subr.mxu0 0.0
    %411 = vmatpush1.msra.mxu0 0.0
    %412 = vmatprep.subr.mxu0 0.0
    %413 = vmatpush1.msra.mxu0 %v284
    %414 = vmatprep.subr.mxu0 0.0
    %415 = vmatpush1.msra.mxu0 %v283
    %416 = vmatprep.subr.mxu0 0.0
    %417 = vmatpush1.msra.mxu0 %v282
    %418 = vmatprep.subr.mxu0 0.0
    %419 = vmatpush1.msra.mxu0 %v281
    %420 = vmatprep.subr.mxu0 0.0
    %421 = vmatpush2.msra.mxu0 0.0
    %422 = vmatprep.subr.mxu0 0.0
    %423 = vmatpush2.msra.mxu0 0.0
    %424 = vmatprep.subr.mxu0 0.0
    %425 = vmatpush2.msra.mxu0 0.0
    %426 = vmatprep.subr.mxu0 0.0
    %427 = vmatpush2.msra.mxu0 0.0
    %428 = vmatprep.subr.mxu0 0.0
    %429 = vmatpush2.msra.mxu0 0.0
    %430 = vmatprep.subr.mxu0 0.0
    %431 = vmatpush2.msra.mxu0 0.0
    %432 = vmatprep.subr.mxu0 0.0
    %433 = vmatpush2.msra.mxu0 0.0
    %434 = vmatprep.subr.mxu0 0.0
    %435 = vmatpush2.msra.mxu0 0.0
    %436 = vmatprep.subr.mxu0 0.0
    %437 = vmatpush2.msra.mxu0 0.0
    %438 = vmatprep.subr.mxu0 0.0
    %439 = vmatpush2.msra.mxu0 0.0
    %440 = vmatprep.subr.mxu0 0.0
    %441 = vmatpush2.msra.mxu0 0.0
    %442 = vmatprep.subr.mxu0 0.0
    %443 = vmatpush2.msra.mxu0 0.0
    %444 = vmatprep.subr.mxu0 0.0
    %445 = vmatpush2.msra.mxu0 0.0
    %446 = vmatprep.subr.mxu0 0.0
    %447 = vmatpush2.msra.mxu0 0.0
    %448 = vmatprep.subr.mxu0 0.0
    %449 = vmatpush2.msra.mxu0 0.0
    %450 = vmatprep.subr.mxu0 0.0
    %451 = vmatpush2.msra.mxu0 0.0
    %452 = vmatprep.mubr.f32.mxu0 0.0
    %453 = vmatmul.mubr.f32.gmra.mxu0 %v386
    %v454 = vpop.f32.mrf.mxu0
    %v455 = vadd.f32 0.0, %v454
    %v456 = vpop.f32.mrf.mxu0
    %457 = vdwg.mxu0
    %v458 = vadd.f32 %v375, %v455
    %459 = vmatprep.subr.mxu0 0.0
    %460 = vmatpush1.msra.mxu0 0.0
    %461 = vmatprep.subr.mxu0 0.0
    %462 = vmatpush1.msra.mxu0 0.0
    %463 = vmatprep.subr.mxu0 0.0
    %464 = vmatpush1.msra.mxu0 0.0
    %465 = vmatprep.subr.mxu0 0.0
    %466 = vmatpush1.msra.mxu0 0.0
    %467 = vmatprep.subr.mxu0 0.0
    %468 = vmatpush1.msra.mxu0 0.0
    %469 = vmatprep.subr.mxu0 0.0
    %470 = vmatpush1.msra.mxu0 0.0
    %471 = vmatprep.subr.mxu0 0.0
    %472 = vmatpush1.msra.mxu0 0.0
    %473 = vmatprep.subr.mxu0 0.0
    %474 = vmatpush1.msra.mxu0 0.0
    %475 = vmatprep.subr.mxu0 0.0
    %476 = vmatpush1.msra.mxu0 0.0
    %477 = vmatprep.subr.mxu0 0.0
    %478 = vmatpush1.msra.mxu0 0.0
    %479 = vmatprep.subr.mxu0 0.0
    %480 = vmatpush1.msra.mxu0 0.0
    %481 = vmatprep.subr.mxu0 0.0
    %482 = vmatpush1.msra.mxu0 0.0
    %483 = vmatprep.subr.mxu0 0.0
    %484 = vmatpush1.msra.mxu0 %v288
    %485 = vmatprep.subr.mxu0 0.0
    %486 = vmatpush1.msra.mxu0 %v287
    %487 = vmatprep.subr.mxu0 0.0
    %488 = vmatpush1.msra.mxu0 %v286
    %489 = vmatprep.subr.mxu0 0.0
    %490 = vmatpush1.msra.mxu0 %v285
    %491 = vmatprep.subr.mxu0 0.0
    %492 = vmatpush2.msra.mxu0 0.0
    %493 = vmatprep.subr.mxu0 0.0
    %494 = vmatpush2.msra.mxu0 0.0
    %495 = vmatprep.subr.mxu0 0.0
    %496 = vmatpush2.msra.mxu0 0.0
    %497 = vmatprep.subr.mxu0 0.0
    %498 = vmatpush2.msra.mxu0 0.0
    %499 = vmatprep.subr.mxu0 0.0
    %500 = vmatpush2.msra.mxu0 0.0
    %501 = vmatprep.subr.mxu0 0.0
    %502 = vmatpush2.msra.mxu0 0.0
    %503 = vmatprep.subr.mxu0 0.0
    %504 = vmatpush2.msra.mxu0 0.0
    %505 = vmatprep.subr.mxu0 0.0
    %506 = vmatpush2.msra.mxu0 0.0
    %507 = vmatprep.subr.mxu0 0.0
    %508 = vmatpush2.msra.mxu0 0.0
    %509 = vmatprep.subr.mxu0 0.0
    %510 = vmatpush2.msra.mxu0 0.0
    %511 = vmatprep.subr.mxu0 0.0
    %512 = vmatpush2.msra.mxu0 0.0
    %513 = vmatprep.subr.mxu0 0.0
    %514 = vmatpush2.msra.mxu0 0.0
    %515 = vmatprep.subr.mxu0 0.0
    %516 = vmatpush2.msra.mxu0 0.0
    %517 = vmatprep.subr.mxu0 0.0
    %518 = vmatpush2.msra.mxu0 0.0
    %519 = vmatprep.subr.mxu0 0.0
    %520 = vmatpush2.msra.mxu0 0.0
    %521 = vmatprep.subr.mxu0 0.0
    %522 = vmatpush2.msra.mxu0 0.0
    %523 = vmatprep.mubr.f32.mxu0 0.0
    %524 = vmatmul.mubr.f32.gmra.mxu0 %v386
    %v525 = vpop.f32.mrf.mxu0
    %v526 = vadd.f32 0.0, %v525
    %v527 = vpop.f32.mrf.mxu0
    %528 = vdwg.mxu0
    %v530 = vrot.slane %v526, 2
    %v532 = vadd.f32 %v383, %v530
    %v533 = vxor.u32 %v458, 2147483648
    %v534 = vmul.f32 %v533, 1.442695
    %v535 = vpow.pop %v534
    %v536 = vadd.f32 %v535, 1.0
    %v537 = vrcp.pop %v536
    %v538 = vmul.f32 1.0, %v537
    %v539 = vtanh.pop %v458
    %v540 = vmul.f32 %v538, 0.0
    %542 = vrot.lane.b32.xlu0 %v539, 64
    %v543 = vpop.permute.xlu0 %542
    %v545 = vmul.f32 %v538, %v543
    %547 = vrot.lane.b32.xlu0 %v545, 32
    %v548 = vpop.permute.xlu0 %547
    %v550 = vadd.f32 %v540, %v548
    %v551 = vtanh.pop %v550
    %553 = vrot.lane.b32.xlu0 %v551, 64
    %v554 = vpop.permute.xlu0 %553
    %v556 = vmul.f32 %v538, %v554
    %v557 = vxor.u32 %v532, 2147483648
    %v558 = vmul.f32 %v557, 1.442695
    %v559 = vpow.pop %v558
    %v560 = vadd.f32 %v559, 1.0
    %v561 = vrcp.pop %v560
    %v562 = vmul.f32 1.0, %v561
    %v563 = vtanh.pop %v532
    %v564 = vmul.f32 %v562, 0.0
    %566 = vrot.lane.b32.xlu0 %v563, 64
    %v567 = vpop.permute.xlu0 %566
    %v569 = vmul.f32 %v562, %v567
    %571 = vrot.lane.b32.xlu0 %v569, 32
    %v572 = vpop.permute.xlu0 %571
    %v574 = vadd.f32 %v564, %v572
    %v575 = vtanh.pop %v574
    %577 = vrot.lane.b32.xlu0 %v575, 64
    %v578 = vpop.permute.xlu0 %577
    %v580 = vmul.f32 %v562, %v578
    %582 = vrot.lane.b32.xlu0 %v556, 32
    %v583 = vpop.permute.xlu0 %582
    %v584 = vsel %vm301, %v583, 0
    %586 = vmatprep.subr.mxu0 0.0
    %587 = vmatpush1.msra.mxu0 0.0
    %588 = vmatprep.subr.mxu0 0.0
    %589 = vmatpush1.msra.mxu0 0.0
    %590 = vmatprep.subr.mxu0 0.0
    %591 = vmatpush1.msra.mxu0 0.0
    %592 = vmatprep.subr.mxu0 0.0
    %593 = vmatpush1.msra.mxu0 0.0
    %594 = vmatprep.subr.mxu0 0.0
    %595 = vmatpush1.msra.mxu0 0.0
    %596 = vmatprep.subr.mxu0 0.0
    %597 = vmatpush1.msra.mxu0 0.0
    %598 = vmatprep.subr.mxu0 0.0
    %599 = vmatpush1.msra.mxu0 0.0
    %600 = vmatprep.subr.mxu0 0.0
    %601 = vmatpush1.msra.mxu0 0.0
    %602 = vmatprep.subr.mxu0 0.0
    %603 = vmatpush1.msra.mxu0 0.0
    %604 = vmatprep.subr.mxu0 0.0
    %605 = vmatpush1.msra.mxu0 0.0
    %606 = vmatprep.subr.mxu0 0.0
    %607 = vmatpush1.msra.mxu0 0.0
    %608 = vmatprep.subr.mxu0 0.0
    %609 = vmatpush1.msra.mxu0 0.0
    %610 = vmatprep.subr.mxu0 0.0
    %611 = vmatpush1.msra.mxu0 %v284
    %612 = vmatprep.subr.mxu0 0.0
    %613 = vmatpush1.msra.mxu0 %v283
    %614 = vmatprep.subr.mxu0 0.0
    %615 = vmatpush1.msra.mxu0 %v282
    %616 = vmatprep.subr.mxu0 0.0
    %617 = vmatpush1.msra.mxu0 %v281
    %618 = vmatprep.subr.mxu0 0.0
    %619 = vmatpush2.msra.mxu0 0.0
    %620 = vmatprep.subr.mxu0 0.0
    %621 = vmatpush2.msra.mxu0 0.0
    %622 = vmatprep.subr.mxu0 0.0
    %623 = vmatpush2.msra.mxu0 0.0
    %624 = vmatprep.subr.mxu0 0.0
    %625 = vmatpush2.msra.mxu0 0.0
    %626 = vmatprep.subr.mxu0 0.0
    %627 = vmatpush2.msra.mxu0 0.0
    %628 = vmatprep.subr.mxu0 0.0
    %629 = vmatpush2.msra.mxu0 0.0
    %630 = vmatprep.subr.mxu0 0.0
    %631 = vmatpush2.msra.mxu0 0.0
    %632 = vmatprep.subr.mxu0 0.0
    %633 = vmatpush2.msra.mxu0 0.0
    %634 = vmatprep.subr.mxu0 0.0
    %635 = vmatpush2.msra.mxu0 0.0
    %636 = vmatprep.subr.mxu0 0.0
    %637 = vmatpush2.msra.mxu0 0.0
    %638 = vmatprep.subr.mxu0 0.0
    %639 = vmatpush2.msra.mxu0 0.0
    %640 = vmatprep.subr.mxu0 0.0
    %641 = vmatpush2.msra.mxu0 0.0
    %642 = vmatprep.subr.mxu0 0.0
    %643 = vmatpush2.msra.mxu0 0.0
    %644 = vmatprep.subr.mxu0 0.0
    %645 = vmatpush2.msra.mxu0 0.0
    %646 = vmatprep.subr.mxu0 0.0
    %647 = vmatpush2.msra.mxu0 0.0
    %648 = vmatprep.subr.mxu0 0.0
    %649 = vmatpush2.msra.mxu0 0.0
    %650 = vmatprep.mubr.f32.mxu0 0.0
    %651 = vmatmul.mubr.f32.gmra.mxu0 %v584
    %v652 = vpop.f32.mrf.mxu0
    %v653 = vadd.f32 0.0, %v652
    %v654 = vpop.f32.mrf.mxu0
    %655 = vdwg.mxu0
    %v657 = vrot.slane %v653, 6
    %v659 = vadd.f32 %v375, %v657
    %v661 = vrot.slane %v580, 6
    %662 = vrot.lane.b32.xlu0 %v661, 32
    %v663 = vpop.permute.xlu0 %662
    %v664 = vsel %vm301, %v663, 0
    %666 = vmatprep.subr.mxu0 0.0
    %667 = vmatpush1.msra.mxu0 0.0
    %668 = vmatprep.subr.mxu0 0.0
    %669 = vmatpush1.msra.mxu0 0.0
    %670 = vmatprep.subr.mxu0 0.0
    %671 = vmatpush1.msra.mxu0 0.0
    %672 = vmatprep.subr.mxu0 0.0
    %673 = vmatpush1.msra.mxu0 0.0
    %674 = vmatprep.subr.mxu0 0.0
    %675 = vmatpush1.msra.mxu0 0.0
    %676 = vmatprep.subr.mxu0 0.0
    %677 = vmatpush1.msra.mxu0 0.0
    %678 = vmatprep.subr.mxu0 0.0
    %679 = vmatpush1.msra.mxu0 0.0
    %680 = vmatprep.subr.mxu0 0.0
    %681 = vmatpush1.msra.mxu0 0.0
    %682 = vmatprep.subr.mxu0 0.0
    %683 = vmatpush1.msra.mxu0 0.0
    %684 = vmatprep.subr.mxu0 0.0
    %685 = vmatpush1.msra.mxu0 0.0
    %686 = vmatprep.subr.mxu0 0.0
    %687 = vmatpush1.msra.mxu0 0.0
    %688 = vmatprep.subr.mxu0 0.0
    %689 = vmatpush1.msra.mxu0 0.0
    %690 = vmatprep.subr.mxu0 0.0
    %691 = vmatpush1.msra.mxu0 %v288
    %692 = vmatprep.subr.mxu0 0.0
    %693 = vmatpush1.msra.mxu0 %v287
    %694 = vmatprep.subr.mxu0 0.0
    %695 = vmatpush1.msra.mxu0 %v286
    %696 = vmatprep.subr.mxu0 0.0
    %697 = vmatpush1.msra.mxu0 %v285
    %698 = vmatprep.subr.mxu0 0.0
    %699 = vmatpush2.msra.mxu0 0.0
    %700 = vmatprep.subr.mxu0 0.0
    %701 = vmatpush2.msra.mxu0 0.0
    %702 = vmatprep.subr.mxu0 0.0
    %703 = vmatpush2.msra.mxu0 0.0
    %704 = vmatprep.subr.mxu0 0.0
    %705 = vmatpush2.msra.mxu0 0.0
    %706 = vmatprep.subr.mxu0 0.0
    %707 = vmatpush2.msra.mxu0 0.0
    %708 = vmatprep.subr.mxu0 0.0
    %709 = vmatpush2.msra.mxu0 0.0
    %710 = vmatprep.subr.mxu0 0.0
    %711 = vmatpush2.msra.mxu0 0.0
    %712 = vmatprep.subr.mxu0 0.0
    %713 = vmatpush2.msra.mxu0 0.0
    %714 = vmatprep.subr.mxu0 0.0
    %715 = vmatpush2.msra.mxu0 0.0
    %716 = vmatprep.subr.mxu0 0.0
    %717 = vmatpush2.msra.mxu0 0.0
    %718 = vmatprep.subr.mxu0 0.0
    %719 = vmatpush2.msra.mxu0 0.0
    %720 = vmatprep.subr.mxu0 0.0
    %721 = vmatpush2.msra.mxu0 0.0
    %722 = vmatprep.subr.mxu0 0.0
    %723 = vmatpush2.msra.mxu0 0.0
    %724 = vmatprep.subr.mxu0 0.0
    %725 = vmatpush2.msra.mxu0 0.0
    %726 = vmatprep.subr.mxu0 0.0
    %727 = vmatpush2.msra.mxu0 0.0
    %728 = vmatprep.subr.mxu0 0.0
    %729 = vmatpush2.msra.mxu0 0.0
    %730 = vmatprep.mubr.f32.mxu0 0.0
    %731 = vmatmul.mubr.f32.gmra.mxu0 %v664
    %v732 = vpop.f32.mrf.mxu0
    %v733 = vadd.f32 0.0, %v732
    %v734 = vpop.f32.mrf.mxu0
    %735 = vdwg.mxu0
    %v737 = vrot.slane %v733, 4
    %v739 = vadd.f32 %v383, %v737
    %v740 = vxor.u32 %v659, 2147483648
    %v741 = vmul.f32 %v740, 1.442695
    %v742 = vpow.pop %v741
    %v743 = vadd.f32 %v742, 1.0
    %v744 = vrcp.pop %v743
    %v745 = vmul.f32 1.0, %v744
    %v746 = vtanh.pop %v659
    %v748 = vrot.slane %v550, 6
    %v750 = vmul.f32 %v745, %v748
    %752 = vrot.lane.b32.xlu0 %v746, 64
    %v753 = vpop.permute.xlu0 %752
    %v755 = vmul.f32 %v745, %v753
    %757 = vrot.lane.b32.xlu0 %v755, 32
    %v758 = vpop.permute.xlu0 %757
    %v760 = vadd.f32 %v750, %v758
    %v761 = vtanh.pop %v760
    %763 = vrot.lane.b32.xlu0 %v761, 64
    %v764 = vpop.permute.xlu0 %763
    %v766 = vmul.f32 %v745, %v764
    %v767 = vxor.u32 %v739, 2147483648
    %v768 = vmul.f32 %v767, 1.442695
    %v769 = vpow.pop %v768
    %v770 = vadd.f32 %v769, 1.0
    %v771 = vrcp.pop %v770
    %v772 = vmul.f32 1.0, %v771
    %v773 = vtanh.pop %v739
    %v775 = vrot.slane %v574, 2
    %v777 = vmul.f32 %v772, %v775
    %779 = vrot.lane.b32.xlu0 %v773, 64
    %v780 = vpop.permute.xlu0 %779
    %v782 = vmul.f32 %v772, %v780
    %784 = vrot.lane.b32.xlu0 %v782, 32
    %v785 = vpop.permute.xlu0 %784
    %v787 = vadd.f32 %v777, %v785
    %v788 = vtanh.pop %v787
    %790 = vrot.lane.b32.xlu0 %v788, 64
    %v791 = vpop.permute.xlu0 %790
    %v793 = vmul.f32 %v772, %v791
    %v795 = vrot.slane %v766, 2
    %796 = vrot.lane.b32.xlu0 %v795, 32
    %v797 = vpop.permute.xlu0 %796
    %v798 = vsel %vm301, %v797, 0
    %800 = vmatprep.subr.mxu0 0.0
    %801 = vmatpush1.msra.mxu0 0.0
    %802 = vmatprep.subr.mxu0 0.0
    %803 = vmatpush1.msra.mxu0 0.0
    %804 = vmatprep.subr.mxu0 0.0
    %805 = vmatpush1.msra.mxu0 0.0
    %806 = vmatprep.subr.mxu0 0.0
    %807 = vmatpush1.msra.mxu0 0.0
    %808 = vmatprep.subr.mxu0 0.0
    %809 = vmatpush1.msra.mxu0 0.0
    %810 = vmatprep.subr.mxu0 0.0
    %811 = vmatpush1.msra.mxu0 0.0
    %812 = vmatprep.subr.mxu0 0.0
    %813 = vmatpush1.msra.mxu0 0.0
    %814 = vmatprep.subr.mxu0 0.0
    %815 = vmatpush1.msra.mxu0 0.0
    %816 = vmatprep.subr.mxu0 0.0
    %817 = vmatpush1.msra.mxu0 0.0
    %818 = vmatprep.subr.mxu0 0.0
    %819 = vmatpush1.msra.mxu0 0.0
    %820 = vmatprep.subr.mxu0 0.0
    %821 = vmatpush1.msra.mxu0 0.0
    %822 = vmatprep.subr.mxu0 0.0
    %823 = vmatpush1.msra.mxu0 0.0
    %824 = vmatprep.subr.mxu0 0.0
    %825 = vmatpush1.msra.mxu0 %v284
    %826 = vmatprep.subr.mxu0 0.0
    %827 = vmatpush1.msra.mxu0 %v283
    %828 = vmatprep.subr.mxu0 0.0
    %829 = vmatpush1.msra.mxu0 %v282
    %830 = vmatprep.subr.mxu0 0.0
    %831 = vmatpush1.msra.mxu0 %v281
    %832 = vmatprep.subr.mxu0 0.0
    %833 = vmatpush2.msra.mxu0 0.0
    %834 = vmatprep.subr.mxu0 0.0
    %835 = vmatpush2.msra.mxu0 0.0
    %836 = vmatprep.subr.mxu0 0.0
    %837 = vmatpush2.msra.mxu0 0.0
    %838 = vmatprep.subr.mxu0 0.0
    %839 = vmatpush2.msra.mxu0 0.0
    %840 = vmatprep.subr.mxu0 0.0
    %841 = vmatpush2.msra.mxu0 0.0
    %842 = vmatprep.subr.mxu0 0.0
    %843 = vmatpush2.msra.mxu0 0.0
    %844 = vmatprep.subr.mxu0 0.0
    %845 = vmatpush2.msra.mxu0 0.0
    %846 = vmatprep.subr.mxu0 0.0
    %847 = vmatpush2.msra.mxu0 0.0
    %848 = vmatprep.subr.mxu0 0.0
    %849 = vmatpush2.msra.mxu0 0.0
    %850 = vmatprep.subr.mxu0 0.0
    %851 = vmatpush2.msra.mxu0 0.0
    %852 = vmatprep.subr.mxu0 0.0
    %853 = vmatpush2.msra.mxu0 0.0
    %854 = vmatprep.subr.mxu0 0.0
    %855 = vmatpush2.msra.mxu0 0.0
    %856 = vmatprep.subr.mxu0 0.0
    %857 = vmatpush2.msra.mxu0 0.0
    %858 = vmatprep.subr.mxu0 0.0
    %859 = vmatpush2.msra.mxu0 0.0
    %860 = vmatprep.subr.mxu0 0.0
    %861 = vmatpush2.msra.mxu0 0.0
    %862 = vmatprep.subr.mxu0 0.0
    %863 = vmatpush2.msra.mxu0 0.0
    %864 = vmatprep.mubr.f32.mxu0 0.0
    %865 = vmatmul.mubr.f32.gmra.mxu0 %v798
    %v866 = vpop.f32.mrf.mxu0
    %v867 = vadd.f32 0.0, %v866
    %v868 = vpop.f32.mrf.mxu0
    %869 = vdwg.mxu0
    %v871 = vrot.slane %v867, 4
    %v873 = vadd.f32 %v375, %v871
    %v875 = vrot.slane %v793, 4
    %876 = vrot.lane.b32.xlu0 %v875, 32
    %v877 = vpop.permute.xlu0 %876
    %v878 = vsel %vm301, %v877, 0
    %880 = vmatprep.subr.mxu0 0.0
    %881 = vmatpush1.msra.mxu0 0.0
    %882 = vmatprep.subr.mxu0 0.0
    %883 = vmatpush1.msra.mxu0 0.0
    %884 = vmatprep.subr.mxu0 0.0
    %885 = vmatpush1.msra.mxu0 0.0
    %886 = vmatprep.subr.mxu0 0.0
    %887 = vmatpush1.msra.mxu0 0.0
    %888 = vmatprep.subr.mxu0 0.0
    %889 = vmatpush1.msra.mxu0 0.0
    %890 = vmatprep.subr.mxu0 0.0
    %891 = vmatpush1.msra.mxu0 0.0
    %892 = vmatprep.subr.mxu0 0.0
    %893 = vmatpush1.msra.mxu0 0.0
    %894 = vmatprep.subr.mxu0 0.0
    %895 = vmatpush1.msra.mxu0 0.0
    %896 = vmatprep.subr.mxu0 0.0
    %897 = vmatpush1.msra.mxu0 0.0
    %898 = vmatprep.subr.mxu0 0.0
    %899 = vmatpush1.msra.mxu0 0.0
    %900 = vmatprep.subr.mxu0 0.0
    %901 = vmatpush1.msra.mxu0 0.0
    %902 = vmatprep.subr.mxu0 0.0
    %903 = vmatpush1.msra.mxu0 0.0
    %904 = vmatprep.subr.mxu0 0.0
    %905 = vmatpush1.msra.mxu0 %v288
    %906 = vmatprep.subr.mxu0 0.0
    %907 = vmatpush1.msra.mxu0 %v287
    %908 = vmatprep.subr.mxu0 0.0
    %909 = vmatpush1.msra.mxu0 %v286
    %910 = vmatprep.subr.mxu0 0.0
    %911 = vmatpush1.msra.mxu0 %v285
    %912 = vmatprep.subr.mxu0 0.0
    %913 = vmatpush2.msra.mxu0 0.0
    %914 = vmatprep.subr.mxu0 0.0
    %915 = vmatpush2.msra.mxu0 0.0
    %916 = vmatprep.subr.mxu0 0.0
    %917 = vmatpush2.msra.mxu0 0.0
    %918 = vmatprep.subr.mxu0 0.0
    %919 = vmatpush2.msra.mxu0 0.0
    %920 = vmatprep.subr.mxu0 0.0
    %921 = vmatpush2.msra.mxu0 0.0
    %922 = vmatprep.subr.mxu0 0.0
    %923 = vmatpush2.msra.mxu0 0.0
    %924 = vmatprep.subr.mxu0 0.0
    %925 = vmatpush2.msra.mxu0 0.0
    %926 = vmatprep.subr.mxu0 0.0
    %927 = vmatpush2.msra.mxu0 0.0
    %928 = vmatprep.subr.mxu0 0.0
    %929 = vmatpush2.msra.mxu0 0.0
    %930 = vmatprep.subr.mxu0 0.0
    %931 = vmatpush2.msra.mxu0 0.0
    %932 = vmatprep.subr.mxu0 0.0
    %933 = vmatpush2.msra.mxu0 0.0
    %934 = vmatprep.subr.mxu0 0.0
    %935 = vmatpush2.msra.mxu0 0.0
    %936 = vmatprep.subr.mxu0 0.0
    %937 = vmatpush2.msra.mxu0 0.0
    %938 = vmatprep.subr.mxu0 0.0
    %939 = vmatpush2.msra.mxu0 0.0
    %940 = vmatprep.subr.mxu0 0.0
    %941 = vmatpush2.msra.mxu0 0.0
    %942 = vmatprep.subr.mxu0 0.0
    %943 = vmatpush2.msra.mxu0 0.0
    %944 = vmatprep.mubr.f32.mxu0 0.0
    %945 = vmatmul.mubr.f32.gmra.mxu0 %v878
    %v946 = vpop.f32.mrf.mxu0
    %v947 = vadd.f32 0.0, %v946
    %v948 = vpop.f32.mrf.mxu0
    %949 = vdwg.mxu0
    %v951 = vrot.slane %v947, 6
    %v953 = vadd.f32 %v383, %v951
    %v954 = vxor.u32 %v873, 2147483648
    %v955 = vmul.f32 %v954, 1.442695
    %v956 = vpow.pop %v955
    %v957 = vadd.f32 %v956, 1.0
    %v958 = vrcp.pop %v957
    %v959 = vmul.f32 1.0, %v958
    %v960 = vtanh.pop %v873
    %v962 = vrot.slane %v760, 6
    %v964 = vmul.f32 %v959, %v962
    %966 = vrot.lane.b32.xlu0 %v960, 64
    %v967 = vpop.permute.xlu0 %966
    %v969 = vmul.f32 %v959, %v967
    %971 = vrot.lane.b32.xlu0 %v969, 32
    %v972 = vpop.permute.xlu0 %971
    %v974 = vadd.f32 %v964, %v972
    %v975 = vtanh.pop %v974
    %977 = vrot.lane.b32.xlu0 %v975, 64
    %v978 = vpop.permute.xlu0 %977
    %v980 = vmul.f32 %v959, %v978
    %v981 = vxor.u32 %v953, 2147483648
    %v982 = vmul.f32 %v981, 1.442695
    %v983 = vpow.pop %v982
    %v984 = vadd.f32 %v983, 1.0
    %v985 = vrcp.pop %v984
    %v986 = vmul.f32 1.0, %v985
    %v987 = vtanh.pop %v953
    %v989 = vrot.slane %v787, 2
    %v991 = vmul.f32 %v986, %v989
    %993 = vrot.lane.b32.xlu0 %v987, 64
    %v994 = vpop.permute.xlu0 %993
    %v996 = vmul.f32 %v986, %v994
    %998 = vrot.lane.b32.xlu0 %v996, 32
    %v999 = vpop.permute.xlu0 %998
    %v1001 = vadd.f32 %v991, %v999
    %v1002 = vtanh.pop %v1001
    %1004 = vrot.lane.b32.xlu0 %v1002, 64
    %v1005 = vpop.permute.xlu0 %1004
    %v1007 = vmul.f32 %v986, %v1005
    %v1009 = vrot.slane %v980, 4
    %1010 = vrot.lane.b32.xlu0 %v1009, 32
    %v1011 = vpop.permute.xlu0 %1010
    %v1012 = vsel %vm301, %v1011, 0
    %1014 = vmatprep.subr.mxu0 0.0
    %1015 = vmatpush1.msra.mxu0 0.0
    %1016 = vmatprep.subr.mxu0 0.0
    %1017 = vmatpush1.msra.mxu0 0.0
    %1018 = vmatprep.subr.mxu0 0.0
    %1019 = vmatpush1.msra.mxu0 0.0
    %1020 = vmatprep.subr.mxu0 0.0
    %1021 = vmatpush1.msra.mxu0 0.0
    %1022 = vmatprep.subr.mxu0 0.0
    %1023 = vmatpush1.msra.mxu0 0.0
    %1024 = vmatprep.subr.mxu0 0.0
    %1025 = vmatpush1.msra.mxu0 0.0
    %1026 = vmatprep.subr.mxu0 0.0
    %1027 = vmatpush1.msra.mxu0 0.0
    %1028 = vmatprep.subr.mxu0 0.0
    %1029 = vmatpush1.msra.mxu0 0.0
    %1030 = vmatprep.subr.mxu0 0.0
    %1031 = vmatpush1.msra.mxu0 0.0
    %1032 = vmatprep.subr.mxu0 0.0
    %1033 = vmatpush1.msra.mxu0 0.0
    %1034 = vmatprep.subr.mxu0 0.0
    %1035 = vmatpush1.msra.mxu0 0.0
    %1036 = vmatprep.subr.mxu0 0.0
    %1037 = vmatpush1.msra.mxu0 0.0
    %1038 = vmatprep.subr.mxu0 0.0
    %1039 = vmatpush1.msra.mxu0 %v284
    %1040 = vmatprep.subr.mxu0 0.0
    %1041 = vmatpush1.msra.mxu0 %v283
    %1042 = vmatprep.subr.mxu0 0.0
    %1043 = vmatpush1.msra.mxu0 %v282
    %1044 = vmatprep.subr.mxu0 0.0
    %1045 = vmatpush1.msra.mxu0 %v281
    %1046 = vmatprep.subr.mxu0 0.0
    %1047 = vmatpush2.msra.mxu0 0.0
    %1048 = vmatprep.subr.mxu0 0.0
    %1049 = vmatpush2.msra.mxu0 0.0
    %1050 = vmatprep.subr.mxu0 0.0
    %1051 = vmatpush2.msra.mxu0 0.0
    %1052 = vmatprep.subr.mxu0 0.0
    %1053 = vmatpush2.msra.mxu0 0.0
    %1054 = vmatprep.subr.mxu0 0.0
    %1055 = vmatpush2.msra.mxu0 0.0
    %1056 = vmatprep.subr.mxu0 0.0
    %1057 = vmatpush2.msra.mxu0 0.0
    %1058 = vmatprep.subr.mxu0 0.0
    %1059 = vmatpush2.msra.mxu0 0.0
    %1060 = vmatprep.subr.mxu0 0.0
    %1061 = vmatpush2.msra.mxu0 0.0
    %1062 = vmatprep.subr.mxu0 0.0
    %1063 = vmatpush2.msra.mxu0 0.0
    %1064 = vmatprep.subr.mxu0 0.0
    %1065 = vmatpush2.msra.mxu0 0.0
    %1066 = vmatprep.subr.mxu0 0.0
    %1067 = vmatpush2.msra.mxu0 0.0
    %1068 = vmatprep.subr.mxu0 0.0
    %1069 = vmatpush2.msra.mxu0 0.0
    %1070 = vmatprep.subr.mxu0 0.0
    %1071 = vmatpush2.msra.mxu0 0.0
    %1072 = vmatprep.subr.mxu0 0.0
    %1073 = vmatpush2.msra.mxu0 0.0
    %1074 = vmatprep.subr.mxu0 0.0
    %1075 = vmatpush2.msra.mxu0 0.0
    %1076 = vmatprep.subr.mxu0 0.0
    %1077 = vmatpush2.msra.mxu0 0.0
    %1078 = vmatprep.mubr.f32.mxu0 0.0
    %1079 = vmatmul.mubr.f32.gmra.mxu0 %v1012
    %v1080 = vpop.f32.mrf.mxu0
    %v1081 = vadd.f32 0.0, %v1080
    %v1082 = vpop.f32.mrf.mxu0
    %1083 = vdwg.mxu0
    %v1085 = vrot.slane %v1081, 2
    %v1087 = vadd.f32 %v375, %v1085
    %v1089 = vrot.slane %v1007, 2
    %1090 = vrot.lane.b32.xlu0 %v1089, 32
    %v1091 = vpop.permute.xlu0 %1090
    %v1092 = vsel %vm301, %v1091, 0
    %1094 = vmatprep.subr.mxu0 0.0
    %1095 = vmatpush1.msra.mxu0 0.0
    %1096 = vmatprep.subr.mxu0 0.0
    %1097 = vmatpush1.msra.mxu0 0.0
    %1098 = vmatprep.subr.mxu0 0.0
    %1099 = vmatpush1.msra.mxu0 0.0
    %1100 = vmatprep.subr.mxu0 0.0
    %1101 = vmatpush1.msra.mxu0 0.0
    %1102 = vmatprep.subr.mxu0 0.0
    %1103 = vmatpush1.msra.mxu0 0.0
    %1104 = vmatprep.subr.mxu0 0.0
    %1105 = vmatpush1.msra.mxu0 0.0
    %1106 = vmatprep.subr.mxu0 0.0
    %1107 = vmatpush1.msra.mxu0 0.0
    %1108 = vmatprep.subr.mxu0 0.0
    %1109 = vmatpush1.msra.mxu0 0.0
    %1110 = vmatprep.subr.mxu0 0.0
    %1111 = vmatpush1.msra.mxu0 0.0
    %1112 = vmatprep.subr.mxu0 0.0
    %1113 = vmatpush1.msra.mxu0 0.0
    %1114 = vmatprep.subr.mxu0 0.0
    %1115 = vmatpush1.msra.mxu0 0.0
    %1116 = vmatprep.subr.mxu0 0.0
    %1117 = vmatpush1.msra.mxu0 0.0
    %1118 = vmatprep.subr.mxu0 0.0
    %1119 = vmatpush1.msra.mxu0 %v288
    %1120 = vmatprep.subr.mxu0 0.0
    %1121 = vmatpush1.msra.mxu0 %v287
    %1122 = vmatprep.subr.mxu0 0.0
    %1123 = vmatpush1.msra.mxu0 %v286
    %1124 = vmatprep.subr.mxu0 0.0
    %1125 = vmatpush1.msra.mxu0 %v285
    %1126 = vmatprep.subr.mxu0 0.0
    %1127 = vmatpush2.msra.mxu0 0.0
    %1128 = vmatprep.subr.mxu0 0.0
    %1129 = vmatpush2.msra.mxu0 0.0
    %1130 = vmatprep.subr.mxu0 0.0
    %1131 = vmatpush2.msra.mxu0 0.0
    %1132 = vmatprep.subr.mxu0 0.0
    %1133 = vmatpush2.msra.mxu0 0.0
    %1134 = vmatprep.subr.mxu0 0.0
    %1135 = vmatpush2.msra.mxu0 0.0
    %1136 = vmatprep.subr.mxu0 0.0
    %1137 = vmatpush2.msra.mxu0 0.0
    %1138 = vmatprep.subr.mxu0 0.0
    %1139 = vmatpush2.msra.mxu0 0.0
    %1140 = vmatprep.subr.mxu0 0.0
    %1141 = vmatpush2.msra.mxu0 0.0
    %1142 = vmatprep.subr.mxu0 0.0
    %1143 = vmatpush2.msra.mxu0 0.0
    %1144 = vmatprep.subr.mxu0 0.0
    %1145 = vmatpush2.msra.mxu0 0.0
    %1146 = vmatprep.subr.mxu0 0.0
    %1147 = vmatpush2.msra.mxu0 0.0
    %1148 = vmatprep.subr.mxu0 0.0
    %1149 = vmatpush2.msra.mxu0 0.0
    %1150 = vmatprep.subr.mxu0 0.0
    %1151 = vmatpush2.msra.mxu0 0.0
    %1152 = vmatprep.subr.mxu0 0.0
    %1153 = vmatpush2.msra.mxu0 0.0
    %1154 = vmatprep.subr.mxu0 0.0
    %1155 = vmatpush2.msra.mxu0 0.0
    %1156 = vmatprep.subr.mxu0 0.0
    %1157 = vmatpush2.msra.mxu0 0.0
    %1158 = vmatprep.mubr.f32.mxu0 0.0
    %1159 = vmatmul.mubr.f32.gmra.mxu0 %v1092
    %v1160 = vpop.f32.mrf.mxu0
    %v1161 = vadd.f32 0.0, %v1160
    %v1162 = vpop.f32.mrf.mxu0
    %1163 = vdwg.mxu0
    %v1164 = vadd.f32 %v383, %v1161
    %v1165 = vxor.u32 %v1087, 2147483648
    %v1166 = vmul.f32 %v1165, 1.442695
    %v1167 = vpow.pop %v1166
    %v1168 = vadd.f32 %v1167, 1.0
    %v1169 = vrcp.pop %v1168
    %v1170 = vmul.f32 1.0, %v1169
    %v1171 = vtanh.pop %v1087
    %v1173 = vrot.slane %v974, 6
    %v1175 = vmul.f32 %v1170, %v1173
    %1177 = vrot.lane.b32.xlu0 %v1171, 64
    %v1178 = vpop.permute.xlu0 %1177
    %v1180 = vmul.f32 %v1170, %v1178
    %1182 = vrot.lane.b32.xlu0 %v1180, 32
    %v1183 = vpop.permute.xlu0 %1182
    %v1185 = vadd.f32 %v1175, %v1183
    %v1186 = vtanh.pop %v1185
    %1188 = vrot.lane.b32.xlu0 %v1186, 64
    %v1189 = vpop.permute.xlu0 %1188
    %v1191 = vmul.f32 %v1170, %v1189
    %v1192 = vxor.u32 %v1164, 2147483648
    %v1193 = vmul.f32 %v1192, 1.442695
    %v1194 = vpow.pop %v1193
    %v1195 = vadd.f32 %v1194, 1.0
    %v1196 = vrcp.pop %v1195
    %v1197 = vmul.f32 1.0, %v1196
    %v1198 = vtanh.pop %v1164
    %v1200 = vrot.slane %v1001, 2
    %v1202 = vmul.f32 %v1197, %v1200
    %1204 = vrot.lane.b32.xlu0 %v1198, 64
    %v1205 = vpop.permute.xlu0 %1204
    %v1207 = vmul.f32 %v1197, %v1205
    %1209 = vrot.lane.b32.xlu0 %v1207, 32
    %v1210 = vpop.permute.xlu0 %1209
    %v1212 = vadd.f32 %v1202, %v1210
    %v1213 = vtanh.pop %v1212
    %1215 = vrot.lane.b32.xlu0 %v1213, 64
    %v1216 = vpop.permute.xlu0 %1215
    %v1218 = vmul.f32 %v1197, %v1216
    %v1220 = vrot.slane %v1191, 6
    %1221 = vrot.lane.b32.xlu0 %v1220, 32
    %v1222 = vpop.permute.xlu0 %1221
    %v1223 = vsel %vm301, %v1222, 0
    %1225 = vmatprep.subr.mxu0 0.0
    %1226 = vmatpush1.msra.mxu0 0.0
    %1227 = vmatprep.subr.mxu0 0.0
    %1228 = vmatpush1.msra.mxu0 0.0
    %1229 = vmatprep.subr.mxu0 0.0
    %1230 = vmatpush1.msra.mxu0 0.0
    %1231 = vmatprep.subr.mxu0 0.0
    %1232 = vmatpush1.msra.mxu0 0.0
    %1233 = vmatprep.subr.mxu0 0.0
    %1234 = vmatpush1.msra.mxu0 0.0
    %1235 = vmatprep.subr.mxu0 0.0
    %1236 = vmatpush1.msra.mxu0 0.0
    %1237 = vmatprep.subr.mxu0 0.0
    %1238 = vmatpush1.msra.mxu0 0.0
    %1239 = vmatprep.subr.mxu0 0.0
    %1240 = vmatpush1.msra.mxu0 0.0
    %1241 = vmatprep.subr.mxu0 0.0
    %1242 = vmatpush1.msra.mxu0 0.0
    %1243 = vmatprep.subr.mxu0 0.0
    %1244 = vmatpush1.msra.mxu0 0.0
    %1245 = vmatprep.subr.mxu0 0.0
    %1246 = vmatpush1.msra.mxu0 0.0
    %1247 = vmatprep.subr.mxu0 0.0
    %1248 = vmatpush1.msra.mxu0 0.0
    %1249 = vmatprep.subr.mxu0 0.0
    %1250 = vmatpush1.msra.mxu0 %v284
    %1251 = vmatprep.subr.mxu0 0.0
    %1252 = vmatpush1.msra.mxu0 %v283
    %1253 = vmatprep.subr.mxu0 0.0
    %1254 = vmatpush1.msra.mxu0 %v282
    %1255 = vmatprep.subr.mxu0 0.0
    %1256 = vmatpush1.msra.mxu0 %v281
    %1257 = vmatprep.subr.mxu0 0.0
    %1258 = vmatpush2.msra.mxu0 0.0
    %1259 = vmatprep.subr.mxu0 0.0
    %1260 = vmatpush2.msra.mxu0 0.0
    %1261 = vmatprep.subr.mxu0 0.0
    %1262 = vmatpush2.msra.mxu0 0.0
    %1263 = vmatprep.subr.mxu0 0.0
    %1264 = vmatpush2.msra.mxu0 0.0
    %1265 = vmatprep.subr.mxu0 0.0
    %1266 = vmatpush2.msra.mxu0 0.0
    %1267 = vmatprep.subr.mxu0 0.0
    %1268 = vmatpush2.msra.mxu0 0.0
    %1269 = vmatprep.subr.mxu0 0.0
    %1270 = vmatpush2.msra.mxu0 0.0
    %1271 = vmatprep.subr.mxu0 0.0
    %1272 = vmatpush2.msra.mxu0 0.0
    %1273 = vmatprep.subr.mxu0 0.0
    %1274 = vmatpush2.msra.mxu0 0.0
    %1275 = vmatprep.subr.mxu0 0.0
    %1276 = vmatpush2.msra.mxu0 0.0
    %1277 = vmatprep.subr.mxu0 0.0
    %1278 = vmatpush2.msra.mxu0 0.0
    %1279 = vmatprep.subr.mxu0 0.0
    %1280 = vmatpush2.msra.mxu0 0.0
    %1281 = vmatprep.subr.mxu0 0.0
    %1282 = vmatpush2.msra.mxu0 0.0
    %1283 = vmatprep.subr.mxu0 0.0
    %1284 = vmatpush2.msra.mxu0 0.0
    %1285 = vmatprep.subr.mxu0 0.0
    %1286 = vmatpush2.msra.mxu0 0.0
    %1287 = vmatprep.subr.mxu0 0.0
    %1288 = vmatpush2.msra.mxu0 0.0
    %1289 = vmatprep.mubr.f32.mxu0 0.0
    %1290 = vmatmul.mubr.f32.gmra.mxu0 %v1223
    %v1291 = vpop.f32.mrf.mxu0
    %v1292 = vadd.f32 0.0, %v1291
    %v1293 = vpop.f32.mrf.mxu0
    %1294 = vdwg.mxu0
    %v1295 = vadd.f32 %v381, %v1292
    %1297 = vrot.lane.b32.xlu0 %v1218, 32
    %v1298 = vpop.permute.xlu0 %1297
    %v1299 = vsel %vm301, %v1298, 0
    %1301 = vmatprep.subr.mxu0 0.0
    %1302 = vmatpush1.msra.mxu0 0.0
    %1303 = vmatprep.subr.mxu0 0.0
    %1304 = vmatpush1.msra.mxu0 0.0
    %1305 = vmatprep.subr.mxu0 0.0
    %1306 = vmatpush1.msra.mxu0 0.0
    %1307 = vmatprep.subr.mxu0 0.0
    %1308 = vmatpush1.msra.mxu0 0.0
    %1309 = vmatprep.subr.mxu0 0.0
    %1310 = vmatpush1.msra.mxu0 0.0
    %1311 = vmatprep.subr.mxu0 0.0
    %1312 = vmatpush1.msra.mxu0 0.0
    %1313 = vmatprep.subr.mxu0 0.0
    %1314 = vmatpush1.msra.mxu0 0.0
    %1315 = vmatprep.subr.mxu0 0.0
    %1316 = vmatpush1.msra.mxu0 0.0
    %1317 = vmatprep.subr.mxu0 0.0
    %1318 = vmatpush1.msra.mxu0 0.0
    %1319 = vmatprep.subr.mxu0 0.0
    %1320 = vmatpush1.msra.mxu0 0.0
    %1321 = vmatprep.subr.mxu0 0.0
    %1322 = vmatpush1.msra.mxu0 0.0
    %1323 = vmatprep.subr.mxu0 0.0
    %1324 = vmatpush1.msra.mxu0 0.0
    %1325 = vmatprep.subr.mxu0 0.0
    %1326 = vmatpush1.msra.mxu0 %v288
    %1327 = vmatprep.subr.mxu0 0.0
    %1328 = vmatpush1.msra.mxu0 %v287
    %1329 = vmatprep.subr.mxu0 0.0
    %1330 = vmatpush1.msra.mxu0 %v286
    %1331 = vmatprep.subr.mxu0 0.0
    %1332 = vmatpush1.msra.mxu0 %v285
    %1333 = vmatprep.subr.mxu0 0.0
    %1334 = vmatpush2.msra.mxu0 0.0
    %1335 = vmatprep.subr.mxu0 0.0
    %1336 = vmatpush2.msra.mxu0 0.0
    %1337 = vmatprep.subr.mxu0 0.0
    %1338 = vmatpush2.msra.mxu0 0.0
    %1339 = vmatprep.subr.mxu0 0.0
    %1340 = vmatpush2.msra.mxu0 0.0
    %1341 = vmatprep.subr.mxu0 0.0
    %1342 = vmatpush2.msra.mxu0 0.0
    %1343 = vmatprep.subr.mxu0 0.0
    %1344 = vmatpush2.msra.mxu0 0.0
    %1345 = vmatprep.subr.mxu0 0.0
    %1346 = vmatpush2.msra.mxu0 0.0
    %1347 = vmatprep.subr.mxu0 0.0
    %1348 = vmatpush2.msra.mxu0 0.0
    %1349 = vmatprep.subr.mxu0 0.0
    %1350 = vmatpush2.msra.mxu0 0.0
    %1351 = vmatprep.subr.mxu0 0.0
    %1352 = vmatpush2.msra.mxu0 0.0
    %1353 = vmatprep.subr.mxu0 0.0
    %1354 = vmatpush2.msra.mxu0 0.0
    %1355 = vmatprep.subr.mxu0 0.0
    %1356 = vmatpush2.msra.mxu0 0.0
    %1357 = vmatprep.subr.mxu0 0.0
    %1358 = vmatpush2.msra.mxu0 0.0
    %1359 = vmatprep.subr.mxu0 0.0
    %1360 = vmatpush2.msra.mxu0 0.0
    %1361 = vmatprep.subr.mxu0 0.0
    %1362 = vmatpush2.msra.mxu0 0.0
    %1363 = vmatprep.subr.mxu0 0.0
    %1364 = vmatpush2.msra.mxu0 0.0
    %1365 = vmatprep.mubr.f32.mxu0 0.0
    %1366 = vmatmul.mubr.f32.gmra.mxu0 %v1299
    %v1367 = vpop.f32.mrf.mxu0
    %v1368 = vadd.f32 0.0, %v1367
    %v1369 = vpop.f32.mrf.mxu0
    %1370 = vdwg.mxu0
    %v1372 = vrot.slane %v1368, 2
    %v1374 = vadd.f32 %v377, %v1372
    %v1375 = vxor.u32 %v1295, 2147483648
    %v1376 = vmul.f32 %v1375, 1.442695
    %v1377 = vpow.pop %v1376
    %v1378 = vadd.f32 %v1377, 1.0
    %v1379 = vrcp.pop %v1378
    %v1380 = vmul.f32 1.0, %v1379
    %v1381 = vtanh.pop %v1295
    %v1383 = vrot.slane %v1185, 6
    %v1385 = vmul.f32 %v1380, %v1383
    %1387 = vrot.lane.b32.xlu0 %v1381, 64
    %v1388 = vpop.permute.xlu0 %1387
    %v1390 = vmul.f32 %v1380, %v1388
    %1392 = vrot.lane.b32.xlu0 %v1390, 32
    %v1393 = vpop.permute.xlu0 %1392
    %v1395 = vadd.f32 %v1385, %v1393
    %v1396 = vtanh.pop %v1395
    %1398 = vrot.lane.b32.xlu0 %v1396, 64
    %v1399 = vpop.permute.xlu0 %1398
    %v1401 = vmul.f32 %v1380, %v1399
    %v1402 = vxor.u32 %v1374, 2147483648
    %v1403 = vmul.f32 %v1402, 1.442695
    %v1404 = vpow.pop %v1403
    %v1405 = vadd.f32 %v1404, 1.0
    %v1406 = vrcp.pop %v1405
    %v1407 = vmul.f32 1.0, %v1406
    %v1408 = vtanh.pop %v1374
    %v1410 = vrot.slane %v1212, 2
    %v1412 = vmul.f32 %v1407, %v1410
    %1414 = vrot.lane.b32.xlu0 %v1408, 64
    %v1415 = vpop.permute.xlu0 %1414
    %v1417 = vmul.f32 %v1407, %v1415
    %1419 = vrot.lane.b32.xlu0 %v1417, 32
    %v1420 = vpop.permute.xlu0 %1419
    %v1422 = vadd.f32 %v1412, %v1420
    %v1423 = vtanh.pop %v1422
    %1425 = vrot.lane.b32.xlu0 %v1423, 64
    %v1426 = vpop.permute.xlu0 %1425
    %v1428 = vmul.f32 %v1407, %v1426
    %1430 = vrot.lane.b32.xlu0 %v1401, 32
    %v1431 = vpop.permute.xlu0 %1430
    %v1432 = vsel %vm301, %v1431, 0
    %1434 = vmatprep.subr.mxu0 0.0
    %1435 = vmatpush1.msra.mxu0 0.0
    %1436 = vmatprep.subr.mxu0 0.0
    %1437 = vmatpush1.msra.mxu0 0.0
    %1438 = vmatprep.subr.mxu0 0.0
    %1439 = vmatpush1.msra.mxu0 0.0
    %1440 = vmatprep.subr.mxu0 0.0
    %1441 = vmatpush1.msra.mxu0 0.0
    %1442 = vmatprep.subr.mxu0 0.0
    %1443 = vmatpush1.msra.mxu0 0.0
    %1444 = vmatprep.subr.mxu0 0.0
    %1445 = vmatpush1.msra.mxu0 0.0
    %1446 = vmatprep.subr.mxu0 0.0
    %1447 = vmatpush1.msra.mxu0 0.0
    %1448 = vmatprep.subr.mxu0 0.0
    %1449 = vmatpush1.msra.mxu0 0.0
    %1450 = vmatprep.subr.mxu0 0.0
    %1451 = vmatpush1.msra.mxu0 0.0
    %1452 = vmatprep.subr.mxu0 0.0
    %1453 = vmatpush1.msra.mxu0 0.0
    %1454 = vmatprep.subr.mxu0 0.0
    %1455 = vmatpush1.msra.mxu0 0.0
    %1456 = vmatprep.subr.mxu0 0.0
    %1457 = vmatpush1.msra.mxu0 0.0
    %1458 = vmatprep.subr.mxu0 0.0
    %1459 = vmatpush1.msra.mxu0 %v284
    %1460 = vmatprep.subr.mxu0 0.0
    %1461 = vmatpush1.msra.mxu0 %v283
    %1462 = vmatprep.subr.mxu0 0.0
    %1463 = vmatpush1.msra.mxu0 %v282
    %1464 = vmatprep.subr.mxu0 0.0
    %1465 = vmatpush1.msra.mxu0 %v281
    %1466 = vmatprep.subr.mxu0 0.0
    %1467 = vmatpush2.msra.mxu0 0.0
    %1468 = vmatprep.subr.mxu0 0.0
    %1469 = vmatpush2.msra.mxu0 0.0
    %1470 = vmatprep.subr.mxu0 0.0
    %1471 = vmatpush2.msra.mxu0 0.0
    %1472 = vmatprep.subr.mxu0 0.0
    %1473 = vmatpush2.msra.mxu0 0.0
    %1474 = vmatprep.subr.mxu0 0.0
    %1475 = vmatpush2.msra.mxu0 0.0
    %1476 = vmatprep.subr.mxu0 0.0
    %1477 = vmatpush2.msra.mxu0 0.0
    %1478 = vmatprep.subr.mxu0 0.0
    %1479 = vmatpush2.msra.mxu0 0.0
    %1480 = vmatprep.subr.mxu0 0.0
    %1481 = vmatpush2.msra.mxu0 0.0
    %1482 = vmatprep.subr.mxu0 0.0
    %1483 = vmatpush2.msra.mxu0 0.0
    %1484 = vmatprep.subr.mxu0 0.0
    %1485 = vmatpush2.msra.mxu0 0.0
    %1486 = vmatprep.subr.mxu0 0.0
    %1487 = vmatpush2.msra.mxu0 0.0
    %1488 = vmatprep.subr.mxu0 0.0
    %1489 = vmatpush2.msra.mxu0 0.0
    %1490 = vmatprep.subr.mxu0 0.0
    %1491 = vmatpush2.msra.mxu0 0.0
    %1492 = vmatprep.subr.mxu0 0.0
    %1493 = vmatpush2.msra.mxu0 0.0
    %1494 = vmatprep.subr.mxu0 0.0
    %1495 = vmatpush2.msra.mxu0 0.0
    %1496 = vmatprep.subr.mxu0 0.0
    %1497 = vmatpush2.msra.mxu0 0.0
    %1498 = vmatprep.mubr.f32.mxu0 0.0
    %1499 = vmatmul.mubr.f32.gmra.mxu0 %v1432
    %v1500 = vpop.f32.mrf.mxu0
    %v1501 = vadd.f32 0.0, %v1500
    %v1502 = vpop.f32.mrf.mxu0
    %1503 = vdwg.mxu0
    %v1505 = vrot.slane %v1501, 6
    %v1507 = vadd.f32 %v381, %v1505
    %v1509 = vrot.slane %v1428, 6
    %1510 = vrot.lane.b32.xlu0 %v1509, 32
    %v1511 = vpop.permute.xlu0 %1510
    %v1512 = vsel %vm301, %v1511, 0
    %1514 = vmatprep.subr.mxu0 0.0
    %1515 = vmatpush1.msra.mxu0 0.0
    %1516 = vmatprep.subr.mxu0 0.0
    %1517 = vmatpush1.msra.mxu0 0.0
    %1518 = vmatprep.subr.mxu0 0.0
    %1519 = vmatpush1.msra.mxu0 0.0
    %1520 = vmatprep.subr.mxu0 0.0
    %1521 = vmatpush1.msra.mxu0 0.0
    %1522 = vmatprep.subr.mxu0 0.0
    %1523 = vmatpush1.msra.mxu0 0.0
    %1524 = vmatprep.subr.mxu0 0.0
    %1525 = vmatpush1.msra.mxu0 0.0
    %1526 = vmatprep.subr.mxu0 0.0
    %1527 = vmatpush1.msra.mxu0 0.0
    %1528 = vmatprep.subr.mxu0 0.0
    %1529 = vmatpush1.msra.mxu0 0.0
    %1530 = vmatprep.subr.mxu0 0.0
    %1531 = vmatpush1.msra.mxu0 0.0
    %1532 = vmatprep.subr.mxu0 0.0
    %1533 = vmatpush1.msra.mxu0 0.0
    %1534 = vmatprep.subr.mxu0 0.0
    %1535 = vmatpush1.msra.mxu0 0.0
    %1536 = vmatprep.subr.mxu0 0.0
    %1537 = vmatpush1.msra.mxu0 0.0
    %1538 = vmatprep.subr.mxu0 0.0
    %1539 = vmatpush1.msra.mxu0 %v288
    %1540 = vmatprep.subr.mxu0 0.0
    %1541 = vmatpush1.msra.mxu0 %v287
    %1542 = vmatprep.subr.mxu0 0.0
    %1543 = vmatpush1.msra.mxu0 %v286
    %1544 = vmatprep.subr.mxu0 0.0
    %1545 = vmatpush1.msra.mxu0 %v285
    %1546 = vmatprep.subr.mxu0 0.0
    %1547 = vmatpush2.msra.mxu0 0.0
    %1548 = vmatprep.subr.mxu0 0.0
    %1549 = vmatpush2.msra.mxu0 0.0
    %1550 = vmatprep.subr.mxu0 0.0
    %1551 = vmatpush2.msra.mxu0 0.0
    %1552 = vmatprep.subr.mxu0 0.0
    %1553 = vmatpush2.msra.mxu0 0.0
    %1554 = vmatprep.subr.mxu0 0.0
    %1555 = vmatpush2.msra.mxu0 0.0
    %1556 = vmatprep.subr.mxu0 0.0
    %1557 = vmatpush2.msra.mxu0 0.0
    %1558 = vmatprep.subr.mxu0 0.0
    %1559 = vmatpush2.msra.mxu0 0.0
    %1560 = vmatprep.subr.mxu0 0.0
    %1561 = vmatpush2.msra.mxu0 0.0
    %1562 = vmatprep.subr.mxu0 0.0
    %1563 = vmatpush2.msra.mxu0 0.0
    %1564 = vmatprep.subr.mxu0 0.0
    %1565 = vmatpush2.msra.mxu0 0.0
    %1566 = vmatprep.subr.mxu0 0.0
    %1567 = vmatpush2.msra.mxu0 0.0
    %1568 = vmatprep.subr.mxu0 0.0
    %1569 = vmatpush2.msra.mxu0 0.0
    %1570 = vmatprep.subr.mxu0 0.0
    %1571 = vmatpush2.msra.mxu0 0.0
    %1572 = vmatprep.subr.mxu0 0.0
    %1573 = vmatpush2.msra.mxu0 0.0
    %1574 = vmatprep.subr.mxu0 0.0
    %1575 = vmatpush2.msra.mxu0 0.0
    %1576 = vmatprep.subr.mxu0 0.0
    %1577 = vmatpush2.msra.mxu0 0.0
    %1578 = vmatprep.mubr.f32.mxu0 0.0
    %1579 = vmatmul.mubr.f32.gmra.mxu0 %v1512
    %v1580 = vpop.f32.mrf.mxu0
    %v1581 = vadd.f32 0.0, %v1580
    %v1582 = vpop.f32.mrf.mxu0
    %1583 = vdwg.mxu0
    %v1585 = vrot.slane %v1581, 4
    %v1587 = vadd.f32 %v377, %v1585
    %v1588 = vxor.u32 %v1507, 2147483648
    %v1589 = vmul.f32 %v1588, 1.442695
    %v1590 = vpow.pop %v1589
    %v1591 = vadd.f32 %v1590, 1.0
    %v1592 = vrcp.pop %v1591
    %v1593 = vmul.f32 1.0, %v1592
    %v1594 = vtanh.pop %v1507
    %v1596 = vrot.slane %v1395, 6
    %v1598 = vmul.f32 %v1593, %v1596
    %1600 = vrot.lane.b32.xlu0 %v1594, 64
    %v1601 = vpop.permute.xlu0 %1600
    %v1603 = vmul.f32 %v1593, %v1601
    %1605 = vrot.lane.b32.xlu0 %v1603, 32
    %v1606 = vpop.permute.xlu0 %1605
    %v1608 = vadd.f32 %v1598, %v1606
    %v1609 = vtanh.pop %v1608
    %1611 = vrot.lane.b32.xlu0 %v1609, 64
    %v1612 = vpop.permute.xlu0 %1611
    %v1614 = vmul.f32 %v1593, %v1612
    %v1615 = vxor.u32 %v1587, 2147483648
    %v1616 = vmul.f32 %v1615, 1.442695
    %v1617 = vpow.pop %v1616
    %v1618 = vadd.f32 %v1617, 1.0
    %v1619 = vrcp.pop %v1618
    %v1620 = vmul.f32 1.0, %v1619
    %v1621 = vtanh.pop %v1587
    %v1623 = vrot.slane %v1422, 2
    %v1625 = vmul.f32 %v1620, %v1623
    %1627 = vrot.lane.b32.xlu0 %v1621, 64
    %v1628 = vpop.permute.xlu0 %1627
    %v1630 = vmul.f32 %v1620, %v1628
    %1632 = vrot.lane.b32.xlu0 %v1630, 32
    %v1633 = vpop.permute.xlu0 %1632
    %v1635 = vadd.f32 %v1625, %v1633
    %v1636 = vtanh.pop %v1635
    %1638 = vrot.lane.b32.xlu0 %v1636, 64
    %v1639 = vpop.permute.xlu0 %1638
    %v1641 = vmul.f32 %v1620, %v1639
    %v1643 = vrot.slane %v1614, 2
    %1644 = vrot.lane.b32.xlu0 %v1643, 32
    %v1645 = vpop.permute.xlu0 %1644
    %v1646 = vsel %vm301, %v1645, 0
    %1648 = vmatprep.subr.mxu0 0.0
    %1649 = vmatpush1.msra.mxu0 0.0
    %1650 = vmatprep.subr.mxu0 0.0
    %1651 = vmatpush1.msra.mxu0 0.0
    %1652 = vmatprep.subr.mxu0 0.0
    %1653 = vmatpush1.msra.mxu0 0.0
    %1654 = vmatprep.subr.mxu0 0.0
    %1655 = vmatpush1.msra.mxu0 0.0
    %1656 = vmatprep.subr.mxu0 0.0
    %1657 = vmatpush1.msra.mxu0 0.0
    %1658 = vmatprep.subr.mxu0 0.0
    %1659 = vmatpush1.msra.mxu0 0.0
    %1660 = vmatprep.subr.mxu0 0.0
    %1661 = vmatpush1.msra.mxu0 0.0
    %1662 = vmatprep.subr.mxu0 0.0
    %1663 = vmatpush1.msra.mxu0 0.0
    %1664 = vmatprep.subr.mxu0 0.0
    %1665 = vmatpush1.msra.mxu0 0.0
    %1666 = vmatprep.subr.mxu0 0.0
    %1667 = vmatpush1.msra.mxu0 0.0
    %1668 = vmatprep.subr.mxu0 0.0
    %1669 = vmatpush1.msra.mxu0 0.0
    %1670 = vmatprep.subr.mxu0 0.0
    %1671 = vmatpush1.msra.mxu0 0.0
    %1672 = vmatprep.subr.mxu0 0.0
    %1673 = vmatpush1.msra.mxu0 %v284
    %1674 = vmatprep.subr.mxu0 0.0
    %1675 = vmatpush1.msra.mxu0 %v283
    %1676 = vmatprep.subr.mxu0 0.0
    %1677 = vmatpush1.msra.mxu0 %v282
    %1678 = vmatprep.subr.mxu0 0.0
    %1679 = vmatpush1.msra.mxu0 %v281
    %1680 = vmatprep.subr.mxu0 0.0
    %1681 = vmatpush2.msra.mxu0 0.0
    %1682 = vmatprep.subr.mxu0 0.0
    %1683 = vmatpush2.msra.mxu0 0.0
    %1684 = vmatprep.subr.mxu0 0.0
    %1685 = vmatpush2.msra.mxu0 0.0
    %1686 = vmatprep.subr.mxu0 0.0
    %1687 = vmatpush2.msra.mxu0 0.0
    %1688 = vmatprep.subr.mxu0 0.0
    %1689 = vmatpush2.msra.mxu0 0.0
    %1690 = vmatprep.subr.mxu0 0.0
    %1691 = vmatpush2.msra.mxu0 0.0
    %1692 = vmatprep.subr.mxu0 0.0
    %1693 = vmatpush2.msra.mxu0 0.0
    %1694 = vmatprep.subr.mxu0 0.0
    %1695 = vmatpush2.msra.mxu0 0.0
    %1696 = vmatprep.subr.mxu0 0.0
    %1697 = vmatpush2.msra.mxu0 0.0
    %1698 = vmatprep.subr.mxu0 0.0
    %1699 = vmatpush2.msra.mxu0 0.0
    %1700 = vmatprep.subr.mxu0 0.0
    %1701 = vmatpush2.msra.mxu0 0.0
    %1702 = vmatprep.subr.mxu0 0.0
    %1703 = vmatpush2.msra.mxu0 0.0
    %1704 = vmatprep.subr.mxu0 0.0
    %1705 = vmatpush2.msra.mxu0 0.0
    %1706 = vmatprep.subr.mxu0 0.0
    %1707 = vmatpush2.msra.mxu0 0.0
    %1708 = vmatprep.subr.mxu0 0.0
    %1709 = vmatpush2.msra.mxu0 0.0
    %1710 = vmatprep.subr.mxu0 0.0
    %1711 = vmatpush2.msra.mxu0 0.0
    %1712 = vmatprep.mubr.f32.mxu0 0.0
    %1713 = vmatmul.mubr.f32.gmra.mxu0 %v1646
    %v1714 = vpop.f32.mrf.mxu0
    %v1715 = vadd.f32 0.0, %v1714
    %v1716 = vpop.f32.mrf.mxu0
    %1717 = vdwg.mxu0
    %v1719 = vrot.slane %v1715, 4
    %v1721 = vadd.f32 %v381, %v1719
    %v1723 = vrot.slane %v1641, 4
    %1724 = vrot.lane.b32.xlu0 %v1723, 32
    %v1725 = vpop.permute.xlu0 %1724
    %v1726 = vsel %vm301, %v1725, 0
    %1728 = vmatprep.subr.mxu0 0.0
    %1729 = vmatpush1.msra.mxu0 0.0
    %1730 = vmatprep.subr.mxu0 0.0
    %1731 = vmatpush1.msra.mxu0 0.0
    %1732 = vmatprep.subr.mxu0 0.0
    %1733 = vmatpush1.msra.mxu0 0.0
    %1734 = vmatprep.subr.mxu0 0.0
    %1735 = vmatpush1.msra.mxu0 0.0
    %1736 = vmatprep.subr.mxu0 0.0
    %1737 = vmatpush1.msra.mxu0 0.0
    %1738 = vmatprep.subr.mxu0 0.0
    %1739 = vmatpush1.msra.mxu0 0.0
    %1740 = vmatprep.subr.mxu0 0.0
    %1741 = vmatpush1.msra.mxu0 0.0
    %1742 = vmatprep.subr.mxu0 0.0
    %1743 = vmatpush1.msra.mxu0 0.0
    %1744 = vmatprep.subr.mxu0 0.0
    %1745 = vmatpush1.msra.mxu0 0.0
    %1746 = vmatprep.subr.mxu0 0.0
    %1747 = vmatpush1.msra.mxu0 0.0
    %1748 = vmatprep.subr.mxu0 0.0
    %1749 = vmatpush1.msra.mxu0 0.0
    %1750 = vmatprep.subr.mxu0 0.0
    %1751 = vmatpush1.msra.mxu0 0.0
    %1752 = vmatprep.subr.mxu0 0.0
    %1753 = vmatpush1.msra.mxu0 %v288
    %1754 = vmatprep.subr.mxu0 0.0
    %1755 = vmatpush1.msra.mxu0 %v287
    %1756 = vmatprep.subr.mxu0 0.0
    %1757 = vmatpush1.msra.mxu0 %v286
    %1758 = vmatprep.subr.mxu0 0.0
    %1759 = vmatpush1.msra.mxu0 %v285
    %1760 = vmatprep.subr.mxu0 0.0
    %1761 = vmatpush2.msra.mxu0 0.0
    %1762 = vmatprep.subr.mxu0 0.0
    %1763 = vmatpush2.msra.mxu0 0.0
    %1764 = vmatprep.subr.mxu0 0.0
    %1765 = vmatpush2.msra.mxu0 0.0
    %1766 = vmatprep.subr.mxu0 0.0
    %1767 = vmatpush2.msra.mxu0 0.0
    %1768 = vmatprep.subr.mxu0 0.0
    %1769 = vmatpush2.msra.mxu0 0.0
    %1770 = vmatprep.subr.mxu0 0.0
    %1771 = vmatpush2.msra.mxu0 0.0
    %1772 = vmatprep.subr.mxu0 0.0
    %1773 = vmatpush2.msra.mxu0 0.0
    %1774 = vmatprep.subr.mxu0 0.0
    %1775 = vmatpush2.msra.mxu0 0.0
    %1776 = vmatprep.subr.mxu0 0.0
    %1777 = vmatpush2.msra.mxu0 0.0
    %1778 = vmatprep.subr.mxu0 0.0
    %1779 = vmatpush2.msra.mxu0 0.0
    %1780 = vmatprep.subr.mxu0 0.0
    %1781 = vmatpush2.msra.mxu0 0.0
    %1782 = vmatprep.subr.mxu0 0.0
    %1783 = vmatpush2.msra.mxu0 0.0
    %1784 = vmatprep.subr.mxu0 0.0
    %1785 = vmatpush2.msra.mxu0 0.0
    %1786 = vmatprep.subr.mxu0 0.0
    %1787 = vmatpush2.msra.mxu0 0.0
    %1788 = vmatprep.subr.mxu0 0.0
    %1789 = vmatpush2.msra.mxu0 0.0
    %1790 = vmatprep.subr.mxu0 0.0
    %1791 = vmatpush2.msra.mxu0 0.0
    %1792 = vmatprep.mubr.f32.mxu0 0.0
    %1793 = vmatmul.mubr.f32.gmra.mxu0 %v1726
    %v1794 = vpop.f32.mrf.mxu0
    %v1795 = vadd.f32 0.0, %v1794
    %v1796 = vpop.f32.mrf.mxu0
    %1797 = vdwg.mxu0
    %v1799 = vrot.slane %v1795, 6
    %v1801 = vadd.f32 %v377, %v1799
    %v1802 = vxor.u32 %v1721, 2147483648
    %v1803 = vmul.f32 %v1802, 1.442695
    %v1804 = vpow.pop %v1803
    %v1805 = vadd.f32 %v1804, 1.0
    %v1806 = vrcp.pop %v1805
    %v1807 = vmul.f32 1.0, %v1806
    %v1808 = vtanh.pop %v1721
    %v1810 = vrot.slane %v1608, 6
    %v1812 = vmul.f32 %v1807, %v1810
    %1814 = vrot.lane.b32.xlu0 %v1808, 64
    %v1815 = vpop.permute.xlu0 %1814
    %v1817 = vmul.f32 %v1807, %v1815
    %1819 = vrot.lane.b32.xlu0 %v1817, 32
    %v1820 = vpop.permute.xlu0 %1819
    %v1822 = vadd.f32 %v1812, %v1820
    %v1823 = vtanh.pop %v1822
    %1825 = vrot.lane.b32.xlu0 %v1823, 64
    %v1826 = vpop.permute.xlu0 %1825
    %v1828 = vmul.f32 %v1807, %v1826
    %v1829 = vxor.u32 %v1801, 2147483648
    %v1830 = vmul.f32 %v1829, 1.442695
    %v1831 = vpow.pop %v1830
    %v1832 = vadd.f32 %v1831, 1.0
    %v1833 = vrcp.pop %v1832
    %v1834 = vmul.f32 1.0, %v1833
    %v1835 = vtanh.pop %v1801
    %v1837 = vrot.slane %v1635, 2
    %v1839 = vmul.f32 %v1834, %v1837
    %1841 = vrot.lane.b32.xlu0 %v1835, 64
    %v1842 = vpop.permute.xlu0 %1841
    %v1844 = vmul.f32 %v1834, %v1842
    %1846 = vrot.lane.b32.xlu0 %v1844, 32
    %v1847 = vpop.permute.xlu0 %1846
    %v1849 = vadd.f32 %v1839, %v1847
    %v1850 = vtanh.pop %v1849
    %1852 = vrot.lane.b32.xlu0 %v1850, 64
    %v1853 = vpop.permute.xlu0 %1852
    %v1855 = vmul.f32 %v1834, %v1853
    %v1857 = vrot.slane %v1828, 4
    %1858 = vrot.lane.b32.xlu0 %v1857, 32
    %v1859 = vpop.permute.xlu0 %1858
    %v1860 = vsel %vm301, %v1859, 0
    %1862 = vmatprep.subr.mxu0 0.0
    %1863 = vmatpush1.msra.mxu0 0.0
    %1864 = vmatprep.subr.mxu0 0.0
    %1865 = vmatpush1.msra.mxu0 0.0
    %1866 = vmatprep.subr.mxu0 0.0
    %1867 = vmatpush1.msra.mxu0 0.0
    %1868 = vmatprep.subr.mxu0 0.0
    %1869 = vmatpush1.msra.mxu0 0.0
    %1870 = vmatprep.subr.mxu0 0.0
    %1871 = vmatpush1.msra.mxu0 0.0
    %1872 = vmatprep.subr.mxu0 0.0
    %1873 = vmatpush1.msra.mxu0 0.0
    %1874 = vmatprep.subr.mxu0 0.0
    %1875 = vmatpush1.msra.mxu0 0.0
    %1876 = vmatprep.subr.mxu0 0.0
    %1877 = vmatpush1.msra.mxu0 0.0
    %1878 = vmatprep.subr.mxu0 0.0
    %1879 = vmatpush1.msra.mxu0 0.0
    %1880 = vmatprep.subr.mxu0 0.0
    %1881 = vmatpush1.msra.mxu0 0.0
    %1882 = vmatprep.subr.mxu0 0.0
    %1883 = vmatpush1.msra.mxu0 0.0
    %1884 = vmatprep.subr.mxu0 0.0
    %1885 = vmatpush1.msra.mxu0 0.0
    %1886 = vmatprep.subr.mxu0 0.0
    %1887 = vmatpush1.msra.mxu0 %v284
    %1888 = vmatprep.subr.mxu0 0.0
    %1889 = vmatpush1.msra.mxu0 %v283
    %1890 = vmatprep.subr.mxu0 0.0
    %1891 = vmatpush1.msra.mxu0 %v282
    %1892 = vmatprep.subr.mxu0 0.0
    %1893 = vmatpush1.msra.mxu0 %v281
    %1894 = vmatprep.subr.mxu0 0.0
    %1895 = vmatpush2.msra.mxu0 0.0
    %1896 = vmatprep.subr.mxu0 0.0
    %1897 = vmatpush2.msra.mxu0 0.0
    %1898 = vmatprep.subr.mxu0 0.0
    %1899 = vmatpush2.msra.mxu0 0.0
    %1900 = vmatprep.subr.mxu0 0.0
    %1901 = vmatpush2.msra.mxu0 0.0
    %1902 = vmatprep.subr.mxu0 0.0
    %1903 = vmatpush2.msra.mxu0 0.0
    %1904 = vmatprep.subr.mxu0 0.0
    %1905 = vmatpush2.msra.mxu0 0.0
    %1906 = vmatprep.subr.mxu0 0.0
    %1907 = vmatpush2.msra.mxu0 0.0
    %1908 = vmatprep.subr.mxu0 0.0
    %1909 = vmatpush2.msra.mxu0 0.0
    %1910 = vmatprep.subr.mxu0 0.0
    %1911 = vmatpush2.msra.mxu0 0.0
    %1912 = vmatprep.subr.mxu0 0.0
    %1913 = vmatpush2.msra.mxu0 0.0
    %1914 = vmatprep.subr.mxu0 0.0
    %1915 = vmatpush2.msra.mxu0 0.0
    %1916 = vmatprep.subr.mxu0 0.0
    %1917 = vmatpush2.msra.mxu0 0.0
    %1918 = vmatprep.subr.mxu0 0.0
    %1919 = vmatpush2.msra.mxu0 0.0
    %1920 = vmatprep.subr.mxu0 0.0
    %1921 = vmatpush2.msra.mxu0 0.0
    %1922 = vmatprep.subr.mxu0 0.0
    %1923 = vmatpush2.msra.mxu0 0.0
    %1924 = vmatprep.subr.mxu0 0.0
    %1925 = vmatpush2.msra.mxu0 0.0
    %1926 = vmatprep.mubr.f32.mxu0 0.0
    %1927 = vmatmul.mubr.f32.gmra.mxu0 %v1860
    %v1928 = vpop.f32.mrf.mxu0
    %v1929 = vadd.f32 0.0, %v1928
    %v1930 = vpop.f32.mrf.mxu0
    %1931 = vdwg.mxu0
    %v1933 = vrot.slane %v1929, 2
    %v1935 = vadd.f32 %v381, %v1933
    %v1937 = vrot.slane %v1855, 2
    %1938 = vrot.lane.b32.xlu0 %v1937, 32
    %v1939 = vpop.permute.xlu0 %1938
    %v1940 = vsel %vm301, %v1939, 0
    %1942 = vmatprep.subr.mxu0 0.0
    %1943 = vmatpush1.msra.mxu0 0.0
    %1944 = vmatprep.subr.mxu0 0.0
    %1945 = vmatpush1.msra.mxu0 0.0
    %1946 = vmatprep.subr.mxu0 0.0
    %1947 = vmatpush1.msra.mxu0 0.0
    %1948 = vmatprep.subr.mxu0 0.0
    %1949 = vmatpush1.msra.mxu0 0.0
    %1950 = vmatprep.subr.mxu0 0.0
    %1951 = vmatpush1.msra.mxu0 0.0
    %1952 = vmatprep.subr.mxu0 0.0
    %1953 = vmatpush1.msra.mxu0 0.0
    %1954 = vmatprep.subr.mxu0 0.0
    %1955 = vmatpush1.msra.mxu0 0.0
    %1956 = vmatprep.subr.mxu0 0.0
    %1957 = vmatpush1.msra.mxu0 0.0
    %1958 = vmatprep.subr.mxu0 0.0
    %1959 = vmatpush1.msra.mxu0 0.0
    %1960 = vmatprep.subr.mxu0 0.0
    %1961 = vmatpush1.msra.mxu0 0.0
    %1962 = vmatprep.subr.mxu0 0.0
    %1963 = vmatpush1.msra.mxu0 0.0
    %1964 = vmatprep.subr.mxu0 0.0
    %1965 = vmatpush1.msra.mxu0 0.0
    %1966 = vmatprep.subr.mxu0 0.0
    %1967 = vmatpush1.msra.mxu0 %v288
    %1968 = vmatprep.subr.mxu0 0.0
    %1969 = vmatpush1.msra.mxu0 %v287
    %1970 = vmatprep.subr.mxu0 0.0
    %1971 = vmatpush1.msra.mxu0 %v286
    %1972 = vmatprep.subr.mxu0 0.0
    %1973 = vmatpush1.msra.mxu0 %v285
    %1974 = vmatprep.subr.mxu0 0.0
    %1975 = vmatpush2.msra.mxu0 0.0
    %1976 = vmatprep.subr.mxu0 0.0
    %1977 = vmatpush2.msra.mxu0 0.0
    %1978 = vmatprep.subr.mxu0 0.0
    %1979 = vmatpush2.msra.mxu0 0.0
    %1980 = vmatprep.subr.mxu0 0.0
    %1981 = vmatpush2.msra.mxu0 0.0
    %1982 = vmatprep.subr.mxu0 0.0
    %1983 = vmatpush2.msra.mxu0 0.0
    %1984 = vmatprep.subr.mxu0 0.0
    %1985 = vmatpush2.msra.mxu0 0.0
    %1986 = vmatprep.subr.mxu0 0.0
    %1987 = vmatpush2.msra.mxu0 0.0
    %1988 = vmatprep.subr.mxu0 0.0
    %1989 = vmatpush2.msra.mxu0 0.0
    %1990 = vmatprep.subr.mxu0 0.0
    %1991 = vmatpush2.msra.mxu0 0.0
    %1992 = vmatprep.subr.mxu0 0.0
    %1993 = vmatpush2.msra.mxu0 0.0
    %1994 = vmatprep.subr.mxu0 0.0
    %1995 = vmatpush2.msra.mxu0 0.0
    %1996 = vmatprep.subr.mxu0 0.0
    %1997 = vmatpush2.msra.mxu0 0.0
    %1998 = vmatprep.subr.mxu0 0.0
    %1999 = vmatpush2.msra.mxu0 0.0
    %2000 = vmatprep.subr.mxu0 0.0
    %2001 = vmatpush2.msra.mxu0 0.0
    %2002 = vmatprep.subr.mxu0 0.0
    %2003 = vmatpush2.msra.mxu0 0.0
    %2004 = vmatprep.subr.mxu0 0.0
    %2005 = vmatpush2.msra.mxu0 0.0
    %2006 = vmatprep.mubr.f32.mxu0 0.0
    %2007 = vmatmul.mubr.f32.gmra.mxu0 %v1940
    %v2008 = vpop.f32.mrf.mxu0
    %v2009 = vadd.f32 0.0, %v2008
    %v2010 = vpop.f32.mrf.mxu0
    %2011 = vdwg.mxu0
    %v2012 = vadd.f32 %v377, %v2009
    %v2013 = vxor.u32 %v1935, 2147483648
    %v2014 = vmul.f32 %v2013, 1.442695
    %v2015 = vpow.pop %v2014
    %v2016 = vadd.f32 %v2015, 1.0
    %v2017 = vrcp.pop %v2016
    %v2018 = vmul.f32 1.0, %v2017
    %v2019 = vtanh.pop %v1935
    %v2021 = vrot.slane %v1822, 6
    %v2023 = vmul.f32 %v2018, %v2021
    %2025 = vrot.lane.b32.xlu0 %v2019, 64
    %v2026 = vpop.permute.xlu0 %2025
    %v2028 = vmul.f32 %v2018, %v2026
    %2030 = vrot.lane.b32.xlu0 %v2028, 32
    %v2031 = vpop.permute.xlu0 %2030
    %v2033 = vadd.f32 %v2023, %v2031
    %v2034 = vtanh.pop %v2033
    %2036 = vrot.lane.b32.xlu0 %v2034, 64
    %v2037 = vpop.permute.xlu0 %2036
    %v2039 = vmul.f32 %v2018, %v2037
    %v2040 = vxor.u32 %v2012, 2147483648
    %v2041 = vmul.f32 %v2040, 1.442695
    %v2042 = vpow.pop %v2041
    %v2043 = vadd.f32 %v2042, 1.0
    %v2044 = vrcp.pop %v2043
    %v2045 = vmul.f32 1.0, %v2044
    %v2046 = vtanh.pop %v2012
    %v2048 = vrot.slane %v1849, 2
    %v2050 = vmul.f32 %v2045, %v2048
    %2052 = vrot.lane.b32.xlu0 %v2046, 64
    %v2053 = vpop.permute.xlu0 %2052
    %v2055 = vmul.f32 %v2045, %v2053
    %2057 = vrot.lane.b32.xlu0 %v2055, 32
    %v2058 = vpop.permute.xlu0 %2057
    %v2060 = vadd.f32 %v2050, %v2058
    %v2061 = vtanh.pop %v2060
    %2063 = vrot.lane.b32.xlu0 %v2061, 64
    %v2064 = vpop.permute.xlu0 %2063
    %v2066 = vmul.f32 %v2045, %v2064
    %2069 = vrot.lane.b32.xlu0 %v2066, 64
    %v2070 = vpop.permute.xlu0 %2069
    %v2072 = vsel %vm301, %v583, %v2070
    %2073 = vrot.lane.b32.xlu0 %v766, 32
    %v2074 = vpop.permute.xlu0 %2073
    %2076 = vrot.lane.b32.xlu0 %v1855, 64
    %v2077 = vpop.permute.xlu0 %2076
    %v2079 = vsel %vm301, %v2074, %v2077
    %2080 = vrot.lane.b32.xlu0 %v980, 32
    %v2081 = vpop.permute.xlu0 %2080
    %2083 = vrot.lane.b32.xlu0 %v1641, 64
    %v2084 = vpop.permute.xlu0 %2083
    %v2086 = vsel %vm301, %v2081, %v2084
    %2087 = vrot.lane.b32.xlu0 %v1191, 32
    %v2088 = vpop.permute.xlu0 %2087
    %2090 = vrot.lane.b32.xlu0 %v1428, 64
    %v2091 = vpop.permute.xlu0 %2090
    %v2093 = vsel %vm301, %v2088, %v2091
    %2095 = vrot.lane.b32.xlu0 %v1218, 64
    %v2096 = vpop.permute.xlu0 %2095
    %v2098 = vsel %vm301, %v1431, %v2096
    %2099 = vrot.lane.b32.xlu0 %v1614, 32
    %v2100 = vpop.permute.xlu0 %2099
    %2102 = vrot.lane.b32.xlu0 %v1007, 64
    %v2103 = vpop.permute.xlu0 %2102
    %v2105 = vsel %vm301, %v2100, %v2103
    %2106 = vrot.lane.b32.xlu0 %v1828, 32
    %v2107 = vpop.permute.xlu0 %2106
    %2109 = vrot.lane.b32.xlu0 %v793, 64
    %v2110 = vpop.permute.xlu0 %2109
    %v2112 = vsel %vm301, %v2107, %v2110
    %2114 = vrot.lane.b32.xlu0 %v2039, 32
    %v2115 = vpop.permute.xlu0 %2114
    %2117 = vrot.lane.b32.xlu0 %v580, 64
    %v2118 = vpop.permute.xlu0 %2117
    %v2120 = vsel %vm301, %v2115, %v2118
    %v2121 = vsel %vm252, %v2072, %v2079
    %v2122 = vsel %vm256, %v2121, %v2086
    %v2123 = vsel %vm260, %v2122, %v2093
    %v2124 = vsel %vm252, %v2098, %v2105
    %v2125 = vsel %vm256, %v2124, %v2112
    %v2126 = vsel %vm260, %v2125, %v2120
    %v2127 = vld [vmem:[%s6] sm:$0xff]
    %v2128 = vld [vmem:[%s6 + $0x8] sm:$0xff]
    %v2129 = vld [vmem:[%s6 + $0x10] sm:$0xff]
    %v2130 = vld [vmem:[%s6 + $0x18] sm:$0xff]
    %v2131 = vld [vmem:[%s6 + $0x20] sm:$0xff]
    %v2132 = vld [vmem:[%s6 + $0x28] sm:$0xff]
    %v2133 = vld [vmem:[%s6 + $0x30] sm:$0xff]
    %v2134 = vld [vmem:[%s6 + $0x38] sm:$0xff]
    %v2135 = vld [vmem:[%s6 + $0x40] sm:$0xff]
    %v2136 = vld [vmem:[%s6 + $0x48] sm:$0xff]
    %v2137 = vld [vmem:[%s6 + $0x50] sm:$0xff]
    %v2138 = vld [vmem:[%s6 + $0x58] sm:$0xff]
    %v2139 = vld [vmem:[%s6 + $0x60] sm:$0xff]
    %v2140 = vld [vmem:[%s6 + $0x68] sm:$0xff]
    %v2141 = vld [vmem:[%s6 + $0x70] sm:$0xff]
    %v2142 = vld [vmem:[%s6 + $0x78] sm:$0xff]
    %v2143 = vld [vmem:[#allocation10] sm:$0xff]
    %v2144 = vld [vmem:[#allocation10 + $0x8] sm:$0xff]
    %v2145 = vld [vmem:[#allocation10 + $0x10] sm:$0xff]
    %v2146 = vld [vmem:[#allocation10 + $0x18] sm:$0xff]
    %v2147 = vld [vmem:[#allocation12] sm:$0xff]
    %v2148 = vld [vmem:[#allocation12 + $0x8] sm:$0xff]
    %v2149 = vld [vmem:[#allocation12 + $0x10] sm:$0xff]
    %v2150 = vld [vmem:[#allocation12 + $0x18] sm:$0xff]
    %v2151 = vld [vmem:[%s9] sm:$0x3]
    %v2153 = vlaneseq
    %v2154 = vshrl.u32 %v2153, 7
    %v2155 = vsub.s32 0, %v2154
    %v2156 = vrot.slane %v2151, %v2155
    %v2157 = vlaneseq
    %v2158 = vshrl.u32 %v2157, 7
    %v2159 = vsub.s32 1, %v2158
    %v2160 = vrot.slane %v2151, %v2159
    %vm2163 = vcmask 523264
    %v2165 = vsel %vm2163, %v2123, 0
    %v2168 = vsel %vm2163, %v2126, 0
    %2170 = vmatprep.subr.mxu0 0.0
    %2171 = vmatpush1.msra.mxu0 0.0
    %2172 = vmatprep.subr.mxu0 0.0
    %2173 = vmatpush1.msra.mxu0 0.0
    %2174 = vmatprep.subr.mxu0 0.0
    %2175 = vmatpush1.msra.mxu0 0.0
    %2176 = vmatprep.subr.mxu0 0.0
    %2177 = vmatpush1.msra.mxu0 0.0
    %2178 = vmatprep.subr.mxu0 0.0
    %2179 = vmatpush1.msra.mxu0 0.0
    %2180 = vmatprep.subr.mxu0 0.0
    %2181 = vmatpush1.msra.mxu0 0.0
    %2182 = vmatprep.subr.mxu0 0.0
    %2183 = vmatpush1.msra.mxu0 0.0
    %2184 = vmatprep.subr.mxu0 0.0
    %2185 = vmatpush1.msra.mxu0 0.0
    %2186 = vmatprep.subr.mxu0 %v2142
    %2187 = vmatpush1.msra.mxu0 %v2141
    %2188 = vmatprep.subr.mxu0 %v2140
    %2189 = vmatpush1.msra.mxu0 %v2139
    %2190 = vmatprep.subr.mxu0 %v2138
    %2191 = vmatpush1.msra.mxu0 %v2137
    %2192 = vmatprep.subr.mxu0 %v2136
    %2193 = vmatpush1.msra.mxu0 %v2135
    %2194 = vmatprep.subr.mxu0 %v2134
    %2195 = vmatpush1.msra.mxu0 %v2133
    %2196 = vmatprep.subr.mxu0 %v2132
    %2197 = vmatpush1.msra.mxu0 %v2131
    %2198 = vmatprep.subr.mxu0 %v2130
    %2199 = vmatpush1.msra.mxu0 %v2129
    %2200 = vmatprep.subr.mxu0 %v2128
    %2201 = vmatpush1.msra.mxu0 %v2127
    %2202 = vmatprep.subr.mxu0 0.0
    %2203 = vmatpush2.msra.mxu0 0.0
    %2204 = vmatprep.subr.mxu0 0.0
    %2205 = vmatpush2.msra.mxu0 0.0
    %2206 = vmatprep.subr.mxu0 0.0
    %2207 = vmatpush2.msra.mxu0 0.0
    %2208 = vmatprep.subr.mxu0 0.0
    %2209 = vmatpush2.msra.mxu0 0.0
    %2210 = vmatprep.subr.mxu0 0.0
    %2211 = vmatpush2.msra.mxu0 0.0
    %2212 = vmatprep.subr.mxu0 0.0
    %2213 = vmatpush2.msra.mxu0 0.0
    %2214 = vmatprep.subr.mxu0 0.0
    %2215 = vmatpush2.msra.mxu0 0.0
    %2216 = vmatprep.subr.mxu0 0.0
    %2217 = vmatpush2.msra.mxu0 0.0
    %2218 = vmatprep.subr.mxu0 0.0
    %2219 = vmatpush2.msra.mxu0 0.0
    %2220 = vmatprep.subr.mxu0 0.0
    %2221 = vmatpush2.msra.mxu0 0.0
    %2222 = vmatprep.subr.mxu0 0.0
    %2223 = vmatpush2.msra.mxu0 0.0
    %2224 = vmatprep.subr.mxu0 0.0
    %2225 = vmatpush2.msra.mxu0 0.0
    %2226 = vmatprep.subr.mxu0 0.0
    %2227 = vmatpush2.msra.mxu0 0.0
    %2228 = vmatprep.subr.mxu0 0.0
    %2229 = vmatpush2.msra.mxu0 0.0
    %2230 = vmatprep.subr.mxu0 0.0
    %2231 = vmatpush2.msra.mxu0 0.0
    %2232 = vmatprep.subr.mxu0 0.0
    %2233 = vmatpush2.msra.mxu0 0.0
    %2234 = vmatprep.mubr.f32.mxu0 0.0
    %2235 = vmatmul.mubr.f32.gmra.mxu0 %v2165
    %v2236 = vpop.f32.mrf.mxu0
    %v2237 = vadd.f32 %v2156, %v2236
    %v2238 = vpop.f32.mrf.mxu0
    %v2239 = vadd.f32 %v2160, %v2238
    %2240 = vmatprep.mubr.f32.mxu0 0.0
    %2241 = vmatmul.mubr.f32.gmra.mxu0 %v2168
    %v2242 = vpop.f32.mrf.mxu0
    %v2243 = vadd.f32 %v2156, %v2242
    %v2244 = vpop.f32.mrf.mxu0
    %v2245 = vadd.f32 %v2160, %v2244
    %2246 = vdwg.mxu0
    %2247 = vmatprep.subr.mxu0 0.0
    %2248 = vmatpush1.msra.mxu0 0.0
    %2249 = vmatprep.subr.mxu0 0.0
    %2250 = vmatpush1.msra.mxu0 0.0
    %2251 = vmatprep.subr.mxu0 0.0
    %2252 = vmatpush1.msra.mxu0 0.0
    %2253 = vmatprep.subr.mxu0 0.0
    %2254 = vmatpush1.msra.mxu0 0.0
    %2255 = vmatprep.subr.mxu0 0.0
    %2256 = vmatpush1.msra.mxu0 0.0
    %2257 = vmatprep.subr.mxu0 0.0
    %2258 = vmatpush1.msra.mxu0 0.0
    %2259 = vmatprep.subr.mxu0 0.0
    %2260 = vmatpush1.msra.mxu0 0.0
    %2261 = vmatprep.subr.mxu0 0.0
    %2262 = vmatpush1.msra.mxu0 0.0
    %2263 = vmatprep.subr.mxu0 0.0
    %2264 = vmatpush1.msra.mxu0 0.0
    %2265 = vmatprep.subr.mxu0 0.0
    %2266 = vmatpush1.msra.mxu0 0.0
    %2267 = vmatprep.subr.mxu0 0.0
    %2268 = vmatpush1.msra.mxu0 0.0
    %2269 = vmatprep.subr.mxu0 0.0
    %2270 = vmatpush1.msra.mxu0 0.0
    %2271 = vmatprep.subr.mxu0 0.0
    %2272 = vmatpush1.msra.mxu0 %v2146
    %2273 = vmatprep.subr.mxu0 0.0
    %2274 = vmatpush1.msra.mxu0 %v2145
    %2275 = vmatprep.subr.mxu0 0.0
    %2276 = vmatpush1.msra.mxu0 %v2144
    %2277 = vmatprep.subr.mxu0 0.0
    %2278 = vmatpush1.msra.mxu0 %v2143
    %2279 = vmatprep.subr.mxu0 0.0
    %2280 = vmatpush2.msra.mxu0 0.0
    %2281 = vmatprep.subr.mxu0 0.0
    %2282 = vmatpush2.msra.mxu0 0.0
    %2283 = vmatprep.subr.mxu0 0.0
    %2284 = vmatpush2.msra.mxu0 0.0
    %2285 = vmatprep.subr.mxu0 0.0
    %2286 = vmatpush2.msra.mxu0 0.0
    %2287 = vmatprep.subr.mxu0 0.0
    %2288 = vmatpush2.msra.mxu0 0.0
    %2289 = vmatprep.subr.mxu0 0.0
    %2290 = vmatpush2.msra.mxu0 0.0
    %2291 = vmatprep.subr.mxu0 0.0
    %2292 = vmatpush2.msra.mxu0 0.0
    %2293 = vmatprep.subr.mxu0 0.0
    %2294 = vmatpush2.msra.mxu0 0.0
    %2295 = vmatprep.subr.mxu0 0.0
    %2296 = vmatpush2.msra.mxu0 0.0
    %2297 = vmatprep.subr.mxu0 0.0
    %2298 = vmatpush2.msra.mxu0 0.0
    %2299 = vmatprep.subr.mxu0 0.0
    %2300 = vmatpush2.msra.mxu0 0.0
    %2301 = vmatprep.subr.mxu0 0.0
    %2302 = vmatpush2.msra.mxu0 0.0
    %2303 = vmatprep.subr.mxu0 0.0
    %2304 = vmatpush2.msra.mxu0 0.0
    %2305 = vmatprep.subr.mxu0 0.0
    %2306 = vmatpush2.msra.mxu0 0.0
    %2307 = vmatprep.subr.mxu0 0.0
    %2308 = vmatpush2.msra.mxu0 0.0
    %2309 = vmatprep.subr.mxu0 0.0
    %2310 = vmatpush2.msra.mxu0 0.0
    %2311 = vmatprep.mubr.f32.mxu0 0.0
    %2312 = vmatmul.mubr.f32.gmra.mxu0 %v386
    %v2313 = vpop.f32.mrf.mxu0
    %v2314 = vadd.f32 0.0, %v2313
    %v2315 = vpop.f32.mrf.mxu0
    %2316 = vdwg.mxu0
    %v2317 = vadd.f32 %v2237, %v2314
    %2318 = vmatprep.subr.mxu0 0.0
    %2319 = vmatpush1.msra.mxu0 0.0
    %2320 = vmatprep.subr.mxu0 0.0
    %2321 = vmatpush1.msra.mxu0 0.0
    %2322 = vmatprep.subr.mxu0 0.0
    %2323 = vmatpush1.msra.mxu0 0.0
    %2324 = vmatprep.subr.mxu0 0.0
    %2325 = vmatpush1.msra.mxu0 0.0
    %2326 = vmatprep.subr.mxu0 0.0
    %2327 = vmatpush1.msra.mxu0 0.0
    %2328 = vmatprep.subr.mxu0 0.0
    %2329 = vmatpush1.msra.mxu0 0.0
    %2330 = vmatprep.subr.mxu0 0.0
    %2331 = vmatpush1.msra.mxu0 0.0
    %2332 = vmatprep.subr.mxu0 0.0
    %2333 = vmatpush1.msra.mxu0 0.0
    %2334 = vmatprep.subr.mxu0 0.0
    %2335 = vmatpush1.msra.mxu0 0.0
    %2336 = vmatprep.subr.mxu0 0.0
    %2337 = vmatpush1.msra.mxu0 0.0
    %2338 = vmatprep.subr.mxu0 0.0
    %2339 = vmatpush1.msra.mxu0 0.0
    %2340 = vmatprep.subr.mxu0 0.0
    %2341 = vmatpush1.msra.mxu0 0.0
    %2342 = vmatprep.subr.mxu0 0.0
    %2343 = vmatpush1.msra.mxu0 %v2150
    %2344 = vmatprep.subr.mxu0 0.0
    %2345 = vmatpush1.msra.mxu0 %v2149
    %2346 = vmatprep.subr.mxu0 0.0
    %2347 = vmatpush1.msra.mxu0 %v2148
    %2348 = vmatprep.subr.mxu0 0.0
    %2349 = vmatpush1.msra.mxu0 %v2147
    %2350 = vmatprep.subr.mxu0 0.0
    %2351 = vmatpush2.msra.mxu0 0.0
    %2352 = vmatprep.subr.mxu0 0.0
    %2353 = vmatpush2.msra.mxu0 0.0
    %2354 = vmatprep.subr.mxu0 0.0
    %2355 = vmatpush2.msra.mxu0 0.0
    %2356 = vmatprep.subr.mxu0 0.0
    %2357 = vmatpush2.msra.mxu0 0.0
    %2358 = vmatprep.subr.mxu0 0.0
    %2359 = vmatpush2.msra.mxu0 0.0
    %2360 = vmatprep.subr.mxu0 0.0
    %2361 = vmatpush2.msra.mxu0 0.0
    %2362 = vmatprep.subr.mxu0 0.0
    %2363 = vmatpush2.msra.mxu0 0.0
    %2364 = vmatprep.subr.mxu0 0.0
    %2365 = vmatpush2.msra.mxu0 0.0
    %2366 = vmatprep.subr.mxu0 0.0
    %2367 = vmatpush2.msra.mxu0 0.0
    %2368 = vmatprep.subr.mxu0 0.0
    %2369 = vmatpush2.msra.mxu0 0.0
    %2370 = vmatprep.subr.mxu0 0.0
    %2371 = vmatpush2.msra.mxu0 0.0
    %2372 = vmatprep.subr.mxu0 0.0
    %2373 = vmatpush2.msra.mxu0 0.0
    %2374 = vmatprep.subr.mxu0 0.0
    %2375 = vmatpush2.msra.mxu0 0.0
    %2376 = vmatprep.subr.mxu0 0.0
    %2377 = vmatpush2.msra.mxu0 0.0
    %2378 = vmatprep.subr.mxu0 0.0
    %2379 = vmatpush2.msra.mxu0 0.0
    %2380 = vmatprep.subr.mxu0 0.0
    %2381 = vmatpush2.msra.mxu0 0.0
    %2382 = vmatprep.mubr.f32.mxu0 0.0
    %2383 = vmatmul.mubr.f32.gmra.mxu0 %v386
    %v2384 = vpop.f32.mrf.mxu0
    %v2385 = vadd.f32 0.0, %v2384
    %v2386 = vpop.f32.mrf.mxu0
    %2387 = vdwg.mxu0
    %v2389 = vrot.slane %v2385, 2
    %v2391 = vadd.f32 %v2245, %v2389
    %v2392 = vxor.u32 %v2317, 2147483648
    %v2393 = vmul.f32 %v2392, 1.442695
    %v2394 = vpow.pop %v2393
    %v2395 = vadd.f32 %v2394, 1.0
    %v2396 = vrcp.pop %v2395
    %v2397 = vmul.f32 1.0, %v2396
    %v2398 = vtanh.pop %v2317
    %v2399 = vmul.f32 %v2397, 0.0
    %2401 = vrot.lane.b32.xlu0 %v2398, 64
    %v2402 = vpop.permute.xlu0 %2401
    %v2404 = vmul.f32 %v2397, %v2402
    %2406 = vrot.lane.b32.xlu0 %v2404, 32
    %v2407 = vpop.permute.xlu0 %2406
    %v2409 = vadd.f32 %v2399, %v2407
    %v2410 = vtanh.pop %v2409
    %2412 = vrot.lane.b32.xlu0 %v2410, 64
    %v2413 = vpop.permute.xlu0 %2412
    %v2415 = vmul.f32 %v2397, %v2413
    %v2416 = vxor.u32 %v2391, 2147483648
    %v2417 = vmul.f32 %v2416, 1.442695
    %v2418 = vpow.pop %v2417
    %v2419 = vadd.f32 %v2418, 1.0
    %v2420 = vrcp.pop %v2419
    %v2421 = vmul.f32 1.0, %v2420
    %v2422 = vtanh.pop %v2391
    %v2423 = vmul.f32 %v2421, 0.0
    %2425 = vrot.lane.b32.xlu0 %v2422, 64
    %v2426 = vpop.permute.xlu0 %2425
    %v2428 = vmul.f32 %v2421, %v2426
    %2430 = vrot.lane.b32.xlu0 %v2428, 32
    %v2431 = vpop.permute.xlu0 %2430
    %v2433 = vadd.f32 %v2423, %v2431
    %v2434 = vtanh.pop %v2433
    %2436 = vrot.lane.b32.xlu0 %v2434, 64
    %v2437 = vpop.permute.xlu0 %2436
    %v2439 = vmul.f32 %v2421, %v2437
    %2441 = vrot.lane.b32.xlu0 %v2415, 32
    %v2442 = vpop.permute.xlu0 %2441
    %v2443 = vsel %vm301, %v2442, 0
    %2445 = vmatprep.subr.mxu0 0.0
    %2446 = vmatpush1.msra.mxu0 0.0
    %2447 = vmatprep.subr.mxu0 0.0
    %2448 = vmatpush1.msra.mxu0 0.0
    %2449 = vmatprep.subr.mxu0 0.0
    %2450 = vmatpush1.msra.mxu0 0.0
    %2451 = vmatprep.subr.mxu0 0.0
    %2452 = vmatpush1.msra.mxu0 0.0
    %2453 = vmatprep.subr.mxu0 0.0
    %2454 = vmatpush1.msra.mxu0 0.0
    %2455 = vmatprep.subr.mxu0 0.0
    %2456 = vmatpush1.msra.mxu0 0.0
    %2457 = vmatprep.subr.mxu0 0.0
    %2458 = vmatpush1.msra.mxu0 0.0
    %2459 = vmatprep.subr.mxu0 0.0
    %2460 = vmatpush1.msra.mxu0 0.0
    %2461 = vmatprep.subr.mxu0 0.0
    %2462 = vmatpush1.msra.mxu0 0.0
    %2463 = vmatprep.subr.mxu0 0.0
    %2464 = vmatpush1.msra.mxu0 0.0
    %2465 = vmatprep.subr.mxu0 0.0
    %2466 = vmatpush1.msra.mxu0 0.0
    %2467 = vmatprep.subr.mxu0 0.0
    %2468 = vmatpush1.msra.mxu0 0.0
    %2469 = vmatprep.subr.mxu0 0.0
    %2470 = vmatpush1.msra.mxu0 %v2146
    %2471 = vmatprep.subr.mxu0 0.0
    %2472 = vmatpush1.msra.mxu0 %v2145
    %2473 = vmatprep.subr.mxu0 0.0
    %2474 = vmatpush1.msra.mxu0 %v2144
    %2475 = vmatprep.subr.mxu0 0.0
    %2476 = vmatpush1.msra.mxu0 %v2143
    %2477 = vmatprep.subr.mxu0 0.0
    %2478 = vmatpush2.msra.mxu0 0.0
    %2479 = vmatprep.subr.mxu0 0.0
    %2480 = vmatpush2.msra.mxu0 0.0
    %2481 = vmatprep.subr.mxu0 0.0
    %2482 = vmatpush2.msra.mxu0 0.0
    %2483 = vmatprep.subr.mxu0 0.0
    %2484 = vmatpush2.msra.mxu0 0.0
    %2485 = vmatprep.subr.mxu0 0.0
    %2486 = vmatpush2.msra.mxu0 0.0
    %2487 = vmatprep.subr.mxu0 0.0
    %2488 = vmatpush2.msra.mxu0 0.0
    %2489 = vmatprep.subr.mxu0 0.0
    %2490 = vmatpush2.msra.mxu0 0.0
    %2491 = vmatprep.subr.mxu0 0.0
    %2492 = vmatpush2.msra.mxu0 0.0
    %2493 = vmatprep.subr.mxu0 0.0
    %2494 = vmatpush2.msra.mxu0 0.0
    %2495 = vmatprep.subr.mxu0 0.0
    %2496 = vmatpush2.msra.mxu0 0.0
    %2497 = vmatprep.subr.mxu0 0.0
    %2498 = vmatpush2.msra.mxu0 0.0
    %2499 = vmatprep.subr.mxu0 0.0
    %2500 = vmatpush2.msra.mxu0 0.0
    %2501 = vmatprep.subr.mxu0 0.0
    %2502 = vmatpush2.msra.mxu0 0.0
    %2503 = vmatprep.subr.mxu0 0.0
    %2504 = vmatpush2.msra.mxu0 0.0
    %2505 = vmatprep.subr.mxu0 0.0
    %2506 = vmatpush2.msra.mxu0 0.0
    %2507 = vmatprep.subr.mxu0 0.0
    %2508 = vmatpush2.msra.mxu0 0.0
    %2509 = vmatprep.mubr.f32.mxu0 0.0
    %2510 = vmatmul.mubr.f32.gmra.mxu0 %v2443
    %v2511 = vpop.f32.mrf.mxu0
    %v2512 = vadd.f32 0.0, %v2511
    %v2513 = vpop.f32.mrf.mxu0
    %2514 = vdwg.mxu0
    %v2516 = vrot.slane %v2512, 6
    %v2518 = vadd.f32 %v2237, %v2516
    %v2520 = vrot.slane %v2439, 6
    %2521 = vrot.lane.b32.xlu0 %v2520, 32
    %v2522 = vpop.permute.xlu0 %2521
    %v2523 = vsel %vm301, %v2522, 0
    %2525 = vmatprep.subr.mxu0 0.0
    %2526 = vmatpush1.msra.mxu0 0.0
    %2527 = vmatprep.subr.mxu0 0.0
    %2528 = vmatpush1.msra.mxu0 0.0
    %2529 = vmatprep.subr.mxu0 0.0
    %2530 = vmatpush1.msra.mxu0 0.0
    %2531 = vmatprep.subr.mxu0 0.0
    %2532 = vmatpush1.msra.mxu0 0.0
    %2533 = vmatprep.subr.mxu0 0.0
    %2534 = vmatpush1.msra.mxu0 0.0
    %2535 = vmatprep.subr.mxu0 0.0
    %2536 = vmatpush1.msra.mxu0 0.0
    %2537 = vmatprep.subr.mxu0 0.0
    %2538 = vmatpush1.msra.mxu0 0.0
    %2539 = vmatprep.subr.mxu0 0.0
    %2540 = vmatpush1.msra.mxu0 0.0
    %2541 = vmatprep.subr.mxu0 0.0
    %2542 = vmatpush1.msra.mxu0 0.0
    %2543 = vmatprep.subr.mxu0 0.0
    %2544 = vmatpush1.msra.mxu0 0.0
    %2545 = vmatprep.subr.mxu0 0.0
    %2546 = vmatpush1.msra.mxu0 0.0
    %2547 = vmatprep.subr.mxu0 0.0
    %2548 = vmatpush1.msra.mxu0 0.0
    %2549 = vmatprep.subr.mxu0 0.0
    %2550 = vmatpush1.msra.mxu0 %v2150
    %2551 = vmatprep.subr.mxu0 0.0
    %2552 = vmatpush1.msra.mxu0 %v2149
    %2553 = vmatprep.subr.mxu0 0.0
    %2554 = vmatpush1.msra.mxu0 %v2148
    %2555 = vmatprep.subr.mxu0 0.0
    %2556 = vmatpush1.msra.mxu0 %v2147
    %2557 = vmatprep.subr.mxu0 0.0
    %2558 = vmatpush2.msra.mxu0 0.0
    %2559 = vmatprep.subr.mxu0 0.0
    %2560 = vmatpush2.msra.mxu0 0.0
    %2561 = vmatprep.subr.mxu0 0.0
    %2562 = vmatpush2.msra.mxu0 0.0
    %2563 = vmatprep.subr.mxu0 0.0
    %2564 = vmatpush2.msra.mxu0 0.0
    %2565 = vmatprep.subr.mxu0 0.0
    %2566 = vmatpush2.msra.mxu0 0.0
    %2567 = vmatprep.subr.mxu0 0.0
    %2568 = vmatpush2.msra.mxu0 0.0
    %2569 = vmatprep.subr.mxu0 0.0
    %2570 = vmatpush2.msra.mxu0 0.0
    %2571 = vmatprep.subr.mxu0 0.0
    %2572 = vmatpush2.msra.mxu0 0.0
    %2573 = vmatprep.subr.mxu0 0.0
    %2574 = vmatpush2.msra.mxu0 0.0
    %2575 = vmatprep.subr.mxu0 0.0
    %2576 = vmatpush2.msra.mxu0 0.0
    %2577 = vmatprep.subr.mxu0 0.0
    %2578 = vmatpush2.msra.mxu0 0.0
    %2579 = vmatprep.subr.mxu0 0.0
    %2580 = vmatpush2.msra.mxu0 0.0
    %2581 = vmatprep.subr.mxu0 0.0
    %2582 = vmatpush2.msra.mxu0 0.0
    %2583 = vmatprep.subr.mxu0 0.0
    %2584 = vmatpush2.msra.mxu0 0.0
    %2585 = vmatprep.subr.mxu0 0.0
    %2586 = vmatpush2.msra.mxu0 0.0
    %2587 = vmatprep.subr.mxu0 0.0
    %2588 = vmatpush2.msra.mxu0 0.0
    %2589 = vmatprep.mubr.f32.mxu0 0.0
    %2590 = vmatmul.mubr.f32.gmra.mxu0 %v2523
    %v2591 = vpop.f32.mrf.mxu0
    %v2592 = vadd.f32 0.0, %v2591
    %v2593 = vpop.f32.mrf.mxu0
    %2594 = vdwg.mxu0
    %v2596 = vrot.slane %v2592, 4
    %v2598 = vadd.f32 %v2245, %v2596
    %v2599 = vxor.u32 %v2518, 2147483648
    %v2600 = vmul.f32 %v2599, 1.442695
    %v2601 = vpow.pop %v2600
    %v2602 = vadd.f32 %v2601, 1.0
    %v2603 = vrcp.pop %v2602
    %v2604 = vmul.f32 1.0, %v2603
    %v2605 = vtanh.pop %v2518
    %v2607 = vrot.slane %v2409, 6
    %v2609 = vmul.f32 %v2604, %v2607
    %2611 = vrot.lane.b32.xlu0 %v2605, 64
    %v2612 = vpop.permute.xlu0 %2611
    %v2614 = vmul.f32 %v2604, %v2612
    %2616 = vrot.lane.b32.xlu0 %v2614, 32
    %v2617 = vpop.permute.xlu0 %2616
    %v2619 = vadd.f32 %v2609, %v2617
    %v2620 = vtanh.pop %v2619
    %2622 = vrot.lane.b32.xlu0 %v2620, 64
    %v2623 = vpop.permute.xlu0 %2622
    %v2625 = vmul.f32 %v2604, %v2623
    %v2626 = vxor.u32 %v2598, 2147483648
    %v2627 = vmul.f32 %v2626, 1.442695
    %v2628 = vpow.pop %v2627
    %v2629 = vadd.f32 %v2628, 1.0
    %v2630 = vrcp.pop %v2629
    %v2631 = vmul.f32 1.0, %v2630
    %v2632 = vtanh.pop %v2598
    %v2634 = vrot.slane %v2433, 2
    %v2636 = vmul.f32 %v2631, %v2634
    %2638 = vrot.lane.b32.xlu0 %v2632, 64
    %v2639 = vpop.permute.xlu0 %2638
    %v2641 = vmul.f32 %v2631, %v2639
    %2643 = vrot.lane.b32.xlu0 %v2641, 32
    %v2644 = vpop.permute.xlu0 %2643
    %v2646 = vadd.f32 %v2636, %v2644
    %v2647 = vtanh.pop %v2646
    %2649 = vrot.lane.b32.xlu0 %v2647, 64
    %v2650 = vpop.permute.xlu0 %2649
    %v2652 = vmul.f32 %v2631, %v2650
    %v2654 = vrot.slane %v2625, 2
    %2655 = vrot.lane.b32.xlu0 %v2654, 32
    %v2656 = vpop.permute.xlu0 %2655
    %v2657 = vsel %vm301, %v2656, 0
    %2659 = vmatprep.subr.mxu0 0.0
    %2660 = vmatpush1.msra.mxu0 0.0
    %2661 = vmatprep.subr.mxu0 0.0
    %2662 = vmatpush1.msra.mxu0 0.0
    %2663 = vmatprep.subr.mxu0 0.0
    %2664 = vmatpush1.msra.mxu0 0.0
    %2665 = vmatprep.subr.mxu0 0.0
    %2666 = vmatpush1.msra.mxu0 0.0
    %2667 = vmatprep.subr.mxu0 0.0
    %2668 = vmatpush1.msra.mxu0 0.0
    %2669 = vmatprep.subr.mxu0 0.0
    %2670 = vmatpush1.msra.mxu0 0.0
    %2671 = vmatprep.subr.mxu0 0.0
    %2672 = vmatpush1.msra.mxu0 0.0
    %2673 = vmatprep.subr.mxu0 0.0
    %2674 = vmatpush1.msra.mxu0 0.0
    %2675 = vmatprep.subr.mxu0 0.0
    %2676 = vmatpush1.msra.mxu0 0.0
    %2677 = vmatprep.subr.mxu0 0.0
    %2678 = vmatpush1.msra.mxu0 0.0
    %2679 = vmatprep.subr.mxu0 0.0
    %2680 = vmatpush1.msra.mxu0 0.0
    %2681 = vmatprep.subr.mxu0 0.0
    %2682 = vmatpush1.msra.mxu0 0.0
    %2683 = vmatprep.subr.mxu0 0.0
    %2684 = vmatpush1.msra.mxu0 %v2146
    %2685 = vmatprep.subr.mxu0 0.0
    %2686 = vmatpush1.msra.mxu0 %v2145
    %2687 = vmatprep.subr.mxu0 0.0
    %2688 = vmatpush1.msra.mxu0 %v2144
    %2689 = vmatprep.subr.mxu0 0.0
    %2690 = vmatpush1.msra.mxu0 %v2143
    %2691 = vmatprep.subr.mxu0 0.0
    %2692 = vmatpush2.msra.mxu0 0.0
    %2693 = vmatprep.subr.mxu0 0.0
    %2694 = vmatpush2.msra.mxu0 0.0
    %2695 = vmatprep.subr.mxu0 0.0
    %2696 = vmatpush2.msra.mxu0 0.0
    %2697 = vmatprep.subr.mxu0 0.0
    %2698 = vmatpush2.msra.mxu0 0.0
    %2699 = vmatprep.subr.mxu0 0.0
    %2700 = vmatpush2.msra.mxu0 0.0
    %2701 = vmatprep.subr.mxu0 0.0
    %2702 = vmatpush2.msra.mxu0 0.0
    %2703 = vmatprep.subr.mxu0 0.0
    %2704 = vmatpush2.msra.mxu0 0.0
    %2705 = vmatprep.subr.mxu0 0.0
    %2706 = vmatpush2.msra.mxu0 0.0
    %2707 = vmatprep.subr.mxu0 0.0
    %2708 = vmatpush2.msra.mxu0 0.0
    %2709 = vmatprep.subr.mxu0 0.0
    %2710 = vmatpush2.msra.mxu0 0.0
    %2711 = vmatprep.subr.mxu0 0.0
    %2712 = vmatpush2.msra.mxu0 0.0
    %2713 = vmatprep.subr.mxu0 0.0
    %2714 = vmatpush2.msra.mxu0 0.0
    %2715 = vmatprep.subr.mxu0 0.0
    %2716 = vmatpush2.msra.mxu0 0.0
    %2717 = vmatprep.subr.mxu0 0.0
    %2718 = vmatpush2.msra.mxu0 0.0
    %2719 = vmatprep.subr.mxu0 0.0
    %2720 = vmatpush2.msra.mxu0 0.0
    %2721 = vmatprep.subr.mxu0 0.0
    %2722 = vmatpush2.msra.mxu0 0.0
    %2723 = vmatprep.mubr.f32.mxu0 0.0
    %2724 = vmatmul.mubr.f32.gmra.mxu0 %v2657
    %v2725 = vpop.f32.mrf.mxu0
    %v2726 = vadd.f32 0.0, %v2725
    %v2727 = vpop.f32.mrf.mxu0
    %2728 = vdwg.mxu0
    %v2730 = vrot.slane %v2726, 4
    %v2732 = vadd.f32 %v2237, %v2730
    %v2734 = vrot.slane %v2652, 4
    %2735 = vrot.lane.b32.xlu0 %v2734, 32
    %v2736 = vpop.permute.xlu0 %2735
    %v2737 = vsel %vm301, %v2736, 0
    %2739 = vmatprep.subr.mxu0 0.0
    %2740 = vmatpush1.msra.mxu0 0.0
    %2741 = vmatprep.subr.mxu0 0.0
    %2742 = vmatpush1.msra.mxu0 0.0
    %2743 = vmatprep.subr.mxu0 0.0
    %2744 = vmatpush1.msra.mxu0 0.0
    %2745 = vmatprep.subr.mxu0 0.0
    %2746 = vmatpush1.msra.mxu0 0.0
    %2747 = vmatprep.subr.mxu0 0.0
    %2748 = vmatpush1.msra.mxu0 0.0
    %2749 = vmatprep.subr.mxu0 0.0
    %2750 = vmatpush1.msra.mxu0 0.0
    %2751 = vmatprep.subr.mxu0 0.0
    %2752 = vmatpush1.msra.mxu0 0.0
    %2753 = vmatprep.subr.mxu0 0.0
    %2754 = vmatpush1.msra.mxu0 0.0
    %2755 = vmatprep.subr.mxu0 0.0
    %2756 = vmatpush1.msra.mxu0 0.0
    %2757 = vmatprep.subr.mxu0 0.0
    %2758 = vmatpush1.msra.mxu0 0.0
    %2759 = vmatprep.subr.mxu0 0.0
    %2760 = vmatpush1.msra.mxu0 0.0
    %2761 = vmatprep.subr.mxu0 0.0
    %2762 = vmatpush1.msra.mxu0 0.0
    %2763 = vmatprep.subr.mxu0 0.0
    %2764 = vmatpush1.msra.mxu0 %v2150
    %2765 = vmatprep.subr.mxu0 0.0
    %2766 = vmatpush1.msra.mxu0 %v2149
    %2767 = vmatprep.subr.mxu0 0.0
    %2768 = vmatpush1.msra.mxu0 %v2148
    %2769 = vmatprep.subr.mxu0 0.0
    %2770 = vmatpush1.msra.mxu0 %v2147
    %2771 = vmatprep.subr.mxu0 0.0
    %2772 = vmatpush2.msra.mxu0 0.0
    %2773 = vmatprep.subr.mxu0 0.0
    %2774 = vmatpush2.msra.mxu0 0.0
    %2775 = vmatprep.subr.mxu0 0.0
    %2776 = vmatpush2.msra.mxu0 0.0
    %2777 = vmatprep.subr.mxu0 0.0
    %2778 = vmatpush2.msra.mxu0 0.0
    %2779 = vmatprep.subr.mxu0 0.0
    %2780 = vmatpush2.msra.mxu0 0.0
    %2781 = vmatprep.subr.mxu0 0.0
    %2782 = vmatpush2.msra.mxu0 0.0
    %2783 = vmatprep.subr.mxu0 0.0
    %2784 = vmatpush2.msra.mxu0 0.0
    %2785 = vmatprep.subr.mxu0 0.0
    %2786 = vmatpush2.msra.mxu0 0.0
    %2787 = vmatprep.subr.mxu0 0.0
    %2788 = vmatpush2.msra.mxu0 0.0
    %2789 = vmatprep.subr.mxu0 0.0
    %2790 = vmatpush2.msra.mxu0 0.0
    %2791 = vmatprep.subr.mxu0 0.0
    %2792 = vmatpush2.msra.mxu0 0.0
    %2793 = vmatprep.subr.mxu0 0.0
    %2794 = vmatpush2.msra.mxu0 0.0
    %2795 = vmatprep.subr.mxu0 0.0
    %2796 = vmatpush2.msra.mxu0 0.0
    %2797 = vmatprep.subr.mxu0 0.0
    %2798 = vmatpush2.msra.mxu0 0.0
    %2799 = vmatprep.subr.mxu0 0.0
    %2800 = vmatpush2.msra.mxu0 0.0
    %2801 = vmatprep.subr.mxu0 0.0
    %2802 = vmatpush2.msra.mxu0 0.0
    %2803 = vmatprep.mubr.f32.mxu0 0.0
    %2804 = vmatmul.mubr.f32.gmra.mxu0 %v2737
    %v2805 = vpop.f32.mrf.mxu0
    %v2806 = vadd.f32 0.0, %v2805
    %v2807 = vpop.f32.mrf.mxu0
    %2808 = vdwg.mxu0
    %v2810 = vrot.slane %v2806, 6
    %v2812 = vadd.f32 %v2245, %v2810
    %v2813 = vxor.u32 %v2732, 2147483648
    %v2814 = vmul.f32 %v2813, 1.442695
    %v2815 = vpow.pop %v2814
    %v2816 = vadd.f32 %v2815, 1.0
    %v2817 = vrcp.pop %v2816
    %v2818 = vmul.f32 1.0, %v2817
    %v2819 = vtanh.pop %v2732
    %v2821 = vrot.slane %v2619, 6
    %v2823 = vmul.f32 %v2818, %v2821
    %2825 = vrot.lane.b32.xlu0 %v2819, 64
    %v2826 = vpop.permute.xlu0 %2825
    %v2828 = vmul.f32 %v2818, %v2826
    %2830 = vrot.lane.b32.xlu0 %v2828, 32
    %v2831 = vpop.permute.xlu0 %2830
    %v2833 = vadd.f32 %v2823, %v2831
    %v2834 = vtanh.pop %v2833
    %2836 = vrot.lane.b32.xlu0 %v2834, 64
    %v2837 = vpop.permute.xlu0 %2836
    %v2839 = vmul.f32 %v2818, %v2837
    %v2840 = vxor.u32 %v2812, 2147483648
    %v2841 = vmul.f32 %v2840, 1.442695
    %v2842 = vpow.pop %v2841
    %v2843 = vadd.f32 %v2842, 1.0
    %v2844 = vrcp.pop %v2843
    %v2845 = vmul.f32 1.0, %v2844
    %v2846 = vtanh.pop %v2812
    %v2848 = vrot.slane %v2646, 2
    %v2850 = vmul.f32 %v2845, %v2848
    %2852 = vrot.lane.b32.xlu0 %v2846, 64
    %v2853 = vpop.permute.xlu0 %2852
    %v2855 = vmul.f32 %v2845, %v2853
    %2857 = vrot.lane.b32.xlu0 %v2855, 32
    %v2858 = vpop.permute.xlu0 %2857
    %v2860 = vadd.f32 %v2850, %v2858
    %v2861 = vtanh.pop %v2860
    %2863 = vrot.lane.b32.xlu0 %v2861, 64
    %v2864 = vpop.permute.xlu0 %2863
    %v2866 = vmul.f32 %v2845, %v2864
    %v2868 = vrot.slane %v2839, 4
    %2869 = vrot.lane.b32.xlu0 %v2868, 32
    %v2870 = vpop.permute.xlu0 %2869
    %v2871 = vsel %vm301, %v2870, 0
    %2873 = vmatprep.subr.mxu0 0.0
    %2874 = vmatpush1.msra.mxu0 0.0
    %2875 = vmatprep.subr.mxu0 0.0
    %2876 = vmatpush1.msra.mxu0 0.0
    %2877 = vmatprep.subr.mxu0 0.0
    %2878 = vmatpush1.msra.mxu0 0.0
    %2879 = vmatprep.subr.mxu0 0.0
    %2880 = vmatpush1.msra.mxu0 0.0
    %2881 = vmatprep.subr.mxu0 0.0
    %2882 = vmatpush1.msra.mxu0 0.0
    %2883 = vmatprep.subr.mxu0 0.0
    %2884 = vmatpush1.msra.mxu0 0.0
    %2885 = vmatprep.subr.mxu0 0.0
    %2886 = vmatpush1.msra.mxu0 0.0
    %2887 = vmatprep.subr.mxu0 0.0
    %2888 = vmatpush1.msra.mxu0 0.0
    %2889 = vmatprep.subr.mxu0 0.0
    %2890 = vmatpush1.msra.mxu0 0.0
    %2891 = vmatprep.subr.mxu0 0.0
    %2892 = vmatpush1.msra.mxu0 0.0
    %2893 = vmatprep.subr.mxu0 0.0
    %2894 = vmatpush1.msra.mxu0 0.0
    %2895 = vmatprep.subr.mxu0 0.0
    %2896 = vmatpush1.msra.mxu0 0.0
    %2897 = vmatprep.subr.mxu0 0.0
    %2898 = vmatpush1.msra.mxu0 %v2146
    %2899 = vmatprep.subr.mxu0 0.0
    %2900 = vmatpush1.msra.mxu0 %v2145
    %2901 = vmatprep.subr.mxu0 0.0
    %2902 = vmatpush1.msra.mxu0 %v2144
    %2903 = vmatprep.subr.mxu0 0.0
    %2904 = vmatpush1.msra.mxu0 %v2143
    %2905 = vmatprep.subr.mxu0 0.0
    %2906 = vmatpush2.msra.mxu0 0.0
    %2907 = vmatprep.subr.mxu0 0.0
    %2908 = vmatpush2.msra.mxu0 0.0
    %2909 = vmatprep.subr.mxu0 0.0
    %2910 = vmatpush2.msra.mxu0 0.0
    %2911 = vmatprep.subr.mxu0 0.0
    %2912 = vmatpush2.msra.mxu0 0.0
    %2913 = vmatprep.subr.mxu0 0.0
    %2914 = vmatpush2.msra.mxu0 0.0
    %2915 = vmatprep.subr.mxu0 0.0
    %2916 = vmatpush2.msra.mxu0 0.0
    %2917 = vmatprep.subr.mxu0 0.0
    %2918 = vmatpush2.msra.mxu0 0.0
    %2919 = vmatprep.subr.mxu0 0.0
    %2920 = vmatpush2.msra.mxu0 0.0
    %2921 = vmatprep.subr.mxu0 0.0
    %2922 = vmatpush2.msra.mxu0 0.0
    %2923 = vmatprep.subr.mxu0 0.0
    %2924 = vmatpush2.msra.mxu0 0.0
    %2925 = vmatprep.subr.mxu0 0.0
    %2926 = vmatpush2.msra.mxu0 0.0
    %2927 = vmatprep.subr.mxu0 0.0
    %2928 = vmatpush2.msra.mxu0 0.0
    %2929 = vmatprep.subr.mxu0 0.0
    %2930 = vmatpush2.msra.mxu0 0.0
    %2931 = vmatprep.subr.mxu0 0.0
    %2932 = vmatpush2.msra.mxu0 0.0
    %2933 = vmatprep.subr.mxu0 0.0
    %2934 = vmatpush2.msra.mxu0 0.0
    %2935 = vmatprep.subr.mxu0 0.0
    %2936 = vmatpush2.msra.mxu0 0.0
    %2937 = vmatprep.mubr.f32.mxu0 0.0
    %2938 = vmatmul.mubr.f32.gmra.mxu0 %v2871
    %v2939 = vpop.f32.mrf.mxu0
    %v2940 = vadd.f32 0.0, %v2939
    %v2941 = vpop.f32.mrf.mxu0
    %2942 = vdwg.mxu0
    %v2944 = vrot.slane %v2940, 2
    %v2946 = vadd.f32 %v2237, %v2944
    %v2948 = vrot.slane %v2866, 2
    %2949 = vrot.lane.b32.xlu0 %v2948, 32
    %v2950 = vpop.permute.xlu0 %2949
    %v2951 = vsel %vm301, %v2950, 0
    %2953 = vmatprep.subr.mxu0 0.0
    %2954 = vmatpush1.msra.mxu0 0.0
    %2955 = vmatprep.subr.mxu0 0.0
    %2956 = vmatpush1.msra.mxu0 0.0
    %2957 = vmatprep.subr.mxu0 0.0
    %2958 = vmatpush1.msra.mxu0 0.0
    %2959 = vmatprep.subr.mxu0 0.0
    %2960 = vmatpush1.msra.mxu0 0.0
    %2961 = vmatprep.subr.mxu0 0.0
    %2962 = vmatpush1.msra.mxu0 0.0
    %2963 = vmatprep.subr.mxu0 0.0
    %2964 = vmatpush1.msra.mxu0 0.0
    %2965 = vmatprep.subr.mxu0 0.0
    %2966 = vmatpush1.msra.mxu0 0.0
    %2967 = vmatprep.subr.mxu0 0.0
    %2968 = vmatpush1.msra.mxu0 0.0
    %2969 = vmatprep.subr.mxu0 0.0
    %2970 = vmatpush1.msra.mxu0 0.0
    %2971 = vmatprep.subr.mxu0 0.0
    %2972 = vmatpush1.msra.mxu0 0.0
    %2973 = vmatprep.subr.mxu0 0.0
    %2974 = vmatpush1.msra.mxu0 0.0
    %2975 = vmatprep.subr.mxu0 0.0
    %2976 = vmatpush1.msra.mxu0 0.0
    %2977 = vmatprep.subr.mxu0 0.0
    %2978 = vmatpush1.msra.mxu0 %v2150
    %2979 = vmatprep.subr.mxu0 0.0
    %2980 = vmatpush1.msra.mxu0 %v2149
    %2981 = vmatprep.subr.mxu0 0.0
    %2982 = vmatpush1.msra.mxu0 %v2148
    %2983 = vmatprep.subr.mxu0 0.0
    %2984 = vmatpush1.msra.mxu0 %v2147
    %2985 = vmatprep.subr.mxu0 0.0
    %2986 = vmatpush2.msra.mxu0 0.0
    %2987 = vmatprep.subr.mxu0 0.0
    %2988 = vmatpush2.msra.mxu0 0.0
    %2989 = vmatprep.subr.mxu0 0.0
    %2990 = vmatpush2.msra.mxu0 0.0
    %2991 = vmatprep.subr.mxu0 0.0
    %2992 = vmatpush2.msra.mxu0 0.0
    %2993 = vmatprep.subr.mxu0 0.0
    %2994 = vmatpush2.msra.mxu0 0.0
    %2995 = vmatprep.subr.mxu0 0.0
    %2996 = vmatpush2.msra.mxu0 0.0
    %2997 = vmatprep.subr.mxu0 0.0
    %2998 = vmatpush2.msra.mxu0 0.0
    %2999 = vmatprep.subr.mxu0 0.0
    %3000 = vmatpush2.msra.mxu0 0.0
    %3001 = vmatprep.subr.mxu0 0.0
    %3002 = vmatpush2.msra.mxu0 0.0
    %3003 = vmatprep.subr.mxu0 0.0
    %3004 = vmatpush2.msra.mxu0 0.0
    %3005 = vmatprep.subr.mxu0 0.0
    %3006 = vmatpush2.msra.mxu0 0.0
    %3007 = vmatprep.subr.mxu0 0.0
    %3008 = vmatpush2.msra.mxu0 0.0
    %3009 = vmatprep.subr.mxu0 0.0
    %3010 = vmatpush2.msra.mxu0 0.0
    %3011 = vmatprep.subr.mxu0 0.0
    %3012 = vmatpush2.msra.mxu0 0.0
    %3013 = vmatprep.subr.mxu0 0.0
    %3014 = vmatpush2.msra.mxu0 0.0
    %3015 = vmatprep.subr.mxu0 0.0
    %3016 = vmatpush2.msra.mxu0 0.0
    %3017 = vmatprep.mubr.f32.mxu0 0.0
    %3018 = vmatmul.mubr.f32.gmra.mxu0 %v2951
    %v3019 = vpop.f32.mrf.mxu0
    %v3020 = vadd.f32 0.0, %v3019
    %v3021 = vpop.f32.mrf.mxu0
    %3022 = vdwg.mxu0
    %v3023 = vadd.f32 %v2245, %v3020
    %v3024 = vxor.u32 %v2946, 2147483648
    %v3025 = vmul.f32 %v3024, 1.442695
    %v3026 = vpow.pop %v3025
    %v3027 = vadd.f32 %v3026, 1.0
    %v3028 = vrcp.pop %v3027
    %v3029 = vmul.f32 1.0, %v3028
    %v3030 = vtanh.pop %v2946
    %v3032 = vrot.slane %v2833, 6
    %v3034 = vmul.f32 %v3029, %v3032
    %3036 = vrot.lane.b32.xlu0 %v3030, 64
    %v3037 = vpop.permute.xlu0 %3036
    %v3039 = vmul.f32 %v3029, %v3037
    %3041 = vrot.lane.b32.xlu0 %v3039, 32
    %v3042 = vpop.permute.xlu0 %3041
    %v3044 = vadd.f32 %v3034, %v3042
    %v3045 = vtanh.pop %v3044
    %3047 = vrot.lane.b32.xlu0 %v3045, 64
    %v3048 = vpop.permute.xlu0 %3047
    %v3050 = vmul.f32 %v3029, %v3048
    %v3051 = vxor.u32 %v3023, 2147483648
    %v3052 = vmul.f32 %v3051, 1.442695
    %v3053 = vpow.pop %v3052
    %v3054 = vadd.f32 %v3053, 1.0
    %v3055 = vrcp.pop %v3054
    %v3056 = vmul.f32 1.0, %v3055
    %v3057 = vtanh.pop %v3023
    %v3059 = vrot.slane %v2860, 2
    %v3061 = vmul.f32 %v3056, %v3059
    %3063 = vrot.lane.b32.xlu0 %v3057, 64
    %v3064 = vpop.permute.xlu0 %3063
    %v3066 = vmul.f32 %v3056, %v3064
    %3068 = vrot.lane.b32.xlu0 %v3066, 32
    %v3069 = vpop.permute.xlu0 %3068
    %v3071 = vadd.f32 %v3061, %v3069
    %v3072 = vtanh.pop %v3071
    %3074 = vrot.lane.b32.xlu0 %v3072, 64
    %v3075 = vpop.permute.xlu0 %3074
    %v3077 = vmul.f32 %v3056, %v3075
    %v3079 = vrot.slane %v3050, 6
    %3080 = vrot.lane.b32.xlu0 %v3079, 32
    %v3081 = vpop.permute.xlu0 %3080
    %v3082 = vsel %vm301, %v3081, 0
    %3084 = vmatprep.subr.mxu0 0.0
    %3085 = vmatpush1.msra.mxu0 0.0
    %3086 = vmatprep.subr.mxu0 0.0
    %3087 = vmatpush1.msra.mxu0 0.0
    %3088 = vmatprep.subr.mxu0 0.0
    %3089 = vmatpush1.msra.mxu0 0.0
    %3090 = vmatprep.subr.mxu0 0.0
    %3091 = vmatpush1.msra.mxu0 0.0
    %3092 = vmatprep.subr.mxu0 0.0
    %3093 = vmatpush1.msra.mxu0 0.0
    %3094 = vmatprep.subr.mxu0 0.0
    %3095 = vmatpush1.msra.mxu0 0.0
    %3096 = vmatprep.subr.mxu0 0.0
    %3097 = vmatpush1.msra.mxu0 0.0
    %3098 = vmatprep.subr.mxu0 0.0
    %3099 = vmatpush1.msra.mxu0 0.0
    %3100 = vmatprep.subr.mxu0 0.0
    %3101 = vmatpush1.msra.mxu0 0.0
    %3102 = vmatprep.subr.mxu0 0.0
    %3103 = vmatpush1.msra.mxu0 0.0
    %3104 = vmatprep.subr.mxu0 0.0
    %3105 = vmatpush1.msra.mxu0 0.0
    %3106 = vmatprep.subr.mxu0 0.0
    %3107 = vmatpush1.msra.mxu0 0.0
    %3108 = vmatprep.subr.mxu0 0.0
    %3109 = vmatpush1.msra.mxu0 %v2146
    %3110 = vmatprep.subr.mxu0 0.0
    %3111 = vmatpush1.msra.mxu0 %v2145
    %3112 = vmatprep.subr.mxu0 0.0
    %3113 = vmatpush1.msra.mxu0 %v2144
    %3114 = vmatprep.subr.mxu0 0.0
    %3115 = vmatpush1.msra.mxu0 %v2143
    %3116 = vmatprep.subr.mxu0 0.0
    %3117 = vmatpush2.msra.mxu0 0.0
    %3118 = vmatprep.subr.mxu0 0.0
    %3119 = vmatpush2.msra.mxu0 0.0
    %3120 = vmatprep.subr.mxu0 0.0
    %3121 = vmatpush2.msra.mxu0 0.0
    %3122 = vmatprep.subr.mxu0 0.0
    %3123 = vmatpush2.msra.mxu0 0.0
    %3124 = vmatprep.subr.mxu0 0.0
    %3125 = vmatpush2.msra.mxu0 0.0
    %3126 = vmatprep.subr.mxu0 0.0
    %3127 = vmatpush2.msra.mxu0 0.0
    %3128 = vmatprep.subr.mxu0 0.0
    %3129 = vmatpush2.msra.mxu0 0.0
    %3130 = vmatprep.subr.mxu0 0.0
    %3131 = vmatpush2.msra.mxu0 0.0
    %3132 = vmatprep.subr.mxu0 0.0
    %3133 = vmatpush2.msra.mxu0 0.0
    %3134 = vmatprep.subr.mxu0 0.0
    %3135 = vmatpush2.msra.mxu0 0.0
    %3136 = vmatprep.subr.mxu0 0.0
    %3137 = vmatpush2.msra.mxu0 0.0
    %3138 = vmatprep.subr.mxu0 0.0
    %3139 = vmatpush2.msra.mxu0 0.0
    %3140 = vmatprep.subr.mxu0 0.0
    %3141 = vmatpush2.msra.mxu0 0.0
    %3142 = vmatprep.subr.mxu0 0.0
    %3143 = vmatpush2.msra.mxu0 0.0
    %3144 = vmatprep.subr.mxu0 0.0
    %3145 = vmatpush2.msra.mxu0 0.0
    %3146 = vmatprep.subr.mxu0 0.0
    %3147 = vmatpush2.msra.mxu0 0.0
    %3148 = vmatprep.mubr.f32.mxu0 0.0
    %3149 = vmatmul.mubr.f32.gmra.mxu0 %v3082
    %v3150 = vpop.f32.mrf.mxu0
    %v3151 = vadd.f32 0.0, %v3150
    %v3152 = vpop.f32.mrf.mxu0
    %3153 = vdwg.mxu0
    %v3154 = vadd.f32 %v2243, %v3151
    %3156 = vrot.lane.b32.xlu0 %v3077, 32
    %v3157 = vpop.permute.xlu0 %3156
    %v3158 = vsel %vm301, %v3157, 0
    %3160 = vmatprep.subr.mxu0 0.0
    %3161 = vmatpush1.msra.mxu0 0.0
    %3162 = vmatprep.subr.mxu0 0.0
    %3163 = vmatpush1.msra.mxu0 0.0
    %3164 = vmatprep.subr.mxu0 0.0
    %3165 = vmatpush1.msra.mxu0 0.0
    %3166 = vmatprep.subr.mxu0 0.0
    %3167 = vmatpush1.msra.mxu0 0.0
    %3168 = vmatprep.subr.mxu0 0.0
    %3169 = vmatpush1.msra.mxu0 0.0
    %3170 = vmatprep.subr.mxu0 0.0
    %3171 = vmatpush1.msra.mxu0 0.0
    %3172 = vmatprep.subr.mxu0 0.0
    %3173 = vmatpush1.msra.mxu0 0.0
    %3174 = vmatprep.subr.mxu0 0.0
    %3175 = vmatpush1.msra.mxu0 0.0
    %3176 = vmatprep.subr.mxu0 0.0
    %3177 = vmatpush1.msra.mxu0 0.0
    %3178 = vmatprep.subr.mxu0 0.0
    %3179 = vmatpush1.msra.mxu0 0.0
    %3180 = vmatprep.subr.mxu0 0.0
    %3181 = vmatpush1.msra.mxu0 0.0
    %3182 = vmatprep.subr.mxu0 0.0
    %3183 = vmatpush1.msra.mxu0 0.0
    %3184 = vmatprep.subr.mxu0 0.0
    %3185 = vmatpush1.msra.mxu0 %v2150
    %3186 = vmatprep.subr.mxu0 0.0
    %3187 = vmatpush1.msra.mxu0 %v2149
    %3188 = vmatprep.subr.mxu0 0.0
    %3189 = vmatpush1.msra.mxu0 %v2148
    %3190 = vmatprep.subr.mxu0 0.0
    %3191 = vmatpush1.msra.mxu0 %v2147
    %3192 = vmatprep.subr.mxu0 0.0
    %3193 = vmatpush2.msra.mxu0 0.0
    %3194 = vmatprep.subr.mxu0 0.0
    %3195 = vmatpush2.msra.mxu0 0.0
    %3196 = vmatprep.subr.mxu0 0.0
    %3197 = vmatpush2.msra.mxu0 0.0
    %3198 = vmatprep.subr.mxu0 0.0
    %3199 = vmatpush2.msra.mxu0 0.0
    %3200 = vmatprep.subr.mxu0 0.0
    %3201 = vmatpush2.msra.mxu0 0.0
    %3202 = vmatprep.subr.mxu0 0.0
    %3203 = vmatpush2.msra.mxu0 0.0
    %3204 = vmatprep.subr.mxu0 0.0
    %3205 = vmatpush2.msra.mxu0 0.0
    %3206 = vmatprep.subr.mxu0 0.0
    %3207 = vmatpush2.msra.mxu0 0.0
    %3208 = vmatprep.subr.mxu0 0.0
    %3209 = vmatpush2.msra.mxu0 0.0
    %3210 = vmatprep.subr.mxu0 0.0
    %3211 = vmatpush2.msra.mxu0 0.0
    %3212 = vmatprep.subr.mxu0 0.0
    %3213 = vmatpush2.msra.mxu0 0.0
    %3214 = vmatprep.subr.mxu0 0.0
    %3215 = vmatpush2.msra.mxu0 0.0
    %3216 = vmatprep.subr.mxu0 0.0
    %3217 = vmatpush2.msra.mxu0 0.0
    %3218 = vmatprep.subr.mxu0 0.0
    %3219 = vmatpush2.msra.mxu0 0.0
    %3220 = vmatprep.subr.mxu0 0.0
    %3221 = vmatpush2.msra.mxu0 0.0
    %3222 = vmatprep.subr.mxu0 0.0
    %3223 = vmatpush2.msra.mxu0 0.0
    %3224 = vmatprep.mubr.f32.mxu0 0.0
    %3225 = vmatmul.mubr.f32.gmra.mxu0 %v3158
    %v3226 = vpop.f32.mrf.mxu0
    %v3227 = vadd.f32 0.0, %v3226
    %v3228 = vpop.f32.mrf.mxu0
    %3229 = vdwg.mxu0
    %v3231 = vrot.slane %v3227, 2
    %v3233 = vadd.f32 %v2239, %v3231
    %v3234 = vxor.u32 %v3154, 2147483648
    %v3235 = vmul.f32 %v3234, 1.442695
    %v3236 = vpow.pop %v3235
    %v3237 = vadd.f32 %v3236, 1.0
    %v3238 = vrcp.pop %v3237
    %v3239 = vmul.f32 1.0, %v3238
    %v3240 = vtanh.pop %v3154
    %v3242 = vrot.slane %v3044, 6
    %v3244 = vmul.f32 %v3239, %v3242
    %3246 = vrot.lane.b32.xlu0 %v3240, 64
    %v3247 = vpop.permute.xlu0 %3246
    %v3249 = vmul.f32 %v3239, %v3247
    %3251 = vrot.lane.b32.xlu0 %v3249, 32
    %v3252 = vpop.permute.xlu0 %3251
    %v3254 = vadd.f32 %v3244, %v3252
    %v3255 = vtanh.pop %v3254
    %3257 = vrot.lane.b32.xlu0 %v3255, 64
    %v3258 = vpop.permute.xlu0 %3257
    %v3260 = vmul.f32 %v3239, %v3258
    %v3261 = vxor.u32 %v3233, 2147483648
    %v3262 = vmul.f32 %v3261, 1.442695
    %v3263 = vpow.pop %v3262
    %v3264 = vadd.f32 %v3263, 1.0
    %v3265 = vrcp.pop %v3264
    %v3266 = vmul.f32 1.0, %v3265
    %v3267 = vtanh.pop %v3233
    %v3269 = vrot.slane %v3071, 2
    %v3271 = vmul.f32 %v3266, %v3269
    %3273 = vrot.lane.b32.xlu0 %v3267, 64
    %v3274 = vpop.permute.xlu0 %3273
    %v3276 = vmul.f32 %v3266, %v3274
    %3278 = vrot.lane.b32.xlu0 %v3276, 32
    %v3279 = vpop.permute.xlu0 %3278
    %v3281 = vadd.f32 %v3271, %v3279
    %v3282 = vtanh.pop %v3281
    %3284 = vrot.lane.b32.xlu0 %v3282, 64
    %v3285 = vpop.permute.xlu0 %3284
    %v3287 = vmul.f32 %v3266, %v3285
    %3289 = vrot.lane.b32.xlu0 %v3260, 32
    %v3290 = vpop.permute.xlu0 %3289
    %v3291 = vsel %vm301, %v3290, 0
    %3293 = vmatprep.subr.mxu0 0.0
    %3294 = vmatpush1.msra.mxu0 0.0
    %3295 = vmatprep.subr.mxu0 0.0
    %3296 = vmatpush1.msra.mxu0 0.0
    %3297 = vmatprep.subr.mxu0 0.0
    %3298 = vmatpush1.msra.mxu0 0.0
    %3299 = vmatprep.subr.mxu0 0.0
    %3300 = vmatpush1.msra.mxu0 0.0
    %3301 = vmatprep.subr.mxu0 0.0
    %3302 = vmatpush1.msra.mxu0 0.0
    %3303 = vmatprep.subr.mxu0 0.0
    %3304 = vmatpush1.msra.mxu0 0.0
    %3305 = vmatprep.subr.mxu0 0.0
    %3306 = vmatpush1.msra.mxu0 0.0
    %3307 = vmatprep.subr.mxu0 0.0
    %3308 = vmatpush1.msra.mxu0 0.0
    %3309 = vmatprep.subr.mxu0 0.0
    %3310 = vmatpush1.msra.mxu0 0.0
    %3311 = vmatprep.subr.mxu0 0.0
    %3312 = vmatpush1.msra.mxu0 0.0
    %3313 = vmatprep.subr.mxu0 0.0
    %3314 = vmatpush1.msra.mxu0 0.0
    %3315 = vmatprep.subr.mxu0 0.0
    %3316 = vmatpush1.msra.mxu0 0.0
    %3317 = vmatprep.subr.mxu0 0.0
    %3318 = vmatpush1.msra.mxu0 %v2146
    %3319 = vmatprep.subr.mxu0 0.0
    %3320 = vmatpush1.msra.mxu0 %v2145
    %3321 = vmatprep.subr.mxu0 0.0
    %3322 = vmatpush1.msra.mxu0 %v2144
    %3323 = vmatprep.subr.mxu0 0.0
    %3324 = vmatpush1.msra.mxu0 %v2143
    %3325 = vmatprep.subr.mxu0 0.0
    %3326 = vmatpush2.msra.mxu0 0.0
    %3327 = vmatprep.subr.mxu0 0.0
    %3328 = vmatpush2.msra.mxu0 0.0
    %3329 = vmatprep.subr.mxu0 0.0
    %3330 = vmatpush2.msra.mxu0 0.0
    %3331 = vmatprep.subr.mxu0 0.0
    %3332 = vmatpush2.msra.mxu0 0.0
    %3333 = vmatprep.subr.mxu0 0.0
    %3334 = vmatpush2.msra.mxu0 0.0
    %3335 = vmatprep.subr.mxu0 0.0
    %3336 = vmatpush2.msra.mxu0 0.0
    %3337 = vmatprep.subr.mxu0 0.0
    %3338 = vmatpush2.msra.mxu0 0.0
    %3339 = vmatprep.subr.mxu0 0.0
    %3340 = vmatpush2.msra.mxu0 0.0
    %3341 = vmatprep.subr.mxu0 0.0
    %3342 = vmatpush2.msra.mxu0 0.0
    %3343 = vmatprep.subr.mxu0 0.0
    %3344 = vmatpush2.msra.mxu0 0.0
    %3345 = vmatprep.subr.mxu0 0.0
    %3346 = vmatpush2.msra.mxu0 0.0
    %3347 = vmatprep.subr.mxu0 0.0
    %3348 = vmatpush2.msra.mxu0 0.0
    %3349 = vmatprep.subr.mxu0 0.0
    %3350 = vmatpush2.msra.mxu0 0.0
    %3351 = vmatprep.subr.mxu0 0.0
    %3352 = vmatpush2.msra.mxu0 0.0
    %3353 = vmatprep.subr.mxu0 0.0
    %3354 = vmatpush2.msra.mxu0 0.0
    %3355 = vmatprep.subr.mxu0 0.0
    %3356 = vmatpush2.msra.mxu0 0.0
    %3357 = vmatprep.mubr.f32.mxu0 0.0
    %3358 = vmatmul.mubr.f32.gmra.mxu0 %v3291
    %v3359 = vpop.f32.mrf.mxu0
    %v3360 = vadd.f32 0.0, %v3359
    %v3361 = vpop.f32.mrf.mxu0
    %3362 = vdwg.mxu0
    %v3364 = vrot.slane %v3360, 6
    %v3366 = vadd.f32 %v2243, %v3364
    %v3368 = vrot.slane %v3287, 6
    %3369 = vrot.lane.b32.xlu0 %v3368, 32
    %v3370 = vpop.permute.xlu0 %3369
    %v3371 = vsel %vm301, %v3370, 0
    %3373 = vmatprep.subr.mxu0 0.0
    %3374 = vmatpush1.msra.mxu0 0.0
    %3375 = vmatprep.subr.mxu0 0.0
    %3376 = vmatpush1.msra.mxu0 0.0
    %3377 = vmatprep.subr.mxu0 0.0
    %3378 = vmatpush1.msra.mxu0 0.0
    %3379 = vmatprep.subr.mxu0 0.0
    %3380 = vmatpush1.msra.mxu0 0.0
    %3381 = vmatprep.subr.mxu0 0.0
    %3382 = vmatpush1.msra.mxu0 0.0
    %3383 = vmatprep.subr.mxu0 0.0
    %3384 = vmatpush1.msra.mxu0 0.0
    %3385 = vmatprep.subr.mxu0 0.0
    %3386 = vmatpush1.msra.mxu0 0.0
    %3387 = vmatprep.subr.mxu0 0.0
    %3388 = vmatpush1.msra.mxu0 0.0
    %3389 = vmatprep.subr.mxu0 0.0
    %3390 = vmatpush1.msra.mxu0 0.0
    %3391 = vmatprep.subr.mxu0 0.0
    %3392 = vmatpush1.msra.mxu0 0.0
    %3393 = vmatprep.subr.mxu0 0.0
    %3394 = vmatpush1.msra.mxu0 0.0
    %3395 = vmatprep.subr.mxu0 0.0
    %3396 = vmatpush1.msra.mxu0 0.0
    %3397 = vmatprep.subr.mxu0 0.0
    %3398 = vmatpush1.msra.mxu0 %v2150
    %3399 = vmatprep.subr.mxu0 0.0
    %3400 = vmatpush1.msra.mxu0 %v2149
    %3401 = vmatprep.subr.mxu0 0.0
    %3402 = vmatpush1.msra.mxu0 %v2148
    %3403 = vmatprep.subr.mxu0 0.0
    %3404 = vmatpush1.msra.mxu0 %v2147
    %3405 = vmatprep.subr.mxu0 0.0
    %3406 = vmatpush2.msra.mxu0 0.0
    %3407 = vmatprep.subr.mxu0 0.0
    %3408 = vmatpush2.msra.mxu0 0.0
    %3409 = vmatprep.subr.mxu0 0.0
    %3410 = vmatpush2.msra.mxu0 0.0
    %3411 = vmatprep.subr.mxu0 0.0
    %3412 = vmatpush2.msra.mxu0 0.0
    %3413 = vmatprep.subr.mxu0 0.0
    %3414 = vmatpush2.msra.mxu0 0.0
    %3415 = vmatprep.subr.mxu0 0.0
    %3416 = vmatpush2.msra.mxu0 0.0
    %3417 = vmatprep.subr.mxu0 0.0
    %3418 = vmatpush2.msra.mxu0 0.0
    %3419 = vmatprep.subr.mxu0 0.0
    %3420 = vmatpush2.msra.mxu0 0.0
    %3421 = vmatprep.subr.mxu0 0.0
    %3422 = vmatpush2.msra.mxu0 0.0
    %3423 = vmatprep.subr.mxu0 0.0
    %3424 = vmatpush2.msra.mxu0 0.0
    %3425 = vmatprep.subr.mxu0 0.0
    %3426 = vmatpush2.msra.mxu0 0.0
    %3427 = vmatprep.subr.mxu0 0.0
    %3428 = vmatpush2.msra.mxu0 0.0
    %3429 = vmatprep.subr.mxu0 0.0
    %3430 = vmatpush2.msra.mxu0 0.0
    %3431 = vmatprep.subr.mxu0 0.0
    %3432 = vmatpush2.msra.mxu0 0.0
    %3433 = vmatprep.subr.mxu0 0.0
    %3434 = vmatpush2.msra.mxu0 0.0
    %3435 = vmatprep.subr.mxu0 0.0
    %3436 = vmatpush2.msra.mxu0 0.0
    %3437 = vmatprep.mubr.f32.mxu0 0.0
    %3438 = vmatmul.mubr.f32.gmra.mxu0 %v3371
    %v3439 = vpop.f32.mrf.mxu0
    %v3440 = vadd.f32 0.0, %v3439
    %v3441 = vpop.f32.mrf.mxu0
    %3442 = vdwg.mxu0
    %v3444 = vrot.slane %v3440, 4
    %v3446 = vadd.f32 %v2239, %v3444
    %v3447 = vxor.u32 %v3366, 2147483648
    %v3448 = vmul.f32 %v3447, 1.442695
    %v3449 = vpow.pop %v3448
    %v3450 = vadd.f32 %v3449, 1.0
    %v3451 = vrcp.pop %v3450
    %v3452 = vmul.f32 1.0, %v3451
    %v3453 = vtanh.pop %v3366
    %v3455 = vrot.slane %v3254, 6
    %v3457 = vmul.f32 %v3452, %v3455
    %3459 = vrot.lane.b32.xlu0 %v3453, 64
    %v3460 = vpop.permute.xlu0 %3459
    %v3462 = vmul.f32 %v3452, %v3460
    %3464 = vrot.lane.b32.xlu0 %v3462, 32
    %v3465 = vpop.permute.xlu0 %3464
    %v3467 = vadd.f32 %v3457, %v3465
    %v3468 = vtanh.pop %v3467
    %3470 = vrot.lane.b32.xlu0 %v3468, 64
    %v3471 = vpop.permute.xlu0 %3470
    %v3473 = vmul.f32 %v3452, %v3471
    %v3474 = vxor.u32 %v3446, 2147483648
    %v3475 = vmul.f32 %v3474, 1.442695
    %v3476 = vpow.pop %v3475
    %v3477 = vadd.f32 %v3476, 1.0
    %v3478 = vrcp.pop %v3477
    %v3479 = vmul.f32 1.0, %v3478
    %v3480 = vtanh.pop %v3446
    %v3482 = vrot.slane %v3281, 2
    %v3484 = vmul.f32 %v3479, %v3482
    %3486 = vrot.lane.b32.xlu0 %v3480, 64
    %v3487 = vpop.permute.xlu0 %3486
    %v3489 = vmul.f32 %v3479, %v3487
    %3491 = vrot.lane.b32.xlu0 %v3489, 32
    %v3492 = vpop.permute.xlu0 %3491
    %v3494 = vadd.f32 %v3484, %v3492
    %v3495 = vtanh.pop %v3494
    %3497 = vrot.lane.b32.xlu0 %v3495, 64
    %v3498 = vpop.permute.xlu0 %3497
    %v3500 = vmul.f32 %v3479, %v3498
    %v3502 = vrot.slane %v3473, 2
    %3503 = vrot.lane.b32.xlu0 %v3502, 32
    %v3504 = vpop.permute.xlu0 %3503
    %v3505 = vsel %vm301, %v3504, 0
    %3507 = vmatprep.subr.mxu0 0.0
    %3508 = vmatpush1.msra.mxu0 0.0
    %3509 = vmatprep.subr.mxu0 0.0
    %3510 = vmatpush1.msra.mxu0 0.0
    %3511 = vmatprep.subr.mxu0 0.0
    %3512 = vmatpush1.msra.mxu0 0.0
    %3513 = vmatprep.subr.mxu0 0.0
    %3514 = vmatpush1.msra.mxu0 0.0
    %3515 = vmatprep.subr.mxu0 0.0
    %3516 = vmatpush1.msra.mxu0 0.0
    %3517 = vmatprep.subr.mxu0 0.0
    %3518 = vmatpush1.msra.mxu0 0.0
    %3519 = vmatprep.subr.mxu0 0.0
    %3520 = vmatpush1.msra.mxu0 0.0
    %3521 = vmatprep.subr.mxu0 0.0
    %3522 = vmatpush1.msra.mxu0 0.0
    %3523 = vmatprep.subr.mxu0 0.0
    %3524 = vmatpush1.msra.mxu0 0.0
    %3525 = vmatprep.subr.mxu0 0.0
    %3526 = vmatpush1.msra.mxu0 0.0
    %3527 = vmatprep.subr.mxu0 0.0
    %3528 = vmatpush1.msra.mxu0 0.0
    %3529 = vmatprep.subr.mxu0 0.0
    %3530 = vmatpush1.msra.mxu0 0.0
    %3531 = vmatprep.subr.mxu0 0.0
    %3532 = vmatpush1.msra.mxu0 %v2146
    %3533 = vmatprep.subr.mxu0 0.0
    %3534 = vmatpush1.msra.mxu0 %v2145
    %3535 = vmatprep.subr.mxu0 0.0
    %3536 = vmatpush1.msra.mxu0 %v2144
    %3537 = vmatprep.subr.mxu0 0.0
    %3538 = vmatpush1.msra.mxu0 %v2143
    %3539 = vmatprep.subr.mxu0 0.0
    %3540 = vmatpush2.msra.mxu0 0.0
    %3541 = vmatprep.subr.mxu0 0.0
    %3542 = vmatpush2.msra.mxu0 0.0
    %3543 = vmatprep.subr.mxu0 0.0
    %3544 = vmatpush2.msra.mxu0 0.0
    %3545 = vmatprep.subr.mxu0 0.0
    %3546 = vmatpush2.msra.mxu0 0.0
    %3547 = vmatprep.subr.mxu0 0.0
    %3548 = vmatpush2.msra.mxu0 0.0
    %3549 = vmatprep.subr.mxu0 0.0
    %3550 = vmatpush2.msra.mxu0 0.0
    %3551 = vmatprep.subr.mxu0 0.0
    %3552 = vmatpush2.msra.mxu0 0.0
    %3553 = vmatprep.subr.mxu0 0.0
    %3554 = vmatpush2.msra.mxu0 0.0
    %3555 = vmatprep.subr.mxu0 0.0
    %3556 = vmatpush2.msra.mxu0 0.0
    %3557 = vmatprep.subr.mxu0 0.0
    %3558 = vmatpush2.msra.mxu0 0.0
    %3559 = vmatprep.subr.mxu0 0.0
    %3560 = vmatpush2.msra.mxu0 0.0
    %3561 = vmatprep.subr.mxu0 0.0
    %3562 = vmatpush2.msra.mxu0 0.0
    %3563 = vmatprep.subr.mxu0 0.0
    %3564 = vmatpush2.msra.mxu0 0.0
    %3565 = vmatprep.subr.mxu0 0.0
    %3566 = vmatpush2.msra.mxu0 0.0
    %3567 = vmatprep.subr.mxu0 0.0
    %3568 = vmatpush2.msra.mxu0 0.0
    %3569 = vmatprep.subr.mxu0 0.0
    %3570 = vmatpush2.msra.mxu0 0.0
    %3571 = vmatprep.mubr.f32.mxu0 0.0
    %3572 = vmatmul.mubr.f32.gmra.mxu0 %v3505
    %v3573 = vpop.f32.mrf.mxu0
    %v3574 = vadd.f32 0.0, %v3573
    %v3575 = vpop.f32.mrf.mxu0
    %3576 = vdwg.mxu0
    %v3578 = vrot.slane %v3574, 4
    %v3580 = vadd.f32 %v2243, %v3578
    %v3582 = vrot.slane %v3500, 4
    %3583 = vrot.lane.b32.xlu0 %v3582, 32
    %v3584 = vpop.permute.xlu0 %3583
    %v3585 = vsel %vm301, %v3584, 0
    %3587 = vmatprep.subr.mxu0 0.0
    %3588 = vmatpush1.msra.mxu0 0.0
    %3589 = vmatprep.subr.mxu0 0.0
    %3590 = vmatpush1.msra.mxu0 0.0
    %3591 = vmatprep.subr.mxu0 0.0
    %3592 = vmatpush1.msra.mxu0 0.0
    %3593 = vmatprep.subr.mxu0 0.0
    %3594 = vmatpush1.msra.mxu0 0.0
    %3595 = vmatprep.subr.mxu0 0.0
    %3596 = vmatpush1.msra.mxu0 0.0
    %3597 = vmatprep.subr.mxu0 0.0
    %3598 = vmatpush1.msra.mxu0 0.0
    %3599 = vmatprep.subr.mxu0 0.0
    %3600 = vmatpush1.msra.mxu0 0.0
    %3601 = vmatprep.subr.mxu0 0.0
    %3602 = vmatpush1.msra.mxu0 0.0
    %3603 = vmatprep.subr.mxu0 0.0
    %3604 = vmatpush1.msra.mxu0 0.0
    %3605 = vmatprep.subr.mxu0 0.0
    %3606 = vmatpush1.msra.mxu0 0.0
    %3607 = vmatprep.subr.mxu0 0.0
    %3608 = vmatpush1.msra.mxu0 0.0
    %3609 = vmatprep.subr.mxu0 0.0
    %3610 = vmatpush1.msra.mxu0 0.0
    %3611 = vmatprep.subr.mxu0 0.0
    %3612 = vmatpush1.msra.mxu0 %v2150
    %3613 = vmatprep.subr.mxu0 0.0
    %3614 = vmatpush1.msra.mxu0 %v2149
    %3615 = vmatprep.subr.mxu0 0.0
    %3616 = vmatpush1.msra.mxu0 %v2148
    %3617 = vmatprep.subr.mxu0 0.0
    %3618 = vmatpush1.msra.mxu0 %v2147
    %3619 = vmatprep.subr.mxu0 0.0
    %3620 = vmatpush2.msra.mxu0 0.0
    %3621 = vmatprep.subr.mxu0 0.0
    %3622 = vmatpush2.msra.mxu0 0.0
    %3623 = vmatprep.subr.mxu0 0.0
    %3624 = vmatpush2.msra.mxu0 0.0
    %3625 = vmatprep.subr.mxu0 0.0
    %3626 = vmatpush2.msra.mxu0 0.0
    %3627 = vmatprep.subr.mxu0 0.0
    %3628 = vmatpush2.msra.mxu0 0.0
    %3629 = vmatprep.subr.mxu0 0.0
    %3630 = vmatpush2.msra.mxu0 0.0
    %3631 = vmatprep.subr.mxu0 0.0
    %3632 = vmatpush2.msra.mxu0 0.0
    %3633 = vmatprep.subr.mxu0 0.0
    %3634 = vmatpush2.msra.mxu0 0.0
    %3635 = vmatprep.subr.mxu0 0.0
    %3636 = vmatpush2.msra.mxu0 0.0
    %3637 = vmatprep.subr.mxu0 0.0
    %3638 = vmatpush2.msra.mxu0 0.0
    %3639 = vmatprep.subr.mxu0 0.0
    %3640 = vmatpush2.msra.mxu0 0.0
    %3641 = vmatprep.subr.mxu0 0.0
    %3642 = vmatpush2.msra.mxu0 0.0
    %3643 = vmatprep.subr.mxu0 0.0
    %3644 = vmatpush2.msra.mxu0 0.0
    %3645 = vmatprep.subr.mxu0 0.0
    %3646 = vmatpush2.msra.mxu0 0.0
    %3647 = vmatprep.subr.mxu0 0.0
    %3648 = vmatpush2.msra.mxu0 0.0
    %3649 = vmatprep.subr.mxu0 0.0
    %3650 = vmatpush2.msra.mxu0 0.0
    %3651 = vmatprep.mubr.f32.mxu0 0.0
    %3652 = vmatmul.mubr.f32.gmra.mxu0 %v3585
    %v3653 = vpop.f32.mrf.mxu0
    %v3654 = vadd.f32 0.0, %v3653
    %v3655 = vpop.f32.mrf.mxu0
    %3656 = vdwg.mxu0
    %v3658 = vrot.slane %v3654, 6
    %v3660 = vadd.f32 %v2239, %v3658
    %v3661 = vxor.u32 %v3580, 2147483648
    %v3662 = vmul.f32 %v3661, 1.442695
    %v3663 = vpow.pop %v3662
    %v3664 = vadd.f32 %v3663, 1.0
    %v3665 = vrcp.pop %v3664
    %v3666 = vmul.f32 1.0, %v3665
    %v3667 = vtanh.pop %v3580
    %v3669 = vrot.slane %v3467, 6
    %v3671 = vmul.f32 %v3666, %v3669
    %3673 = vrot.lane.b32.xlu0 %v3667, 64
    %v3674 = vpop.permute.xlu0 %3673
    %v3676 = vmul.f32 %v3666, %v3674
    %3678 = vrot.lane.b32.xlu0 %v3676, 32
    %v3679 = vpop.permute.xlu0 %3678
    %v3681 = vadd.f32 %v3671, %v3679
    %v3682 = vtanh.pop %v3681
    %3684 = vrot.lane.b32.xlu0 %v3682, 64
    %v3685 = vpop.permute.xlu0 %3684
    %v3687 = vmul.f32 %v3666, %v3685
    %v3688 = vxor.u32 %v3660, 2147483648
    %v3689 = vmul.f32 %v3688, 1.442695
    %v3690 = vpow.pop %v3689
    %v3691 = vadd.f32 %v3690, 1.0
    %v3692 = vrcp.pop %v3691
    %v3693 = vmul.f32 1.0, %v3692
    %v3694 = vtanh.pop %v3660
    %v3696 = vrot.slane %v3494, 2
    %v3698 = vmul.f32 %v3693, %v3696
    %3700 = vrot.lane.b32.xlu0 %v3694, 64
    %v3701 = vpop.permute.xlu0 %3700
    %v3703 = vmul.f32 %v3693, %v3701
    %3705 = vrot.lane.b32.xlu0 %v3703, 32
    %v3706 = vpop.permute.xlu0 %3705
    %v3708 = vadd.f32 %v3698, %v3706
    %v3709 = vtanh.pop %v3708
    %3711 = vrot.lane.b32.xlu0 %v3709, 64
    %v3712 = vpop.permute.xlu0 %3711
    %v3714 = vmul.f32 %v3693, %v3712
    %v3716 = vrot.slane %v3687, 4
    %3717 = vrot.lane.b32.xlu0 %v3716, 32
    %v3718 = vpop.permute.xlu0 %3717
    %v3719 = vsel %vm301, %v3718, 0
    %3721 = vmatprep.subr.mxu0 0.0
    %3722 = vmatpush1.msra.mxu0 0.0
    %3723 = vmatprep.subr.mxu0 0.0
    %3724 = vmatpush1.msra.mxu0 0.0
    %3725 = vmatprep.subr.mxu0 0.0
    %3726 = vmatpush1.msra.mxu0 0.0
    %3727 = vmatprep.subr.mxu0 0.0
    %3728 = vmatpush1.msra.mxu0 0.0
    %3729 = vmatprep.subr.mxu0 0.0
    %3730 = vmatpush1.msra.mxu0 0.0
    %3731 = vmatprep.subr.mxu0 0.0
    %3732 = vmatpush1.msra.mxu0 0.0
    %3733 = vmatprep.subr.mxu0 0.0
    %3734 = vmatpush1.msra.mxu0 0.0
    %3735 = vmatprep.subr.mxu0 0.0
    %3736 = vmatpush1.msra.mxu0 0.0
    %3737 = vmatprep.subr.mxu0 0.0
    %3738 = vmatpush1.msra.mxu0 0.0
    %3739 = vmatprep.subr.mxu0 0.0
    %3740 = vmatpush1.msra.mxu0 0.0
    %3741 = vmatprep.subr.mxu0 0.0
    %3742 = vmatpush1.msra.mxu0 0.0
    %3743 = vmatprep.subr.mxu0 0.0
    %3744 = vmatpush1.msra.mxu0 0.0
    %3745 = vmatprep.subr.mxu0 0.0
    %3746 = vmatpush1.msra.mxu0 %v2146
    %3747 = vmatprep.subr.mxu0 0.0
    %3748 = vmatpush1.msra.mxu0 %v2145
    %3749 = vmatprep.subr.mxu0 0.0
    %3750 = vmatpush1.msra.mxu0 %v2144
    %3751 = vmatprep.subr.mxu0 0.0
    %3752 = vmatpush1.msra.mxu0 %v2143
    %3753 = vmatprep.subr.mxu0 0.0
    %3754 = vmatpush2.msra.mxu0 0.0
    %3755 = vmatprep.subr.mxu0 0.0
    %3756 = vmatpush2.msra.mxu0 0.0
    %3757 = vmatprep.subr.mxu0 0.0
    %3758 = vmatpush2.msra.mxu0 0.0
    %3759 = vmatprep.subr.mxu0 0.0
    %3760 = vmatpush2.msra.mxu0 0.0
    %3761 = vmatprep.subr.mxu0 0.0
    %3762 = vmatpush2.msra.mxu0 0.0
    %3763 = vmatprep.subr.mxu0 0.0
    %3764 = vmatpush2.msra.mxu0 0.0
    %3765 = vmatprep.subr.mxu0 0.0
    %3766 = vmatpush2.msra.mxu0 0.0
    %3767 = vmatprep.subr.mxu0 0.0
    %3768 = vmatpush2.msra.mxu0 0.0
    %3769 = vmatprep.subr.mxu0 0.0
    %3770 = vmatpush2.msra.mxu0 0.0
    %3771 = vmatprep.subr.mxu0 0.0
    %3772 = vmatpush2.msra.mxu0 0.0
    %3773 = vmatprep.subr.mxu0 0.0
    %3774 = vmatpush2.msra.mxu0 0.0
    %3775 = vmatprep.subr.mxu0 0.0
    %3776 = vmatpush2.msra.mxu0 0.0
    %3777 = vmatprep.subr.mxu0 0.0
    %3778 = vmatpush2.msra.mxu0 0.0
    %3779 = vmatprep.subr.mxu0 0.0
    %3780 = vmatpush2.msra.mxu0 0.0
    %3781 = vmatprep.subr.mxu0 0.0
    %3782 = vmatpush2.msra.mxu0 0.0
    %3783 = vmatprep.subr.mxu0 0.0
    %3784 = vmatpush2.msra.mxu0 0.0
    %3785 = vmatprep.mubr.f32.mxu0 0.0
    %3786 = vmatmul.mubr.f32.gmra.mxu0 %v3719
    %v3787 = vpop.f32.mrf.mxu0
    %v3788 = vadd.f32 0.0, %v3787
    %v3789 = vpop.f32.mrf.mxu0
    %3790 = vdwg.mxu0
    %v3792 = vrot.slane %v3788, 2
    %v3794 = vadd.f32 %v2243, %v3792
    %v3796 = vrot.slane %v3714, 2
    %3797 = vrot.lane.b32.xlu0 %v3796, 32
    %v3798 = vpop.permute.xlu0 %3797
    %v3799 = vsel %vm301, %v3798, 0
    %3801 = vmatprep.subr.mxu0 0.0
    %3802 = vmatpush1.msra.mxu0 0.0
    %3803 = vmatprep.subr.mxu0 0.0
    %3804 = vmatpush1.msra.mxu0 0.0
    %3805 = vmatprep.subr.mxu0 0.0
    %3806 = vmatpush1.msra.mxu0 0.0
    %3807 = vmatprep.subr.mxu0 0.0
    %3808 = vmatpush1.msra.mxu0 0.0
    %3809 = vmatprep.subr.mxu0 0.0
    %3810 = vmatpush1.msra.mxu0 0.0
    %3811 = vmatprep.subr.mxu0 0.0
    %3812 = vmatpush1.msra.mxu0 0.0
    %3813 = vmatprep.subr.mxu0 0.0
    %3814 = vmatpush1.msra.mxu0 0.0
    %3815 = vmatprep.subr.mxu0 0.0
    %3816 = vmatpush1.msra.mxu0 0.0
    %3817 = vmatprep.subr.mxu0 0.0
    %3818 = vmatpush1.msra.mxu0 0.0
    %3819 = vmatprep.subr.mxu0 0.0
    %3820 = vmatpush1.msra.mxu0 0.0
    %3821 = vmatprep.subr.mxu0 0.0
    %3822 = vmatpush1.msra.mxu0 0.0
    %3823 = vmatprep.subr.mxu0 0.0
    %3824 = vmatpush1.msra.mxu0 0.0
    %3825 = vmatprep.subr.mxu0 0.0
    %3826 = vmatpush1.msra.mxu0 %v2150
    %3827 = vmatprep.subr.mxu0 0.0
    %3828 = vmatpush1.msra.mxu0 %v2149
    %3829 = vmatprep.subr.mxu0 0.0
    %3830 = vmatpush1.msra.mxu0 %v2148
    %3831 = vmatprep.subr.mxu0 0.0
    %3832 = vmatpush1.msra.mxu0 %v2147
    %3833 = vmatprep.subr.mxu0 0.0
    %3834 = vmatpush2.msra.mxu0 0.0
    %3835 = vmatprep.subr.mxu0 0.0
    %3836 = vmatpush2.msra.mxu0 0.0
    %3837 = vmatprep.subr.mxu0 0.0
    %3838 = vmatpush2.msra.mxu0 0.0
    %3839 = vmatprep.subr.mxu0 0.0
    %3840 = vmatpush2.msra.mxu0 0.0
    %3841 = vmatprep.subr.mxu0 0.0
    %3842 = vmatpush2.msra.mxu0 0.0
    %3843 = vmatprep.subr.mxu0 0.0
    %3844 = vmatpush2.msra.mxu0 0.0
    %3845 = vmatprep.subr.mxu0 0.0
    %3846 = vmatpush2.msra.mxu0 0.0
    %3847 = vmatprep.subr.mxu0 0.0
    %3848 = vmatpush2.msra.mxu0 0.0
    %3849 = vmatprep.subr.mxu0 0.0
    %3850 = vmatpush2.msra.mxu0 0.0
    %3851 = vmatprep.subr.mxu0 0.0
    %3852 = vmatpush2.msra.mxu0 0.0
    %3853 = vmatprep.subr.mxu0 0.0
    %3854 = vmatpush2.msra.mxu0 0.0
    %3855 = vmatprep.subr.mxu0 0.0
    %3856 = vmatpush2.msra.mxu0 0.0
    %3857 = vmatprep.subr.mxu0 0.0
    %3858 = vmatpush2.msra.mxu0 0.0
    %3859 = vmatprep.subr.mxu0 0.0
    %3860 = vmatpush2.msra.mxu0 0.0
    %3861 = vmatprep.subr.mxu0 0.0
    %3862 = vmatpush2.msra.mxu0 0.0
    %3863 = vmatprep.subr.mxu0 0.0
    %3864 = vmatpush2.msra.mxu0 0.0
    %3865 = vmatprep.mubr.f32.mxu0 0.0
    %3866 = vmatmul.mubr.f32.gmra.mxu0 %v3799
    %v3867 = vpop.f32.mrf.mxu0
    %v3868 = vadd.f32 0.0, %v3867
    %v3869 = vpop.f32.mrf.mxu0
    %3870 = vdwg.mxu0
    %v3871 = vadd.f32 %v2239, %v3868
    %v3872 = vxor.u32 %v3794, 2147483648
    %v3873 = vmul.f32 %v3872, 1.442695
    %v3874 = vpow.pop %v3873
    %v3875 = vadd.f32 %v3874, 1.0
    %v3876 = vrcp.pop %v3875
    %v3877 = vmul.f32 1.0, %v3876
    %v3878 = vtanh.pop %v3794
    %v3880 = vrot.slane %v3681, 6
    %v3882 = vmul.f32 %v3877, %v3880
    %3884 = vrot.lane.b32.xlu0 %v3878, 64
    %v3885 = vpop.permute.xlu0 %3884
    %v3887 = vmul.f32 %v3877, %v3885
    %3889 = vrot.lane.b32.xlu0 %v3887, 32
    %v3890 = vpop.permute.xlu0 %3889
    %v3892 = vadd.f32 %v3882, %v3890
    %v3893 = vtanh.pop %v3892
    %3895 = vrot.lane.b32.xlu0 %v3893, 64
    %v3896 = vpop.permute.xlu0 %3895
    %v3898 = vmul.f32 %v3877, %v3896
    %v3899 = vxor.u32 %v3871, 2147483648
    %v3900 = vmul.f32 %v3899, 1.442695
    %v3901 = vpow.pop %v3900
    %v3902 = vadd.f32 %v3901, 1.0
    %v3903 = vrcp.pop %v3902
    %v3904 = vmul.f32 1.0, %v3903
    %v3905 = vtanh.pop %v3871
    %v3907 = vrot.slane %v3708, 2
    %v3909 = vmul.f32 %v3904, %v3907
    %3911 = vrot.lane.b32.xlu0 %v3905, 64
    %v3912 = vpop.permute.xlu0 %3911
    %v3914 = vmul.f32 %v3904, %v3912
    %3916 = vrot.lane.b32.xlu0 %v3914, 32
    %v3917 = vpop.permute.xlu0 %3916
    %v3919 = vadd.f32 %v3909, %v3917
    %v3920 = vtanh.pop %v3919
    %3922 = vrot.lane.b32.xlu0 %v3920, 64
    %v3923 = vpop.permute.xlu0 %3922
    %v3925 = vmul.f32 %v3904, %v3923
    %3928 = vrot.lane.b32.xlu0 %v3925, 64
    %v3929 = vpop.permute.xlu0 %3928
    %v3931 = vsel %vm301, %v2442, %v3929
    %3932 = vrot.lane.b32.xlu0 %v2625, 32
    %v3933 = vpop.permute.xlu0 %3932
    %3935 = vrot.lane.b32.xlu0 %v3714, 64
    %v3936 = vpop.permute.xlu0 %3935
    %v3938 = vsel %vm301, %v3933, %v3936
    %3939 = vrot.lane.b32.xlu0 %v2839, 32
    %v3940 = vpop.permute.xlu0 %3939
    %3942 = vrot.lane.b32.xlu0 %v3500, 64
    %v3943 = vpop.permute.xlu0 %3942
    %v3945 = vsel %vm301, %v3940, %v3943
    %3946 = vrot.lane.b32.xlu0 %v3050, 32
    %v3947 = vpop.permute.xlu0 %3946
    %3949 = vrot.lane.b32.xlu0 %v3287, 64
    %v3950 = vpop.permute.xlu0 %3949
    %v3952 = vsel %vm301, %v3947, %v3950
    %3954 = vrot.lane.b32.xlu0 %v3077, 64
    %v3955 = vpop.permute.xlu0 %3954
    %v3957 = vsel %vm301, %v3290, %v3955
    %3958 = vrot.lane.b32.xlu0 %v3473, 32
    %v3959 = vpop.permute.xlu0 %3958
    %3961 = vrot.lane.b32.xlu0 %v2866, 64
    %v3962 = vpop.permute.xlu0 %3961
    %v3964 = vsel %vm301, %v3959, %v3962
    %3965 = vrot.lane.b32.xlu0 %v3687, 32
    %v3966 = vpop.permute.xlu0 %3965
    %3968 = vrot.lane.b32.xlu0 %v2652, 64
    %v3969 = vpop.permute.xlu0 %3968
    %v3971 = vsel %vm301, %v3966, %v3969
    %3973 = vrot.lane.b32.xlu0 %v3898, 32
    %v3974 = vpop.permute.xlu0 %3973
    %3976 = vrot.lane.b32.xlu0 %v2439, 64
    %v3977 = vpop.permute.xlu0 %3976
    %v3979 = vsel %vm301, %v3974, %v3977
    %v3980 = vsel %vm252, %v3931, %v3938
    %v3981 = vsel %vm256, %v3980, %v3945
    %v3982 = vsel %vm260, %v3981, %v3952
    %v3983 = vsel %vm252, %v3957, %v3964
    %v3984 = vsel %vm256, %v3983, %v3971
    %v3985 = vsel %vm260, %v3984, %v3979
    %v3986 = vld [vmem:[%s10] sm:$0xff]
    %v3987 = vld [vmem:[%s10 + $0x8] sm:$0xff]
    %v3988 = vld [vmem:[%s10 + $0x10] sm:$0xff]
    %v3989 = vld [vmem:[%s10 + $0x18] sm:$0xff]
    %v3990 = vld [vmem:[%s10 + $0x20] sm:$0xff]
    %v3991 = vld [vmem:[%s10 + $0x28] sm:$0xff]
    %v3992 = vld [vmem:[%s10 + $0x30] sm:$0xff]
    %v3993 = vld [vmem:[%s10 + $0x38] sm:$0xff]
    %v3994 = vld [vmem:[%s10 + $0x40] sm:$0xff]
    %v3995 = vld [vmem:[%s10 + $0x48] sm:$0xff]
    %v3996 = vld [vmem:[%s10 + $0x50] sm:$0xff]
    %v3997 = vld [vmem:[%s10 + $0x58] sm:$0xff]
    %v3998 = vld [vmem:[%s10 + $0x60] sm:$0xff]
    %v3999 = vld [vmem:[%s10 + $0x68] sm:$0xff]
    %v4000 = vld [vmem:[%s10 + $0x70] sm:$0xff]
    %v4001 = vld [vmem:[%s10 + $0x78] sm:$0xff]
    %v4002 = vld [vmem:[%s11] sm:$0x3]
    %v4004 = vlaneseq
    %v4005 = vshrl.u32 %v4004, 7
    %v4006 = vsub.s32 0, %v4005
    %v4007 = vrot.slane %v4002, %v4006
    %v4008 = vlaneseq
    %v4009 = vshrl.u32 %v4008, 7
    %v4010 = vsub.s32 1, %v4009
    %v4011 = vrot.slane %v4002, %v4010
    %v4015 = vsel %vm2163, %v3982, 0
    %v4018 = vsel %vm2163, %v3985, 0
    %4020 = vmatprep.subr.mxu0 0.0
    %4021 = vmatpush1.msra.mxu0 0.0
    %4022 = vmatprep.subr.mxu0 0.0
    %4023 = vmatpush1.msra.mxu0 0.0
    %4024 = vmatprep.subr.mxu0 0.0
    %4025 = vmatpush1.msra.mxu0 0.0
    %4026 = vmatprep.subr.mxu0 0.0
    %4027 = vmatpush1.msra.mxu0 0.0
    %4028 = vmatprep.subr.mxu0 0.0
    %4029 = vmatpush1.msra.mxu0 0.0
    %4030 = vmatprep.subr.mxu0 0.0
    %4031 = vmatpush1.msra.mxu0 0.0
    %4032 = vmatprep.subr.mxu0 0.0
    %4033 = vmatpush1.msra.mxu0 0.0
    %4034 = vmatprep.subr.mxu0 0.0
    %4035 = vmatpush1.msra.mxu0 0.0
    %4036 = vmatprep.subr.mxu0 %v4001
    %4037 = vmatpush1.msra.mxu0 %v4000
    %4038 = vmatprep.subr.mxu0 %v3999
    %4039 = vmatpush1.msra.mxu0 %v3998
    %4040 = vmatprep.subr.mxu0 %v3997
    %4041 = vmatpush1.msra.mxu0 %v3996
    %4042 = vmatprep.subr.mxu0 %v3995
    %4043 = vmatpush1.msra.mxu0 %v3994
    %4044 = vmatprep.subr.mxu0 %v3993
    %4045 = vmatpush1.msra.mxu0 %v3992
    %4046 = vmatprep.subr.mxu0 %v3991
    %4047 = vmatpush1.msra.mxu0 %v3990
    %4048 = vmatprep.subr.mxu0 %v3989
    %4049 = vmatpush1.msra.mxu0 %v3988
    %4050 = vmatprep.subr.mxu0 %v3987
    %4051 = vmatpush1.msra.mxu0 %v3986
    %4052 = vmatprep.subr.mxu0 0.0
    %4053 = vmatpush2.msra.mxu0 0.0
    %4054 = vmatprep.subr.mxu0 0.0
    %4055 = vmatpush2.msra.mxu0 0.0
    %4056 = vmatprep.subr.mxu0 0.0
    %4057 = vmatpush2.msra.mxu0 0.0
    %4058 = vmatprep.subr.mxu0 0.0
    %4059 = vmatpush2.msra.mxu0 0.0
    %4060 = vmatprep.subr.mxu0 0.0
    %4061 = vmatpush2.msra.mxu0 0.0
    %4062 = vmatprep.subr.mxu0 0.0
    %4063 = vmatpush2.msra.mxu0 0.0
    %4064 = vmatprep.subr.mxu0 0.0
    %4065 = vmatpush2.msra.mxu0 0.0
    %4066 = vmatprep.subr.mxu0 0.0
    %4067 = vmatpush2.msra.mxu0 0.0
    %4068 = vmatprep.subr.mxu0 0.0
    %4069 = vmatpush2.msra.mxu0 0.0
    %4070 = vmatprep.subr.mxu0 0.0
    %4071 = vmatpush2.msra.mxu0 0.0
    %4072 = vmatprep.subr.mxu0 0.0
    %4073 = vmatpush2.msra.mxu0 0.0
    %4074 = vmatprep.subr.mxu0 0.0
    %4075 = vmatpush2.msra.mxu0 0.0
    %4076 = vmatprep.subr.mxu0 0.0
    %4077 = vmatpush2.msra.mxu0 0.0
    %4078 = vmatprep.subr.mxu0 0.0
    %4079 = vmatpush2.msra.mxu0 0.0
    %4080 = vmatprep.subr.mxu0 0.0
    %4081 = vmatpush2.msra.mxu0 0.0
    %4082 = vmatprep.subr.mxu0 0.0
    %4083 = vmatpush2.msra.mxu0 0.0
    %4084 = vmatprep.mubr.f32.mxu0 0.0
    %4085 = vmatmul.mubr.f32.gmra.mxu0 %v4015
    %v4086 = vpop.f32.mrf.mxu0
    %v4087 = vadd.f32 %v4007, %v4086
    %v4088 = vpop.f32.mrf.mxu0
    %v4089 = vadd.f32 %v4011, %v4088
    %4090 = vmatprep.mubr.f32.mxu0 0.0
    %4091 = vmatmul.mubr.f32.gmra.mxu0 %v4018
    %v4092 = vpop.f32.mrf.mxu0
    %v4093 = vadd.f32 %v4007, %v4092
    %v4094 = vpop.f32.mrf.mxu0
    %v4095 = vadd.f32 %v4011, %v4094
    %4096 = vdwg.mxu0
    %v4097 = vmax.f32 %v4087, 0.0
    %v4098 = vmax.f32 %v4089, 0.0
    %v4099 = vmax.f32 %v4093, 0.0
    %v4100 = vmax.f32 %v4095, 0.0
    %v4101 = vld [vmem:[%s12] sm:$0xff]
    %v4102 = vld [vmem:[%s12 + $0x8] sm:$0xff]
    %v4103 = vld [vmem:[%s12 + $0x10] sm:$0xff]
    %v4104 = vld [vmem:[%s12 + $0x18] sm:$0xff]
    %v4105 = vld [vmem:[%s12 + $0x20] sm:$0xff]
    %v4106 = vld [vmem:[%s12 + $0x28] sm:$0xff]
    %v4107 = vld [vmem:[%s12 + $0x30] sm:$0xff]
    %v4108 = vld [vmem:[%s12 + $0x38] sm:$0xff]
    %v4109 = vld [vmem:[%s12 + $0x40] sm:$0xff]
    %v4110 = vld [vmem:[%s12 + $0x48] sm:$0xff]
    %v4111 = vld [vmem:[%s12 + $0x50] sm:$0xff]
    %v4112 = vld [vmem:[%s12 + $0x58] sm:$0xff]
    %v4113 = vld [vmem:[%s12 + $0x60] sm:$0xff]
    %v4114 = vld [vmem:[%s12 + $0x68] sm:$0xff]
    %v4115 = vld [vmem:[%s12 + $0x70] sm:$0xff]
    %v4116 = vld [vmem:[%s12 + $0x78] sm:$0xff]
    %v4117 = vld [vmem:[%s12 + $0x80] sm:$0xff]
    %v4118 = vld [vmem:[%s12 + $0x88] sm:$0xff]
    %v4119 = vld [vmem:[%s12 + $0x90] sm:$0xff]
    %v4120 = vld [vmem:[%s12 + $0x98] sm:$0xff]
    %v4121 = vld [vmem:[%s12 + $0xa0] sm:$0xff]
    %v4122 = vld [vmem:[%s12 + $0xa8] sm:$0xff]
    %v4123 = vld [vmem:[%s12 + $0xb0] sm:$0xff]
    %v4124 = vld [vmem:[%s12 + $0xb8] sm:$0xff]
    %v4125 = vld [vmem:[%s12 + $0xc0] sm:$0xff]
    %v4126 = vld [vmem:[%s12 + $0xc8] sm:$0xff]
    %v4127 = vld [vmem:[%s12 + $0xd0] sm:$0xff]
    %v4128 = vld [vmem:[%s12 + $0xd8] sm:$0xff]
    %v4129 = vld [vmem:[%s12 + $0xe0] sm:$0xff]
    %v4130 = vld [vmem:[%s12 + $0xe8] sm:$0xff]
    %v4131 = vld [vmem:[%s12 + $0xf0] sm:$0xff]
    %v4132 = vld [vmem:[%s12 + $0xf8] sm:$0xff]
    %v4133 = vld [vmem:[%s13] sm:$0x1]
    %v4135 = vlaneseq
    %v4136 = vshrl.u32 %v4135, 7
    %v4137 = vsub.s32 0, %v4136
    %v4138 = vrot.slane %v4133, %v4137
    %4140 = vmatprep.subr.mxu0 0.0
    %4141 = vmatpush1.msra.mxu0 %v4116
    %4142 = vmatprep.subr.mxu0 0.0
    %4143 = vmatpush1.msra.mxu0 %v4115
    %4144 = vmatprep.subr.mxu0 0.0
    %4145 = vmatpush1.msra.mxu0 %v4114
    %4146 = vmatprep.subr.mxu0 0.0
    %4147 = vmatpush1.msra.mxu0 %v4113
    %4148 = vmatprep.subr.mxu0 0.0
    %4149 = vmatpush1.msra.mxu0 %v4112
    %4150 = vmatprep.subr.mxu0 0.0
    %4151 = vmatpush1.msra.mxu0 %v4111
    %4152 = vmatprep.subr.mxu0 0.0
    %4153 = vmatpush1.msra.mxu0 %v4110
    %4154 = vmatprep.subr.mxu0 0.0
    %4155 = vmatpush1.msra.mxu0 %v4109
    %4156 = vmatprep.subr.mxu0 0.0
    %4157 = vmatpush1.msra.mxu0 %v4108
    %4158 = vmatprep.subr.mxu0 0.0
    %4159 = vmatpush1.msra.mxu0 %v4107
    %4160 = vmatprep.subr.mxu0 0.0
    %4161 = vmatpush1.msra.mxu0 %v4106
    %4162 = vmatprep.subr.mxu0 0.0
    %4163 = vmatpush1.msra.mxu0 %v4105
    %4164 = vmatprep.subr.mxu0 0.0
    %4165 = vmatpush1.msra.mxu0 %v4104
    %4166 = vmatprep.subr.mxu0 0.0
    %4167 = vmatpush1.msra.mxu0 %v4103
    %4168 = vmatprep.subr.mxu0 0.0
    %4169 = vmatpush1.msra.mxu0 %v4102
    %4170 = vmatprep.subr.mxu0 0.0
    %4171 = vmatpush1.msra.mxu0 %v4101
    %4172 = vmatprep.subr.mxu0 0.0
    %4173 = vmatpush2.msra.mxu0 %v4132
    %4174 = vmatprep.subr.mxu0 0.0
    %4175 = vmatpush2.msra.mxu0 %v4131
    %4176 = vmatprep.subr.mxu0 0.0
    %4177 = vmatpush2.msra.mxu0 %v4130
    %4178 = vmatprep.subr.mxu0 0.0
    %4179 = vmatpush2.msra.mxu0 %v4129
    %4180 = vmatprep.subr.mxu0 0.0
    %4181 = vmatpush2.msra.mxu0 %v4128
    %4182 = vmatprep.subr.mxu0 0.0
    %4183 = vmatpush2.msra.mxu0 %v4127
    %4184 = vmatprep.subr.mxu0 0.0
    %4185 = vmatpush2.msra.mxu0 %v4126
    %4186 = vmatprep.subr.mxu0 0.0
    %4187 = vmatpush2.msra.mxu0 %v4125
    %4188 = vmatprep.subr.mxu0 0.0
    %4189 = vmatpush2.msra.mxu0 %v4124
    %4190 = vmatprep.subr.mxu0 0.0
    %4191 = vmatpush2.msra.mxu0 %v4123
    %4192 = vmatprep.subr.mxu0 0.0
    %4193 = vmatpush2.msra.mxu0 %v4122
    %4194 = vmatprep.subr.mxu0 0.0
    %4195 = vmatpush2.msra.mxu0 %v4121
    %4196 = vmatprep.subr.mxu0 0.0
    %4197 = vmatpush2.msra.mxu0 %v4120
    %4198 = vmatprep.subr.mxu0 0.0
    %4199 = vmatpush2.msra.mxu0 %v4119
    %4200 = vmatprep.subr.mxu0 0.0
    %4201 = vmatpush2.msra.mxu0 %v4118
    %4202 = vmatprep.subr.mxu0 0.0
    %4203 = vmatpush2.msra.mxu0 %v4117
    %4204 = vmatprep.mubr.f32.mxu0 %v4098
    %4205 = vmatmul.mubr.f32.gmra.mxu0 %v4097
    %v4206 = vpop.f32.mrf.mxu0
    %v4207 = vadd.f32 %v4138, %v4206
    %v4208 = vpop.f32.mrf.mxu0
    %4209 = vmatprep.mubr.f32.mxu0 %v4100
    %4210 = vmatmul.mubr.f32.gmra.mxu0 %v4099
    %v4211 = vpop.f32.mrf.mxu0
    %v4212 = vadd.f32 %v4138, %v4211
    %v4213 = vpop.f32.mrf.mxu0
    %4214 = vdwg.mxu0
    %v4216 = vrot.slane %v4207, 1
    %v4218 = vrot.slane %v4207, 2
    %v4220 = vrot.slane %v4207, 3
    %v4223 = vrot.slane %v4212, 4
    %v4225 = vrot.slane %v4212, 5
    %v4227 = vrot.slane %v4212, 6
    %v4229 = vrot.slane %v4212, 7
    %v4231 = vsel %vm250, %v4207, %v4216
    %v4232 = vsel %vm252, %v4231, %v4218
    %v4233 = vsel %vm254, %v4232, %v4220
    %v4234 = vsel %vm256, %v4233, %v4223
    %v4235 = vsel %vm258, %v4234, %v4225
    %v4236 = vsel %vm260, %v4235, %v4227
    %v4237 = vsel %vm262, %v4236, %v4229
    %v4238 = vmul.f32 %v4237, %v4237
    %vm4239 = vcmask 130048
    %v4240 = vsel %vm4239, %v4238, 0.0
    %4241 = vadd.xlane.f32.xlu0 %v4240
    %v4242 = vpop.xlane.xlu0 %4241
    %v4243 = vrot.slane %v4242, 4
    %v4244 = vadd.f32 %v4242, %v4243
    %v4245 = vrot.slane %v4244, 2
    %v4246 = vadd.f32 %v4244, %v4245
    %v4247 = vrot.slane %v4246, 1
    %v4248 = vadd.f32 %v4246, %v4247
    %s4249 = vtos %v4248
    %v4250 = vstv %s4249
    %v4251 = vrcp.pop 128.0
    %v4252 = vmul.f32 %v4250, %v4251
    %v4253 = vadd.f32 %v4252, 1e-08
    %v4254 = vrsqrt.pop %v4253
    %v4255 = vmul.f32 %v4237, %v4254
    %4256 = vst.msk [vmem:[#allocation13] sm:$0xff] %vm4239, %v4255
    %v4257 = vrot.slane %v4207, 4
    %v4259 = vsel %vm250, %v4216, %v4218
    %v4260 = vsel %vm252, %v4259, %v4220
    %v4261 = vsel %vm254, %v4260, %v4257
    %v4262 = vsel %vm256, %v4261, %v4225
    %v4263 = vsel %vm258, %v4262, %v4227
    %v4264 = vsel %vm260, %v4263, %v4229
    %v4265 = vsel %vm262, %v4264, %v4212
    %v4266 = vmul.f32 %v4265, %v4265
    %v4267 = vsel %vm4239, %v4266, 0.0
    %4268 = vadd.xlane.f32.xlu0 %v4267
    %v4269 = vpop.xlane.xlu0 %4268
    %v4270 = vrot.slane %v4269, 4
    %v4271 = vadd.f32 %v4269, %v4270
    %v4272 = vrot.slane %v4271, 2
    %v4273 = vadd.f32 %v4271, %v4272
    %v4274 = vrot.slane %v4273, 1
    %v4275 = vadd.f32 %v4273, %v4274
    %s4276 = vtos %v4275
    %v4277 = vstv %s4276
    %v4278 = vmul.f32 %v4277, %v4251
    %v4279 = vadd.f32 %v4278, 1e-08
    %v4280 = vrsqrt.pop %v4279
    %v4281 = vmul.f32 %v4265, %v4280
    %s4282 = scalar_lea.vmem [#allocation13], 8
    %4283 = vst.msk [vmem:[%s4282] sm:$0xff] %vm4239, %v4281
    // Predicated region
    $region74: #{tpu_custom_call.1} parent=1 // pred_check
      _
    $region75: #{tpu_custom_call.1} parent=1 // pred_check_branch
      %4285 = sbr.rel (0) target = $region77
    $region76: #{tpu_custom_call.1} parent=1 // pred_region
      %s4287 = ssub.s32 256, 256
      %4288 = vsyncadd [#allocation6], %s4287
      %s4289 = sshll.u32 [#allocation13], 4
      %s4290 = int_to_ptr.vmem [resolvable:$true] %s4289
      %4295 = dma.vmem_to_hbm [thread:$0]  %s4290, 256, %s14, [#allocation6], 128, 128, 8
    $region77: #{tpu_custom_call.1} parent=1 // pred_fallthru
      _
    // Predicated region
    $region78: #{tpu_custom_call.1} parent=1 // pred_check
      _
    $region79: #{tpu_custom_call.1} parent=1 // pred_check_branch
      %4297 = sbr.rel (0) target = $region81
    $region80: #{tpu_custom_call.1} parent=1 // pred_region
      %4298 = dma.done [#allocation6], 256
    $region81: #{tpu_custom_call.1} parent=1 // pred_fallthru
      _
    %4299 = vsyncpa [#allocation5], 1
    %4300 = vsyncpa [#allocation8], 1
    %4301 = vsyncpa [#allocation11], 1
    %4302 = vsyncpa [#allocation6], 1

</llo_original>
